<compile_context>
chip_gen: v6e
topology: v6e:2x2x1
jax: 0.10.0
libtpu: 0.0.40
codegen_flags: <defaults>
</compile_context>

<pallas_src>
import math

import jax
import jax.numpy as jnp
from jax import lax
from jax.experimental import pallas as pl
from jax.experimental.pallas import tpu as pltpu

F32 = jnp.float32
BF16 = jnp.bfloat16
_VMEM_SPEC = pl.BlockSpec(memory_space=pltpu.MemorySpace.VMEM)


# --------------------------- packed-parameter layout --------------------------
def _blob_layout(meta):
    """Static row offsets for every parameter inside the single VMEM blob."""
    G, F0, C1, T, H1, H2 = (meta[k] for k in ("G", "F0", "C1", "T", "H1", "H2"))
    entries = [
        ("A_T",   (G, G)),
        ("k1",    (F0, C1)),
        ("b1",    (G, 1)),
        ("k2",    (C1, T)),
        ("b2",    (G, 1)),
        ("wih1",  (G, 4 * H1)),
        ("bb1",   (1, 4 * H1)),
        ("wcomb", (H1 + H2, 4 * H1 + 4 * H2)),
        ("bb2",   (1, 4 * H2)),
        ("wd",    (H2, G)),
        ("bd",    (1, G)),
    ]
    max_cols = max(s[1] for _, s in entries)
    width = ((max_cols + 127) // 128) * 128
    layout = {}
    row = 0
    for name, shape in entries:
        layout[name] = (row, shape)
        row += ((shape[0] + 7) // 8) * 8          # keep every slice sublane-aligned
    total_rows = ((row + 7) // 8) * 8
    return layout, total_rows, width


# ------------------------------ fused forward ---------------------------------
def make_forward(meta):
    G, F0, C1, T, H1, H2 = (meta[k] for k in ("G", "F0", "C1", "T", "H1", "H2"))
    layout, total_rows, width = _blob_layout(meta)

    def kernel(x_ref, blob_ref, o_ref):
        def ld(name):                               # static slice of the blob
            r, (rows, cols) = layout[name]
            return blob_ref[pl.ds(r, rows), pl.ds(0, cols)]

        A_T = ld("A_T").astype(BF16)                # (G, G), cast once

        # ---------------- GCN layers (activations stay node-major) ----------
        def gcn_layer(act_bgf, k_name, b_name):
            # PyTorch: relu(permute(permute(x) @ A) @ K + bias)
            # t[g,b,f] = sum_h A[h,g] * act[b,h,f]   (A passed pre-transposed)
            t = lax.dot_general(A_T, act_bgf.astype(BF16),
                                (((1,), (1,)), ((), ())),
                                preferred_element_type=F32)          # (G,B,Fin)
            t = lax.dot_general(t.astype(BF16), ld(k_name).astype(BF16),
                                (((2,), (0,)), ((), ())),
                                preferred_element_type=F32)          # (G,B,Fout)
            bias = ld(b_name).reshape(G, 1, 1)                       # per-node bias
            return jnp.maximum(t + bias, 0.0)                        # (G,B,Fout)

        x = x_ref[...]                                               # (B, G, F0)
        h = gcn_layer(x, "k1", "b1")                                 # (G, B, C1)
        h = jnp.transpose(h, (1, 0, 2))                              # (B, G, C1)
        h = gcn_layer(h, "k2", "b2")                                 # (G, B, T)

        # torch: permute(0,2,1) of (B,G,T) -> (B,T,G) feeds the LSTM stack.
        z = jnp.transpose(h, (1, 0, 2))                              # (B, G, T)
        z = jnp.transpose(z, (0, 2, 1))                              # (B, T, G)

        # Hoisted layer-1 input projection for ALL timesteps (bias folded in).
        xp = lax.dot_general(z.astype(BF16), ld("wih1").astype(BF16),
                             (((2,), (0,)), ((), ())),
                             preferred_element_type=F32) + ld("bb1")  # (B,T,4H1)

        B = xp.shape[0]
        wcomb = ld("wcomb").astype(BF16)             # (H1+H2, 4H1+4H2), cast once
        bb2 = ld("bb2")                              # (1, 4H2)

        def cell(gates, c, H):
            # g-gate columns were pre-scaled by 2 at prepare time, so a single
            # sigmoid over the full gate row suffices (tanh(x)=2*sigmoid(2x)-1).
            s = jax.nn.sigmoid(gates)
            i = s[:, 0 * H:1 * H]
            f = s[:, 1 * H:2 * H]
            g = 2.0 * s[:, 2 * H:3 * H] - 1.0
            o = s[:, 3 * H:4 * H]
            c_new = f * c + i * g
            return o * jnp.tanh(c_new), c_new

        h1 = jnp.zeros((B, H1), F32); c1 = jnp.zeros((B, H1), F32)
        h2 = jnp.zeros((B, H2), F32); c2 = jnp.zeros((B, H2), F32)

        # Skew-interleaved stacked LSTM: at step t layer 2 consumes h1_{t-1},
        # so one fused [h1|h2] @ [[Whh1, Wih2],[0, Whh2]] matmul per step
        # produces layer-1 recurrence + layer-2 (input proj + recurrence).
        for t in range(T):                           # fully unrolled (T static)
            rec = jnp.dot(jnp.concatenate([h1, h2], axis=1).astype(BF16), wcomb,
                          preferred_element_type=F32)                # (B, 4H1+4H2)
            if t >= 1:                               # layer-2 step on h1_{t-1}
                h2, c2 = cell(bb2 + rec[:, 4 * H1:], c2, H2)
            h1, c1 = cell(xp[:, t, :] + rec[:, :4 * H1], c1, H1)     # layer-1 on x_t
        # trailing layer-2 step consuming h1_{T-1}
        rec = jnp.dot(jnp.concatenate([h1, h2], axis=1).astype(BF16), wcomb,
                      preferred_element_type=F32)
        h2, c2 = cell(bb2 + rec[:, 4 * H1:], c2, H2)

        # ---------------- dense + sigmoid head -------------------------------
        # TODO(synk): nn.Dropout() is identity at inference; training-mode
        # random dropout is not modeled.
        logits = jnp.dot(h2.astype(BF16), ld("wd").astype(BF16),
                         preferred_element_type=F32) + ld("bd")
        o_ref[...] = jax.nn.sigmoid(logits).astype(o_ref.dtype)

    def fwd(blob, x):
        B = x.shape[0]
        return pl.pallas_call(
            kernel,
            out_shape=jax.ShapeDtypeStruct((B, G), F32),
            in_specs=[_VMEM_SPEC, _VMEM_SPEC],       # x + one packed weight blob
            out_specs=_VMEM_SPEC,
        )(x, blob)

    return jax.jit(fwd)


# ------------------------------ parameter init --------------------------------
def calculate_laplacian(A):
    # symmetric-normalized adjacency with self-loops (deterministic stand-in)
    A_hat = A + jnp.eye(A.shape[0], dtype=A.dtype)
    d = jnp.sum(A_hat, axis=1)
    d_inv_sqrt = 1.0 / jnp.sqrt(d)
    return (A_hat * d_inv_sqrt[:, None]) * d_inv_sqrt[None, :]


def init_params(key, grid_size, seq_len, gc_sizes, lstm_sizes):
    # PyTorch-convention parameter layout (same as the reference module).
    keys = iter(jax.random.split(key, 64))
    params = {}

    A_raw = (jax.random.uniform(next(keys), (grid_size, grid_size)) > 0.5).astype(F32)
    params["A"] = calculate_laplacian(A_raw)

    gc = []
    dims = [seq_len] + list(gc_sizes)
    for i in range(len(gc_sizes)):
        gc.append({
            "kernel": jax.random.normal(next(keys), (dims[i], dims[i + 1]), F32),
            "bias": jax.random.normal(next(keys), (grid_size, 1), F32),
        })
    params["gc"] = gc

    lstm = []
    in_dims = [grid_size] + list(lstm_sizes[:-1])
    for i, H in enumerate(lstm_sizes):
        D = in_dims[i]
        s = 1.0 / math.sqrt(H)
        lstm.append({
            "w_ih": jax.random.uniform(next(keys), (4 * H, D), F32, -s, s),
            "w_hh": jax.random.uniform(next(keys), (4 * H, H), F32, -s, s),
            "b_ih": jax.random.uniform(next(keys), (4 * H,), F32, -s, s),
            "b_hh": jax.random.uniform(next(keys), (4 * H,), F32, -s, s),
        })
    params["lstm"] = lstm

    H_last = lstm_sizes[-1]
    s = 1.0 / math.sqrt(H_last)
    params["dense_W"] = jax.random.uniform(next(keys), (grid_size, H_last), F32, -s, s)
    params["dense_b"] = jax.random.uniform(next(keys), (grid_size,), F32, -s, s)
    return params


def prepare_params(params):
    """One-time conversion of PyTorch-layout params into a single packed blob.

    Pre-transposed A / weights, combined biases, the LSTM cell-gate ("g")
    columns pre-scaled by 2, the per-step recurrent + layer-2-input weights
    fused into one block matrix, and everything packed into one (rows, width)
    f32 array with (8,128)-aligned offsets.
    """
    G = params["A"].shape[0]
    assert len(params["gc"]) == 2 and len(params["lstm"]) == 2, (
        "fused kernel is specialized to 2 GCN + 2 LSTM layers")
    gc1, gc2 = params["gc"]
    l1, l2 = params["lstm"]
    F0, C1 = gc1["kernel"].shape
    T = gc2["kernel"].shape[1]
    H1 = l1["w_hh"].shape[1]
    H2 = l2["w_hh"].shape[1]
    meta = dict(G=G, F0=F0, C1=C1, T=T, H1=H1, H2=H2)

    def lstm_mats(lp, H):
        scale = jnp.ones((4 * H,), F32).at[2 * H:3 * H].set(2.0)
        wih = jnp.transpose(lp["w_ih"]) * scale[None, :]          # (D, 4H)
        whh = jnp.transpose(lp["w_hh"]) * scale[None, :]          # (H, 4H)
        bb = ((lp["b_ih"] + lp["b_hh"]) * scale).reshape(1, 4 * H)
        return wih, whh, bb

    wih1, whh1, bb1 = lstm_mats(l1, H1)                           # wih1: (G, 4H1)
    wih2, whh2, bb2 = lstm_mats(l2, H2)                           # wih2: (H1, 4H2)

    # Fused per-step weight: [h1 | h2] @ wcomb gives
    #   cols [0:4H1)      = h1 @ Whh1                      (layer-1 recurrence)
    #   cols [4H1:4H1+4H2)= h1 @ Wih2 + h2 @ Whh2          (layer-2 step)
    wcomb = jnp.zeros((H1 + H2, 4 * H1 + 4 * H2), F32)
    wcomb = wcomb.at[:H1, :4 * H1].set(whh1)
    wcomb = wcomb.at[:H1, 4 * H1:].set(wih2)
    wcomb = wcomb.at[H1:, 4 * H1:].set(whh2)

    pieces = {
        "A_T": jnp.transpose(params["A"]),
        "k1": gc1["kernel"], "b1": gc1["bias"].reshape(G, 1),
        "k2": gc2["kernel"], "b2": gc2["bias"].reshape(G, 1),
        "wih1": wih1, "bb1": bb1,
        "wcomb": wcomb, "bb2": bb2,
        "wd": jnp.transpose(params["dense_W"]),                   # (H2, G)
        "bd": params["dense_b"].reshape(1, G),                    # (1, G)
    }

    layout, total_rows, width = _blob_layout(meta)
    blob = jnp.zeros((total_rows, width), F32)
    for name, arr in pieces.items():
        r, shape = layout[name]
        assert tuple(arr.shape) == shape, (name, arr.shape, shape)
        blob = blob.at[r:r + shape[0], :shape[1]].set(arr)
    return blob, meta


# ----------------------------------- main --------------------------------------
if __name__ == "__main__":
    B = 2
    grid_size = 16
    seq_len = 8
    gc_sizes = (32, 16)
    lstm_sizes = (32, 32)

    key = jax.random.PRNGKey(0)
    k_params, k_x = jax.random.split(key)
    params = init_params(k_params, grid_size, seq_len, gc_sizes, lstm_sizes)
    blob, meta = prepare_params(params)
    forward = make_forward(meta)

    x = jax.random.normal(k_x, (B, grid_size, seq_len), F32)

    out = forward(blob, x)
    out = jax.block_until_ready(out)
    assert out.shape == (B, grid_size), out.shape
    print("KERNEL_OK")
</pallas_src>

<mosaic_0001>
module attributes {stable_mosaic.version = 11 : i64} {
  func.func @kernel(%arg0: memref<2x16x8xf32, #tpu.memory_space<vmem>>, %arg1: memref<224x256xf32, #tpu.memory_space<vmem>>, %arg2: memref<2x16xf32, #tpu.memory_space<vmem>>) attributes {dimension_semantics = [], scalar_prefetch = 0 : i64, scratch_operands = 0 : i64, tpu.core_type = #tpu.core_type<tc>} {
    %c0 = arith.constant 0 : index
    %c0_0 = arith.constant 0 : index
    %0 = vector.load %arg1[%c0, %c0_0] : memref<224x256xf32, #tpu.memory_space<vmem>>, vector<16x16xf32>
    %1 = arith.truncf %0 : vector<16x16xf32> to vector<16x16xbf16>
    %c0_1 = arith.constant 0 : index
    %c0_2 = arith.constant 0 : index
    %c0_3 = arith.constant 0 : index
    %2 = vector.load %arg0[%c0_1, %c0_2, %c0_3] : memref<2x16x8xf32, #tpu.memory_space<vmem>>, vector<2x16x8xf32>
    %3 = arith.truncf %2 : vector<2x16x8xf32> to vector<2x16x8xbf16>
    %cst = arith.constant dense<0.000000e+00> : vector<16x2x8xf32>
    %4 = tpu.matmul %1, %3, %cst {dimension_numbers = #tpu.dot_dimension_numbers<[1], [1], [0], [0, 2], [0, 0, 1, 0, 1, 2], [], []>} : vector<16x16xbf16>, vector<2x16x8xbf16>, vector<16x2x8xf32> -> vector<16x2x8xf32>
    %5 = arith.truncf %4 : vector<16x2x8xf32> to vector<16x2x8xbf16>
    %c16 = arith.constant 16 : index
    %c0_4 = arith.constant 0 : index
    %6 = vector.load %arg1[%c16, %c0_4] : memref<224x256xf32, #tpu.memory_space<vmem>>, vector<8x32xf32>
    %7 = arith.truncf %6 : vector<8x32xf32> to vector<8x32xbf16>
    %cst_5 = arith.constant dense<0.000000e+00> : vector<16x2x32xf32>
    %8 = tpu.matmul %5, %7, %cst_5 {dimension_numbers = #tpu.dot_dimension_numbers<[2], [0], [0, 1], [1], [0, 0, 0, 1, 1, 1], [], []>} : vector<16x2x8xbf16>, vector<8x32xbf16>, vector<16x2x32xf32> -> vector<16x2x32xf32>
    %c24 = arith.constant 24 : index
    %c0_6 = arith.constant 0 : index
    %9 = vector.load %arg1[%c24, %c0_6] : memref<224x256xf32, #tpu.memory_space<vmem>>, vector<16x1xf32>
    %10 = vector.shape_cast %9 : vector<16x1xf32> to vector<16x1x1xf32>
    %11 = vector.broadcast %10 : vector<16x1x1xf32> to vector<16x2x32xf32>
    %12 = arith.addf %8, %11 : vector<16x2x32xf32>
    %cst_7 = arith.constant 0.000000e+00 : f32
    %13 = vector.broadcast %cst_7 : f32 to vector<16x2x32xf32>
    %14 = arith.maximumf %12, %13 : vector<16x2x32xf32>
    %15 = tpu.transpose %14, [1, 0, 2] : vector<16x2x32xf32> -> vector<2x16x32xf32>
    %16 = arith.truncf %15 : vector<2x16x32xf32> to vector<2x16x32xbf16>
    %cst_8 = arith.constant dense<0.000000e+00> : vector<16x2x32xf32>
    %17 = tpu.matmul %1, %16, %cst_8 {dimension_numbers = #tpu.dot_dimension_numbers<[1], [1], [0], [0, 2], [0, 0, 1, 0, 1, 2], [], []>} : vector<16x16xbf16>, vector<2x16x32xbf16>, vector<16x2x32xf32> -> vector<16x2x32xf32>
    %18 = arith.truncf %17 : vector<16x2x32xf32> to vector<16x2x32xbf16>
    %c40 = arith.constant 40 : index
    %c0_9 = arith.constant 0 : index
    %19 = vector.load %arg1[%c40, %c0_9] : memref<224x256xf32, #tpu.memory_space<vmem>>, vector<32x16xf32>
    %20 = arith.truncf %19 : vector<32x16xf32> to vector<32x16xbf16>
    %cst_10 = arith.constant dense<0.000000e+00> : vector<16x2x16xf32>
    %21 = tpu.matmul %18, %20, %cst_10 {dimension_numbers = #tpu.dot_dimension_numbers<[2], [0], [0, 1], [1], [0, 0, 0, 1, 1, 1], [], []>} : vector<16x2x32xbf16>, vector<32x16xbf16>, vector<16x2x16xf32> -> vector<16x2x16xf32>
    %c72 = arith.constant 72 : index
    %c0_11 = arith.constant 0 : index
    %22 = vector.load %arg1[%c72, %c0_11] : memref<224x256xf32, #tpu.memory_space<vmem>>, vector<16x1xf32>
    %23 = vector.shape_cast %22 : vector<16x1xf32> to vector<16x1x1xf32>
    %24 = vector.broadcast %23 : vector<16x1x1xf32> to vector<16x2x16xf32>
    %25 = arith.addf %21, %24 : vector<16x2x16xf32>
    %cst_12 = arith.constant 0.000000e+00 : f32
    %26 = vector.broadcast %cst_12 : f32 to vector<16x2x16xf32>
    %27 = arith.maximumf %25, %26 : vector<16x2x16xf32>
    %28 = tpu.transpose %27, [1, 0, 2] : vector<16x2x16xf32> -> vector<2x16x16xf32>
    %29 = tpu.transpose %28, [0, 2, 1] : vector<2x16x16xf32> -> vector<2x16x16xf32>
    %30 = arith.truncf %29 : vector<2x16x16xf32> to vector<2x16x16xbf16>
    %c88 = arith.constant 88 : index
    %c0_13 = arith.constant 0 : index
    %31 = vector.load %arg1[%c88, %c0_13] : memref<224x256xf32, #tpu.memory_space<vmem>>, vector<16x128xf32>
    %32 = arith.truncf %31 : vector<16x128xf32> to vector<16x128xbf16>
    %cst_14 = arith.constant dense<0.000000e+00> : vector<2x16x128xf32>
    %33 = tpu.matmul %30, %32, %cst_14 {dimension_numbers = #tpu.dot_dimension_numbers<[2], [0], [0, 1], [1], [0, 0, 0, 1, 1, 1], [], []>} : vector<2x16x16xbf16>, vector<16x128xbf16>, vector<2x16x128xf32> -> vector<2x16x128xf32>
    %c104 = arith.constant 104 : index
    %c0_15 = arith.constant 0 : index
    %34 = vector.load %arg1[%c104, %c0_15] : memref<224x256xf32, #tpu.memory_space<vmem>>, vector<1x128xf32>
    %35 = vector.shape_cast %34 : vector<1x128xf32> to vector<1x1x128xf32>
    %36 = vector.broadcast %35 : vector<1x1x128xf32> to vector<2x16x128xf32>
    %37 = arith.addf %33, %36 : vector<2x16x128xf32>
    %c112 = arith.constant 112 : index
    %c0_16 = arith.constant 0 : index
    %38 = vector.load %arg1[%c112, %c0_16] : memref<224x256xf32, #tpu.memory_space<vmem>>, vector<64x256xf32>
    %39 = arith.truncf %38 : vector<64x256xf32> to vector<64x256xbf16>
    %c176 = arith.constant 176 : index
    %c0_17 = arith.constant 0 : index
    %40 = vector.load %arg1[%c176, %c0_17] : memref<224x256xf32, #tpu.memory_space<vmem>>, vector<1x128xf32>
    %cst_18 = arith.constant 0.000000e+00 : f32
    %41 = vector.broadcast %cst_18 : f32 to vector<2x32xf32>
    %cst_19 = arith.constant 0.000000e+00 : f32
    %42 = vector.broadcast %cst_19 : f32 to vector<2x32xf32>
    %cst_20 = arith.constant 0.000000e+00 : f32
    %43 = vector.broadcast %cst_20 : f32 to vector<2x32xf32>
    %cst_21 = arith.constant 0.000000e+00 : f32
    %44 = vector.broadcast %cst_21 : f32 to vector<2x32xf32>
    %45 = tpu.concatenate %41, %43 in 1 : vector<2x32xf32>, vector<2x32xf32> -> vector<2x64xf32>
    %46 = arith.truncf %45 : vector<2x64xf32> to vector<2x64xbf16>
    %cst_22 = arith.constant dense<0.000000e+00> : vector<2x256xf32>
    %47 = tpu.matmul %46, %39, %cst_22 {dimension_numbers = #tpu.dot_dimension_numbers<[1], [0], [0], [1], [0, 0, 1, 1], [], []>} : vector<2x64xbf16>, vector<64x256xbf16>, vector<2x256xf32> -> vector<2x256xf32>
    %48 = vector.extract_strided_slice %37 {offsets = [0, 0, 0], sizes = [2, 1, 128], strides = [1, 1, 1]} : vector<2x16x128xf32> to vector<2x1x128xf32>
    %49 = vector.shape_cast %48 : vector<2x1x128xf32> to vector<2x128xf32>
    %50 = vector.extract_strided_slice %47 {offsets = [0, 0], sizes = [2, 128], strides = [1, 1]} : vector<2x256xf32> to vector<2x128xf32>
    %51 = arith.addf %49, %50 : vector<2x128xf32>
    %52 = arith.negf %51 : vector<2x128xf32>
    %53 = math.exp %52 : vector<2x128xf32>
    %cst_23 = arith.constant 1.000000e+00 : f32
    %54 = vector.broadcast %cst_23 : f32 to vector<2x128xf32>
    %55 = arith.addf %54, %53 : vector<2x128xf32>
    %56 = arith.divf %54, %55 : vector<2x128xf32>
    %57 = vector.extract_strided_slice %56 {offsets = [0, 0], sizes = [2, 32], strides = [1, 1]} : vector<2x128xf32> to vector<2x32xf32>
    %58 = vector.extract_strided_slice %56 {offsets = [0, 32], sizes = [2, 32], strides = [1, 1]} : vector<2x128xf32> to vector<2x32xf32>
    %59 = vector.extract_strided_slice %56 {offsets = [0, 64], sizes = [2, 32], strides = [1, 1]} : vector<2x128xf32> to vector<2x32xf32>
    %cst_24 = arith.constant 2.000000e+00 : f32
    %60 = vector.broadcast %cst_24 : f32 to vector<2x32xf32>
    %61 = arith.mulf %60, %59 : vector<2x32xf32>
    %cst_25 = arith.constant 1.000000e+00 : f32
    %62 = vector.broadcast %cst_25 : f32 to vector<2x32xf32>
    %63 = arith.subf %61, %62 : vector<2x32xf32>
    %64 = vector.extract_strided_slice %56 {offsets = [0, 96], sizes = [2, 32], strides = [1, 1]} : vector<2x128xf32> to vector<2x32xf32>
    %65 = arith.mulf %58, %42 : vector<2x32xf32>
    %66 = arith.mulf %57, %63 : vector<2x32xf32>
    %67 = arith.addf %65, %66 : vector<2x32xf32>
    %68 = math.tanh %67 : vector<2x32xf32>
    %69 = arith.mulf %64, %68 : vector<2x32xf32>
    %70 = tpu.concatenate %69, %43 in 1 : vector<2x32xf32>, vector<2x32xf32> -> vector<2x64xf32>
    %71 = arith.truncf %70 : vector<2x64xf32> to vector<2x64xbf16>
    %cst_26 = arith.constant dense<0.000000e+00> : vector<2x256xf32>
    %72 = tpu.matmul %71, %39, %cst_26 {dimension_numbers = #tpu.dot_dimension_numbers<[1], [0], [0], [1], [0, 0, 1, 1], [], []>} : vector<2x64xbf16>, vector<64x256xbf16>, vector<2x256xf32> -> vector<2x256xf32>
    %73 = vector.extract_strided_slice %72 {offsets = [0, 128], sizes = [2, 128], strides = [1, 1]} : vector<2x256xf32> to vector<2x128xf32>
    %74 = vector.broadcast %40 : vector<1x128xf32> to vector<2x128xf32>
    %75 = arith.addf %74, %73 : vector<2x128xf32>
    %76 = arith.negf %75 : vector<2x128xf32>
    %77 = math.exp %76 : vector<2x128xf32>
    %cst_27 = arith.constant 1.000000e+00 : f32
    %78 = vector.broadcast %cst_27 : f32 to vector<2x128xf32>
    %79 = arith.addf %78, %77 : vector<2x128xf32>
    %80 = arith.divf %78, %79 : vector<2x128xf32>
    %81 = vector.extract_strided_slice %80 {offsets = [0, 0], sizes = [2, 32], strides = [1, 1]} : vector<2x128xf32> to vector<2x32xf32>
    %82 = vector.extract_strided_slice %80 {offsets = [0, 32], sizes = [2, 32], strides = [1, 1]} : vector<2x128xf32> to vector<2x32xf32>
    %83 = vector.extract_strided_slice %80 {offsets = [0, 64], sizes = [2, 32], strides = [1, 1]} : vector<2x128xf32> to vector<2x32xf32>
    %cst_28 = arith.constant 2.000000e+00 : f32
    %84 = vector.broadcast %cst_28 : f32 to vector<2x32xf32>
    %85 = arith.mulf %84, %83 : vector<2x32xf32>
    %cst_29 = arith.constant 1.000000e+00 : f32
    %86 = vector.broadcast %cst_29 : f32 to vector<2x32xf32>
    %87 = arith.subf %85, %86 : vector<2x32xf32>
    %88 = vector.extract_strided_slice %80 {offsets = [0, 96], sizes = [2, 32], strides = [1, 1]} : vector<2x128xf32> to vector<2x32xf32>
    %89 = arith.mulf %82, %44 : vector<2x32xf32>
    %90 = arith.mulf %81, %87 : vector<2x32xf32>
    %91 = arith.addf %89, %90 : vector<2x32xf32>
    %92 = math.tanh %91 : vector<2x32xf32>
    %93 = arith.mulf %88, %92 : vector<2x32xf32>
    %94 = vector.extract_strided_slice %37 {offsets = [0, 1, 0], sizes = [2, 1, 128], strides = [1, 1, 1]} : vector<2x16x128xf32> to vector<2x1x128xf32>
    %95 = vector.shape_cast %94 : vector<2x1x128xf32> to vector<2x128xf32>
    %96 = vector.extract_strided_slice %72 {offsets = [0, 0], sizes = [2, 128], strides = [1, 1]} : vector<2x256xf32> to vector<2x128xf32>
    %97 = arith.addf %95, %96 : vector<2x128xf32>
    %98 = arith.negf %97 : vector<2x128xf32>
    %99 = math.exp %98 : vector<2x128xf32>
    %cst_30 = arith.constant 1.000000e+00 : f32
    %100 = vector.broadcast %cst_30 : f32 to vector<2x128xf32>
    %101 = arith.addf %100, %99 : vector<2x128xf32>
    %102 = arith.divf %100, %101 : vector<2x128xf32>
    %103 = vector.extract_strided_slice %102 {offsets = [0, 0], sizes = [2, 32], strides = [1, 1]} : vector<2x128xf32> to vector<2x32xf32>
    %104 = vector.extract_strided_slice %102 {offsets = [0, 32], sizes = [2, 32], strides = [1, 1]} : vector<2x128xf32> to vector<2x32xf32>
    %105 = vector.extract_strided_slice %102 {offsets = [0, 64], sizes = [2, 32], strides = [1, 1]} : vector<2x128xf32> to vector<2x32xf32>
    %cst_31 = arith.constant 2.000000e+00 : f32
    %106 = vector.broadcast %cst_31 : f32 to vector<2x32xf32>
    %107 = arith.mulf %106, %105 : vector<2x32xf32>
    %cst_32 = arith.constant 1.000000e+00 : f32
    %108 = vector.broadcast %cst_32 : f32 to vector<2x32xf32>
    %109 = arith.subf %107, %108 : vector<2x32xf32>
    %110 = vector.extract_strided_slice %102 {offsets = [0, 96], sizes = [2, 32], strides = [1, 1]} : vector<2x128xf32> to vector<2x32xf32>
    %111 = arith.mulf %104, %67 : vector<2x32xf32>
    %112 = arith.mulf %103, %109 : vector<2x32xf32>
    %113 = arith.addf %111, %112 : vector<2x32xf32>
    %114 = math.tanh %113 : vector<2x32xf32>
    %115 = arith.mulf %110, %114 : vector<2x32xf32>
    %116 = tpu.concatenate %115, %93 in 1 : vector<2x32xf32>, vector<2x32xf32> -> vector<2x64xf32>
    %117 = arith.truncf %116 : vector<2x64xf32> to vector<2x64xbf16>
    %cst_33 = arith.constant dense<0.000000e+00> : vector<2x256xf32>
    %118 = tpu.matmul %117, %39, %cst_33 {dimension_numbers = #tpu.dot_dimension_numbers<[1], [0], [0], [1], [0, 0, 1, 1], [], []>} : vector<2x64xbf16>, vector<64x256xbf16>, vector<2x256xf32> -> vector<2x256xf32>
    %119 = vector.extract_strided_slice %118 {offsets = [0, 128], sizes = [2, 128], strides = [1, 1]} : vector<2x256xf32> to vector<2x128xf32>
    %120 = vector.broadcast %40 : vector<1x128xf32> to vector<2x128xf32>
    %121 = arith.addf %120, %119 : vector<2x128xf32>
    %122 = arith.negf %121 : vector<2x128xf32>
    %123 = math.exp %122 : vector<2x128xf32>
    %cst_34 = arith.constant 1.000000e+00 : f32
    %124 = vector.broadcast %cst_34 : f32 to vector<2x128xf32>
    %125 = arith.addf %124, %123 : vector<2x128xf32>
    %126 = arith.divf %124, %125 : vector<2x128xf32>
    %127 = vector.extract_strided_slice %126 {offsets = [0, 0], sizes = [2, 32], strides = [1, 1]} : vector<2x128xf32> to vector<2x32xf32>
    %128 = vector.extract_strided_slice %126 {offsets = [0, 32], sizes = [2, 32], strides = [1, 1]} : vector<2x128xf32> to vector<2x32xf32>
    %129 = vector.extract_strided_slice %126 {offsets = [0, 64], sizes = [2, 32], strides = [1, 1]} : vector<2x128xf32> to vector<2x32xf32>
    %cst_35 = arith.constant 2.000000e+00 : f32
    %130 = vector.broadcast %cst_35 : f32 to vector<2x32xf32>
    %131 = arith.mulf %130, %129 : vector<2x32xf32>
    %cst_36 = arith.constant 1.000000e+00 : f32
    %132 = vector.broadcast %cst_36 : f32 to vector<2x32xf32>
    %133 = arith.subf %131, %132 : vector<2x32xf32>
    %134 = vector.extract_strided_slice %126 {offsets = [0, 96], sizes = [2, 32], strides = [1, 1]} : vector<2x128xf32> to vector<2x32xf32>
    %135 = arith.mulf %128, %91 : vector<2x32xf32>
    %136 = arith.mulf %127, %133 : vector<2x32xf32>
    %137 = arith.addf %135, %136 : vector<2x32xf32>
    %138 = math.tanh %137 : vector<2x32xf32>
    %139 = arith.mulf %134, %138 : vector<2x32xf32>
    %140 = vector.extract_strided_slice %37 {offsets = [0, 2, 0], sizes = [2, 1, 128], strides = [1, 1, 1]} : vector<2x16x128xf32> to vector<2x1x128xf32>
    %141 = vector.shape_cast %140 : vector<2x1x128xf32> to vector<2x128xf32>
    %142 = vector.extract_strided_slice %118 {offsets = [0, 0], sizes = [2, 128], strides = [1, 1]} : vector<2x256xf32> to vector<2x128xf32>
    %143 = arith.addf %141, %142 : vector<2x128xf32>
    %144 = arith.negf %143 : vector<2x128xf32>
    %145 = math.exp %144 : vector<2x128xf32>
    %cst_37 = arith.constant 1.000000e+00 : f32
    %146 = vector.broadcast %cst_37 : f32 to vector<2x128xf32>
    %147 = arith.addf %146, %145 : vector<2x128xf32>
    %148 = arith.divf %146, %147 : vector<2x128xf32>
    %149 = vector.extract_strided_slice %148 {offsets = [0, 0], sizes = [2, 32], strides = [1, 1]} : vector<2x128xf32> to vector<2x32xf32>
    %150 = vector.extract_strided_slice %148 {offsets = [0, 32], sizes = [2, 32], strides = [1, 1]} : vector<2x128xf32> to vector<2x32xf32>
    %151 = vector.extract_strided_slice %148 {offsets = [0, 64], sizes = [2, 32], strides = [1, 1]} : vector<2x128xf32> to vector<2x32xf32>
    %cst_38 = arith.constant 2.000000e+00 : f32
    %152 = vector.broadcast %cst_38 : f32 to vector<2x32xf32>
    %153 = arith.mulf %152, %151 : vector<2x32xf32>
    %cst_39 = arith.constant 1.000000e+00 : f32
    %154 = vector.broadcast %cst_39 : f32 to vector<2x32xf32>
    %155 = arith.subf %153, %154 : vector<2x32xf32>
    %156 = vector.extract_strided_slice %148 {offsets = [0, 96], sizes = [2, 32], strides = [1, 1]} : vector<2x128xf32> to vector<2x32xf32>
    %157 = arith.mulf %150, %113 : vector<2x32xf32>
    %158 = arith.mulf %149, %155 : vector<2x32xf32>
    %159 = arith.addf %157, %158 : vector<2x32xf32>
    %160 = math.tanh %159 : vector<2x32xf32>
    %161 = arith.mulf %156, %160 : vector<2x32xf32>
    %162 = tpu.concatenate %161, %139 in 1 : vector<2x32xf32>, vector<2x32xf32> -> vector<2x64xf32>
    %163 = arith.truncf %162 : vector<2x64xf32> to vector<2x64xbf16>
    %cst_40 = arith.constant dense<0.000000e+00> : vector<2x256xf32>
    %164 = tpu.matmul %163, %39, %cst_40 {dimension_numbers = #tpu.dot_dimension_numbers<[1], [0], [0], [1], [0, 0, 1, 1], [], []>} : vector<2x64xbf16>, vector<64x256xbf16>, vector<2x256xf32> -> vector<2x256xf32>
    %165 = vector.extract_strided_slice %164 {offsets = [0, 128], sizes = [2, 128], strides = [1, 1]} : vector<2x256xf32> to vector<2x128xf32>
    %166 = vector.broadcast %40 : vector<1x128xf32> to vector<2x128xf32>
    %167 = arith.addf %166, %165 : vector<2x128xf32>
    %168 = arith.negf %167 : vector<2x128xf32>
    %169 = math.exp %168 : vector<2x128xf32>
    %cst_41 = arith.constant 1.000000e+00 : f32
    %170 = vector.broadcast %cst_41 : f32 to vector<2x128xf32>
    %171 = arith.addf %170, %169 : vector<2x128xf32>
    %172 = arith.divf %170, %171 : vector<2x128xf32>
    %173 = vector.extract_strided_slice %172 {offsets = [0, 0], sizes = [2, 32], strides = [1, 1]} : vector<2x128xf32> to vector<2x32xf32>
    %174 = vector.extract_strided_slice %172 {offsets = [0, 32], sizes = [2, 32], strides = [1, 1]} : vector<2x128xf32> to vector<2x32xf32>
    %175 = vector.extract_strided_slice %172 {offsets = [0, 64], sizes = [2, 32], strides = [1, 1]} : vector<2x128xf32> to vector<2x32xf32>
    %cst_42 = arith.constant 2.000000e+00 : f32
    %176 = vector.broadcast %cst_42 : f32 to vector<2x32xf32>
    %177 = arith.mulf %176, %175 : vector<2x32xf32>
    %cst_43 = arith.constant 1.000000e+00 : f32
    %178 = vector.broadcast %cst_43 : f32 to vector<2x32xf32>
    %179 = arith.subf %177, %178 : vector<2x32xf32>
    %180 = vector.extract_strided_slice %172 {offsets = [0, 96], sizes = [2, 32], strides = [1, 1]} : vector<2x128xf32> to vector<2x32xf32>
    %181 = arith.mulf %174, %137 : vector<2x32xf32>
    %182 = arith.mulf %173, %179 : vector<2x32xf32>
    %183 = arith.addf %181, %182 : vector<2x32xf32>
    %184 = math.tanh %183 : vector<2x32xf32>
    %185 = arith.mulf %180, %184 : vector<2x32xf32>
    %186 = vector.extract_strided_slice %37 {offsets = [0, 3, 0], sizes = [2, 1, 128], strides = [1, 1, 1]} : vector<2x16x128xf32> to vector<2x1x128xf32>
    %187 = vector.shape_cast %186 : vector<2x1x128xf32> to vector<2x128xf32>
    %188 = vector.extract_strided_slice %164 {offsets = [0, 0], sizes = [2, 128], strides = [1, 1]} : vector<2x256xf32> to vector<2x128xf32>
    %189 = arith.addf %187, %188 : vector<2x128xf32>
    %190 = arith.negf %189 : vector<2x128xf32>
    %191 = math.exp %190 : vector<2x128xf32>
    %cst_44 = arith.constant 1.000000e+00 : f32
    %192 = vector.broadcast %cst_44 : f32 to vector<2x128xf32>
    %193 = arith.addf %192, %191 : vector<2x128xf32>
    %194 = arith.divf %192, %193 : vector<2x128xf32>
    %195 = vector.extract_strided_slice %194 {offsets = [0, 0], sizes = [2, 32], strides = [1, 1]} : vector<2x128xf32> to vector<2x32xf32>
    %196 = vector.extract_strided_slice %194 {offsets = [0, 32], sizes = [2, 32], strides = [1, 1]} : vector<2x128xf32> to vector<2x32xf32>
    %197 = vector.extract_strided_slice %194 {offsets = [0, 64], sizes = [2, 32], strides = [1, 1]} : vector<2x128xf32> to vector<2x32xf32>
    %cst_45 = arith.constant 2.000000e+00 : f32
    %198 = vector.broadcast %cst_45 : f32 to vector<2x32xf32>
    %199 = arith.mulf %198, %197 : vector<2x32xf32>
    %cst_46 = arith.constant 1.000000e+00 : f32
    %200 = vector.broadcast %cst_46 : f32 to vector<2x32xf32>
    %201 = arith.subf %199, %200 : vector<2x32xf32>
    %202 = vector.extract_strided_slice %194 {offsets = [0, 96], sizes = [2, 32], strides = [1, 1]} : vector<2x128xf32> to vector<2x32xf32>
    %203 = arith.mulf %196, %159 : vector<2x32xf32>
    %204 = arith.mulf %195, %201 : vector<2x32xf32>
    %205 = arith.addf %203, %204 : vector<2x32xf32>
    %206 = math.tanh %205 : vector<2x32xf32>
    %207 = arith.mulf %202, %206 : vector<2x32xf32>
    %208 = tpu.concatenate %207, %185 in 1 : vector<2x32xf32>, vector<2x32xf32> -> vector<2x64xf32>
    %209 = arith.truncf %208 : vector<2x64xf32> to vector<2x64xbf16>
    %cst_47 = arith.constant dense<0.000000e+00> : vector<2x256xf32>
    %210 = tpu.matmul %209, %39, %cst_47 {dimension_numbers = #tpu.dot_dimension_numbers<[1], [0], [0], [1], [0, 0, 1, 1], [], []>} : vector<2x64xbf16>, vector<64x256xbf16>, vector<2x256xf32> -> vector<2x256xf32>
    %211 = vector.extract_strided_slice %210 {offsets = [0, 128], sizes = [2, 128], strides = [1, 1]} : vector<2x256xf32> to vector<2x128xf32>
    %212 = vector.broadcast %40 : vector<1x128xf32> to vector<2x128xf32>
    %213 = arith.addf %212, %211 : vector<2x128xf32>
    %214 = arith.negf %213 : vector<2x128xf32>
    %215 = math.exp %214 : vector<2x128xf32>
    %cst_48 = arith.constant 1.000000e+00 : f32
    %216 = vector.broadcast %cst_48 : f32 to vector<2x128xf32>
    %217 = arith.addf %216, %215 : vector<2x128xf32>
    %218 = arith.divf %216, %217 : vector<2x128xf32>
    %219 = vector.extract_strided_slice %218 {offsets = [0, 0], sizes = [2, 32], strides = [1, 1]} : vector<2x128xf32> to vector<2x32xf32>
    %220 = vector.extract_strided_slice %218 {offsets = [0, 32], sizes = [2, 32], strides = [1, 1]} : vector<2x128xf32> to vector<2x32xf32>
    %221 = vector.extract_strided_slice %218 {offsets = [0, 64], sizes = [2, 32], strides = [1, 1]} : vector<2x128xf32> to vector<2x32xf32>
    %cst_49 = arith.constant 2.000000e+00 : f32
    %222 = vector.broadcast %cst_49 : f32 to vector<2x32xf32>
    %223 = arith.mulf %222, %221 : vector<2x32xf32>
    %cst_50 = arith.constant 1.000000e+00 : f32
    %224 = vector.broadcast %cst_50 : f32 to vector<2x32xf32>
    %225 = arith.subf %223, %224 : vector<2x32xf32>
    %226 = vector.extract_strided_slice %218 {offsets = [0, 96], sizes = [2, 32], strides = [1, 1]} : vector<2x128xf32> to vector<2x32xf32>
    %227 = arith.mulf %220, %183 : vector<2x32xf32>
    %228 = arith.mulf %219, %225 : vector<2x32xf32>
    %229 = arith.addf %227, %228 : vector<2x32xf32>
    %230 = math.tanh %229 : vector<2x32xf32>
    %231 = arith.mulf %226, %230 : vector<2x32xf32>
    %232 = vector.extract_strided_slice %37 {offsets = [0, 4, 0], sizes = [2, 1, 128], strides = [1, 1, 1]} : vector<2x16x128xf32> to vector<2x1x128xf32>
    %233 = vector.shape_cast %232 : vector<2x1x128xf32> to vector<2x128xf32>
    %234 = vector.extract_strided_slice %210 {offsets = [0, 0], sizes = [2, 128], strides = [1, 1]} : vector<2x256xf32> to vector<2x128xf32>
    %235 = arith.addf %233, %234 : vector<2x128xf32>
    %236 = arith.negf %235 : vector<2x128xf32>
    %237 = math.exp %236 : vector<2x128xf32>
    %cst_51 = arith.constant 1.000000e+00 : f32
    %238 = vector.broadcast %cst_51 : f32 to vector<2x128xf32>
    %239 = arith.addf %238, %237 : vector<2x128xf32>
    %240 = arith.divf %238, %239 : vector<2x128xf32>
    %241 = vector.extract_strided_slice %240 {offsets = [0, 0], sizes = [2, 32], strides = [1, 1]} : vector<2x128xf32> to vector<2x32xf32>
    %242 = vector.extract_strided_slice %240 {offsets = [0, 32], sizes = [2, 32], strides = [1, 1]} : vector<2x128xf32> to vector<2x32xf32>
    %243 = vector.extract_strided_slice %240 {offsets = [0, 64], sizes = [2, 32], strides = [1, 1]} : vector<2x128xf32> to vector<2x32xf32>
    %cst_52 = arith.constant 2.000000e+00 : f32
    %244 = vector.broadcast %cst_52 : f32 to vector<2x32xf32>
    %245 = arith.mulf %244, %243 : vector<2x32xf32>
    %cst_53 = arith.constant 1.000000e+00 : f32
    %246 = vector.broadcast %cst_53 : f32 to vector<2x32xf32>
    %247 = arith.subf %245, %246 : vector<2x32xf32>
    %248 = vector.extract_strided_slice %240 {offsets = [0, 96], sizes = [2, 32], strides = [1, 1]} : vector<2x128xf32> to vector<2x32xf32>
    %249 = arith.mulf %242, %205 : vector<2x32xf32>
    %250 = arith.mulf %241, %247 : vector<2x32xf32>
    %251 = arith.addf %249, %250 : vector<2x32xf32>
    %252 = math.tanh %251 : vector<2x32xf32>
    %253 = arith.mulf %248, %252 : vector<2x32xf32>
    %254 = tpu.concatenate %253, %231 in 1 : vector<2x32xf32>, vector<2x32xf32> -> vector<2x64xf32>
    %255 = arith.truncf %254 : vector<2x64xf32> to vector<2x64xbf16>
    %cst_54 = arith.constant dense<0.000000e+00> : vector<2x256xf32>
    %256 = tpu.matmul %255, %39, %cst_54 {dimension_numbers = #tpu.dot_dimension_numbers<[1], [0], [0], [1], [0, 0, 1, 1], [], []>} : vector<2x64xbf16>, vector<64x256xbf16>, vector<2x256xf32> -> vector<2x256xf32>
    %257 = vector.extract_strided_slice %256 {offsets = [0, 128], sizes = [2, 128], strides = [1, 1]} : vector<2x256xf32> to vector<2x128xf32>
    %258 = vector.broadcast %40 : vector<1x128xf32> to vector<2x128xf32>
    %259 = arith.addf %258, %257 : vector<2x128xf32>
    %260 = arith.negf %259 : vector<2x128xf32>
    %261 = math.exp %260 : vector<2x128xf32>
    %cst_55 = arith.constant 1.000000e+00 : f32
    %262 = vector.broadcast %cst_55 : f32 to vector<2x128xf32>
    %263 = arith.addf %262, %261 : vector<2x128xf32>
    %264 = arith.divf %262, %263 : vector<2x128xf32>
    %265 = vector.extract_strided_slice %264 {offsets = [0, 0], sizes = [2, 32], strides = [1, 1]} : vector<2x128xf32> to vector<2x32xf32>
    %266 = vector.extract_strided_slice %264 {offsets = [0, 32], sizes = [2, 32], strides = [1, 1]} : vector<2x128xf32> to vector<2x32xf32>
    %267 = vector.extract_strided_slice %264 {offsets = [0, 64], sizes = [2, 32], strides = [1, 1]} : vector<2x128xf32> to vector<2x32xf32>
    %cst_56 = arith.constant 2.000000e+00 : f32
    %268 = vector.broadcast %cst_56 : f32 to vector<2x32xf32>
    %269 = arith.mulf %268, %267 : vector<2x32xf32>
    %cst_57 = arith.constant 1.000000e+00 : f32
    %270 = vector.broadcast %cst_57 : f32 to vector<2x32xf32>
    %271 = arith.subf %269, %270 : vector<2x32xf32>
    %272 = vector.extract_strided_slice %264 {offsets = [0, 96], sizes = [2, 32], strides = [1, 1]} : vector<2x128xf32> to vector<2x32xf32>
    %273 = arith.mulf %266, %229 : vector<2x32xf32>
    %274 = arith.mulf %265, %271 : vector<2x32xf32>
    %275 = arith.addf %273, %274 : vector<2x32xf32>
    %276 = math.tanh %275 : vector<2x32xf32>
    %277 = arith.mulf %272, %276 : vector<2x32xf32>
    %278 = vector.extract_strided_slice %37 {offsets = [0, 5, 0], sizes = [2, 1, 128], strides = [1, 1, 1]} : vector<2x16x128xf32> to vector<2x1x128xf32>
    %279 = vector.shape_cast %278 : vector<2x1x128xf32> to vector<2x128xf32>
    %280 = vector.extract_strided_slice %256 {offsets = [0, 0], sizes = [2, 128], strides = [1, 1]} : vector<2x256xf32> to vector<2x128xf32>
    %281 = arith.addf %279, %280 : vector<2x128xf32>
    %282 = arith.negf %281 : vector<2x128xf32>
    %283 = math.exp %282 : vector<2x128xf32>
    %cst_58 = arith.constant 1.000000e+00 : f32
    %284 = vector.broadcast %cst_58 : f32 to vector<2x128xf32>
    %285 = arith.addf %284, %283 : vector<2x128xf32>
    %286 = arith.divf %284, %285 : vector<2x128xf32>
    %287 = vector.extract_strided_slice %286 {offsets = [0, 0], sizes = [2, 32], strides = [1, 1]} : vector<2x128xf32> to vector<2x32xf32>
    %288 = vector.extract_strided_slice %286 {offsets = [0, 32], sizes = [2, 32], strides = [1, 1]} : vector<2x128xf32> to vector<2x32xf32>
    %289 = vector.extract_strided_slice %286 {offsets = [0, 64], sizes = [2, 32], strides = [1, 1]} : vector<2x128xf32> to vector<2x32xf32>
    %cst_59 = arith.constant 2.000000e+00 : f32
    %290 = vector.broadcast %cst_59 : f32 to vector<2x32xf32>
    %291 = arith.mulf %290, %289 : vector<2x32xf32>
    %cst_60 = arith.constant 1.000000e+00 : f32
    %292 = vector.broadcast %cst_60 : f32 to vector<2x32xf32>
    %293 = arith.subf %291, %292 : vector<2x32xf32>
    %294 = vector.extract_strided_slice %286 {offsets = [0, 96], sizes = [2, 32], strides = [1, 1]} : vector<2x128xf32> to vector<2x32xf32>
    %295 = arith.mulf %288, %251 : vector<2x32xf32>
    %296 = arith.mulf %287, %293 : vector<2x32xf32>
    %297 = arith.addf %295, %296 : vector<2x32xf32>
    %298 = math.tanh %297 : vector<2x32xf32>
    %299 = arith.mulf %294, %298 : vector<2x32xf32>
    %300 = tpu.concatenate %299, %277 in 1 : vector<2x32xf32>, vector<2x32xf32> -> vector<2x64xf32>
    %301 = arith.truncf %300 : vector<2x64xf32> to vector<2x64xbf16>
    %cst_61 = arith.constant dense<0.000000e+00> : vector<2x256xf32>
    %302 = tpu.matmul %301, %39, %cst_61 {dimension_numbers = #tpu.dot_dimension_numbers<[1], [0], [0], [1], [0, 0, 1, 1], [], []>} : vector<2x64xbf16>, vector<64x256xbf16>, vector<2x256xf32> -> vector<2x256xf32>
    %303 = vector.extract_strided_slice %302 {offsets = [0, 128], sizes = [2, 128], strides = [1, 1]} : vector<2x256xf32> to vector<2x128xf32>
    %304 = vector.broadcast %40 : vector<1x128xf32> to vector<2x128xf32>
    %305 = arith.addf %304, %303 : vector<2x128xf32>
    %306 = arith.negf %305 : vector<2x128xf32>
    %307 = math.exp %306 : vector<2x128xf32>
    %cst_62 = arith.constant 1.000000e+00 : f32
    %308 = vector.broadcast %cst_62 : f32 to vector<2x128xf32>
    %309 = arith.addf %308, %307 : vector<2x128xf32>
    %310 = arith.divf %308, %309 : vector<2x128xf32>
    %311 = vector.extract_strided_slice %310 {offsets = [0, 0], sizes = [2, 32], strides = [1, 1]} : vector<2x128xf32> to vector<2x32xf32>
    %312 = vector.extract_strided_slice %310 {offsets = [0, 32], sizes = [2, 32], strides = [1, 1]} : vector<2x128xf32> to vector<2x32xf32>
    %313 = vector.extract_strided_slice %310 {offsets = [0, 64], sizes = [2, 32], strides = [1, 1]} : vector<2x128xf32> to vector<2x32xf32>
    %cst_63 = arith.constant 2.000000e+00 : f32
    %314 = vector.broadcast %cst_63 : f32 to vector<2x32xf32>
    %315 = arith.mulf %314, %313 : vector<2x32xf32>
    %cst_64 = arith.constant 1.000000e+00 : f32
    %316 = vector.broadcast %cst_64 : f32 to vector<2x32xf32>
    %317 = arith.subf %315, %316 : vector<2x32xf32>
    %318 = vector.extract_strided_slice %310 {offsets = [0, 96], sizes = [2, 32], strides = [1, 1]} : vector<2x128xf32> to vector<2x32xf32>
    %319 = arith.mulf %312, %275 : vector<2x32xf32>
    %320 = arith.mulf %311, %317 : vector<2x32xf32>
    %321 = arith.addf %319, %320 : vector<2x32xf32>
    %322 = math.tanh %321 : vector<2x32xf32>
    %323 = arith.mulf %318, %322 : vector<2x32xf32>
    %324 = vector.extract_strided_slice %37 {offsets = [0, 6, 0], sizes = [2, 1, 128], strides = [1, 1, 1]} : vector<2x16x128xf32> to vector<2x1x128xf32>
    %325 = vector.shape_cast %324 : vector<2x1x128xf32> to vector<2x128xf32>
    %326 = vector.extract_strided_slice %302 {offsets = [0, 0], sizes = [2, 128], strides = [1, 1]} : vector<2x256xf32> to vector<2x128xf32>
    %327 = arith.addf %325, %326 : vector<2x128xf32>
    %328 = arith.negf %327 : vector<2x128xf32>
    %329 = math.exp %328 : vector<2x128xf32>
    %cst_65 = arith.constant 1.000000e+00 : f32
    %330 = vector.broadcast %cst_65 : f32 to vector<2x128xf32>
    %331 = arith.addf %330, %329 : vector<2x128xf32>
    %332 = arith.divf %330, %331 : vector<2x128xf32>
    %333 = vector.extract_strided_slice %332 {offsets = [0, 0], sizes = [2, 32], strides = [1, 1]} : vector<2x128xf32> to vector<2x32xf32>
    %334 = vector.extract_strided_slice %332 {offsets = [0, 32], sizes = [2, 32], strides = [1, 1]} : vector<2x128xf32> to vector<2x32xf32>
    %335 = vector.extract_strided_slice %332 {offsets = [0, 64], sizes = [2, 32], strides = [1, 1]} : vector<2x128xf32> to vector<2x32xf32>
    %cst_66 = arith.constant 2.000000e+00 : f32
    %336 = vector.broadcast %cst_66 : f32 to vector<2x32xf32>
    %337 = arith.mulf %336, %335 : vector<2x32xf32>
    %cst_67 = arith.constant 1.000000e+00 : f32
    %338 = vector.broadcast %cst_67 : f32 to vector<2x32xf32>
    %339 = arith.subf %337, %338 : vector<2x32xf32>
    %340 = vector.extract_strided_slice %332 {offsets = [0, 96], sizes = [2, 32], strides = [1, 1]} : vector<2x128xf32> to vector<2x32xf32>
    %341 = arith.mulf %334, %297 : vector<2x32xf32>
    %342 = arith.mulf %333, %339 : vector<2x32xf32>
    %343 = arith.addf %341, %342 : vector<2x32xf32>
    %344 = math.tanh %343 : vector<2x32xf32>
    %345 = arith.mulf %340, %344 : vector<2x32xf32>
    %346 = tpu.concatenate %345, %323 in 1 : vector<2x32xf32>, vector<2x32xf32> -> vector<2x64xf32>
    %347 = arith.truncf %346 : vector<2x64xf32> to vector<2x64xbf16>
    %cst_68 = arith.constant dense<0.000000e+00> : vector<2x256xf32>
    %348 = tpu.matmul %347, %39, %cst_68 {dimension_numbers = #tpu.dot_dimension_numbers<[1], [0], [0], [1], [0, 0, 1, 1], [], []>} : vector<2x64xbf16>, vector<64x256xbf16>, vector<2x256xf32> -> vector<2x256xf32>
    %349 = vector.extract_strided_slice %348 {offsets = [0, 128], sizes = [2, 128], strides = [1, 1]} : vector<2x256xf32> to vector<2x128xf32>
    %350 = vector.broadcast %40 : vector<1x128xf32> to vector<2x128xf32>
    %351 = arith.addf %350, %349 : vector<2x128xf32>
    %352 = arith.negf %351 : vector<2x128xf32>
    %353 = math.exp %352 : vector<2x128xf32>
    %cst_69 = arith.constant 1.000000e+00 : f32
    %354 = vector.broadcast %cst_69 : f32 to vector<2x128xf32>
    %355 = arith.addf %354, %353 : vector<2x128xf32>
    %356 = arith.divf %354, %355 : vector<2x128xf32>
    %357 = vector.extract_strided_slice %356 {offsets = [0, 0], sizes = [2, 32], strides = [1, 1]} : vector<2x128xf32> to vector<2x32xf32>
    %358 = vector.extract_strided_slice %356 {offsets = [0, 32], sizes = [2, 32], strides = [1, 1]} : vector<2x128xf32> to vector<2x32xf32>
    %359 = vector.extract_strided_slice %356 {offsets = [0, 64], sizes = [2, 32], strides = [1, 1]} : vector<2x128xf32> to vector<2x32xf32>
    %cst_70 = arith.constant 2.000000e+00 : f32
    %360 = vector.broadcast %cst_70 : f32 to vector<2x32xf32>
    %361 = arith.mulf %360, %359 : vector<2x32xf32>
    %cst_71 = arith.constant 1.000000e+00 : f32
    %362 = vector.broadcast %cst_71 : f32 to vector<2x32xf32>
    %363 = arith.subf %361, %362 : vector<2x32xf32>
    %364 = vector.extract_strided_slice %356 {offsets = [0, 96], sizes = [2, 32], strides = [1, 1]} : vector<2x128xf32> to vector<2x32xf32>
    %365 = arith.mulf %358, %321 : vector<2x32xf32>
    %366 = arith.mulf %357, %363 : vector<2x32xf32>
    %367 = arith.addf %365, %366 : vector<2x32xf32>
    %368 = math.tanh %367 : vector<2x32xf32>
    %369 = arith.mulf %364, %368 : vector<2x32xf32>
    %370 = vector.extract_strided_slice %37 {offsets = [0, 7, 0], sizes = [2, 1, 128], strides = [1, 1, 1]} : vector<2x16x128xf32> to vector<2x1x128xf32>
    %371 = vector.shape_cast %370 : vector<2x1x128xf32> to vector<2x128xf32>
    %372 = vector.extract_strided_slice %348 {offsets = [0, 0], sizes = [2, 128], strides = [1, 1]} : vector<2x256xf32> to vector<2x128xf32>
    %373 = arith.addf %371, %372 : vector<2x128xf32>
    %374 = arith.negf %373 : vector<2x128xf32>
    %375 = math.exp %374 : vector<2x128xf32>
    %cst_72 = arith.constant 1.000000e+00 : f32
    %376 = vector.broadcast %cst_72 : f32 to vector<2x128xf32>
    %377 = arith.addf %376, %375 : vector<2x128xf32>
    %378 = arith.divf %376, %377 : vector<2x128xf32>
    %379 = vector.extract_strided_slice %378 {offsets = [0, 0], sizes = [2, 32], strides = [1, 1]} : vector<2x128xf32> to vector<2x32xf32>
    %380 = vector.extract_strided_slice %378 {offsets = [0, 32], sizes = [2, 32], strides = [1, 1]} : vector<2x128xf32> to vector<2x32xf32>
    %381 = vector.extract_strided_slice %378 {offsets = [0, 64], sizes = [2, 32], strides = [1, 1]} : vector<2x128xf32> to vector<2x32xf32>
    %cst_73 = arith.constant 2.000000e+00 : f32
    %382 = vector.broadcast %cst_73 : f32 to vector<2x32xf32>
    %383 = arith.mulf %382, %381 : vector<2x32xf32>
    %cst_74 = arith.constant 1.000000e+00 : f32
    %384 = vector.broadcast %cst_74 : f32 to vector<2x32xf32>
    %385 = arith.subf %383, %384 : vector<2x32xf32>
    %386 = vector.extract_strided_slice %378 {offsets = [0, 96], sizes = [2, 32], strides = [1, 1]} : vector<2x128xf32> to vector<2x32xf32>
    %387 = arith.mulf %380, %343 : vector<2x32xf32>
    %388 = arith.mulf %379, %385 : vector<2x32xf32>
    %389 = arith.addf %387, %388 : vector<2x32xf32>
    %390 = math.tanh %389 : vector<2x32xf32>
    %391 = arith.mulf %386, %390 : vector<2x32xf32>
    %392 = tpu.concatenate %391, %369 in 1 : vector<2x32xf32>, vector<2x32xf32> -> vector<2x64xf32>
    %393 = arith.truncf %392 : vector<2x64xf32> to vector<2x64xbf16>
    %cst_75 = arith.constant dense<0.000000e+00> : vector<2x256xf32>
    %394 = tpu.matmul %393, %39, %cst_75 {dimension_numbers = #tpu.dot_dimension_numbers<[1], [0], [0], [1], [0, 0, 1, 1], [], []>} : vector<2x64xbf16>, vector<64x256xbf16>, vector<2x256xf32> -> vector<2x256xf32>
    %395 = vector.extract_strided_slice %394 {offsets = [0, 128], sizes = [2, 128], strides = [1, 1]} : vector<2x256xf32> to vector<2x128xf32>
    %396 = vector.broadcast %40 : vector<1x128xf32> to vector<2x128xf32>
    %397 = arith.addf %396, %395 : vector<2x128xf32>
    %398 = arith.negf %397 : vector<2x128xf32>
    %399 = math.exp %398 : vector<2x128xf32>
    %cst_76 = arith.constant 1.000000e+00 : f32
    %400 = vector.broadcast %cst_76 : f32 to vector<2x128xf32>
    %401 = arith.addf %400, %399 : vector<2x128xf32>
    %402 = arith.divf %400, %401 : vector<2x128xf32>
    %403 = vector.extract_strided_slice %402 {offsets = [0, 0], sizes = [2, 32], strides = [1, 1]} : vector<2x128xf32> to vector<2x32xf32>
    %404 = vector.extract_strided_slice %402 {offsets = [0, 32], sizes = [2, 32], strides = [1, 1]} : vector<2x128xf32> to vector<2x32xf32>
    %405 = vector.extract_strided_slice %402 {offsets = [0, 64], sizes = [2, 32], strides = [1, 1]} : vector<2x128xf32> to vector<2x32xf32>
    %cst_77 = arith.constant 2.000000e+00 : f32
    %406 = vector.broadcast %cst_77 : f32 to vector<2x32xf32>
    %407 = arith.mulf %406, %405 : vector<2x32xf32>
    %cst_78 = arith.constant 1.000000e+00 : f32
    %408 = vector.broadcast %cst_78 : f32 to vector<2x32xf32>
    %409 = arith.subf %407, %408 : vector<2x32xf32>
    %410 = vector.extract_strided_slice %402 {offsets = [0, 96], sizes = [2, 32], strides = [1, 1]} : vector<2x128xf32> to vector<2x32xf32>
    %411 = arith.mulf %404, %367 : vector<2x32xf32>
    %412 = arith.mulf %403, %409 : vector<2x32xf32>
    %413 = arith.addf %411, %412 : vector<2x32xf32>
    %414 = math.tanh %413 : vector<2x32xf32>
    %415 = arith.mulf %410, %414 : vector<2x32xf32>
    %416 = vector.extract_strided_slice %37 {offsets = [0, 8, 0], sizes = [2, 1, 128], strides = [1, 1, 1]} : vector<2x16x128xf32> to vector<2x1x128xf32>
    %417 = vector.shape_cast %416 : vector<2x1x128xf32> to vector<2x128xf32>
    %418 = vector.extract_strided_slice %394 {offsets = [0, 0], sizes = [2, 128], strides = [1, 1]} : vector<2x256xf32> to vector<2x128xf32>
    %419 = arith.addf %417, %418 : vector<2x128xf32>
    %420 = arith.negf %419 : vector<2x128xf32>
    %421 = math.exp %420 : vector<2x128xf32>
    %cst_79 = arith.constant 1.000000e+00 : f32
    %422 = vector.broadcast %cst_79 : f32 to vector<2x128xf32>
    %423 = arith.addf %422, %421 : vector<2x128xf32>
    %424 = arith.divf %422, %423 : vector<2x128xf32>
    %425 = vector.extract_strided_slice %424 {offsets = [0, 0], sizes = [2, 32], strides = [1, 1]} : vector<2x128xf32> to vector<2x32xf32>
    %426 = vector.extract_strided_slice %424 {offsets = [0, 32], sizes = [2, 32], strides = [1, 1]} : vector<2x128xf32> to vector<2x32xf32>
    %427 = vector.extract_strided_slice %424 {offsets = [0, 64], sizes = [2, 32], strides = [1, 1]} : vector<2x128xf32> to vector<2x32xf32>
    %cst_80 = arith.constant 2.000000e+00 : f32
    %428 = vector.broadcast %cst_80 : f32 to vector<2x32xf32>
    %429 = arith.mulf %428, %427 : vector<2x32xf32>
    %cst_81 = arith.constant 1.000000e+00 : f32
    %430 = vector.broadcast %cst_81 : f32 to vector<2x32xf32>
    %431 = arith.subf %429, %430 : vector<2x32xf32>
    %432 = vector.extract_strided_slice %424 {offsets = [0, 96], sizes = [2, 32], strides = [1, 1]} : vector<2x128xf32> to vector<2x32xf32>
    %433 = arith.mulf %426, %389 : vector<2x32xf32>
    %434 = arith.mulf %425, %431 : vector<2x32xf32>
    %435 = arith.addf %433, %434 : vector<2x32xf32>
    %436 = math.tanh %435 : vector<2x32xf32>
    %437 = arith.mulf %432, %436 : vector<2x32xf32>
    %438 = tpu.concatenate %437, %415 in 1 : vector<2x32xf32>, vector<2x32xf32> -> vector<2x64xf32>
    %439 = arith.truncf %438 : vector<2x64xf32> to vector<2x64xbf16>
    %cst_82 = arith.constant dense<0.000000e+00> : vector<2x256xf32>
    %440 = tpu.matmul %439, %39, %cst_82 {dimension_numbers = #tpu.dot_dimension_numbers<[1], [0], [0], [1], [0, 0, 1, 1], [], []>} : vector<2x64xbf16>, vector<64x256xbf16>, vector<2x256xf32> -> vector<2x256xf32>
    %441 = vector.extract_strided_slice %440 {offsets = [0, 128], sizes = [2, 128], strides = [1, 1]} : vector<2x256xf32> to vector<2x128xf32>
    %442 = vector.broadcast %40 : vector<1x128xf32> to vector<2x128xf32>
    %443 = arith.addf %442, %441 : vector<2x128xf32>
    %444 = arith.negf %443 : vector<2x128xf32>
    %445 = math.exp %444 : vector<2x128xf32>
    %cst_83 = arith.constant 1.000000e+00 : f32
    %446 = vector.broadcast %cst_83 : f32 to vector<2x128xf32>
    %447 = arith.addf %446, %445 : vector<2x128xf32>
    %448 = arith.divf %446, %447 : vector<2x128xf32>
    %449 = vector.extract_strided_slice %448 {offsets = [0, 0], sizes = [2, 32], strides = [1, 1]} : vector<2x128xf32> to vector<2x32xf32>
    %450 = vector.extract_strided_slice %448 {offsets = [0, 32], sizes = [2, 32], strides = [1, 1]} : vector<2x128xf32> to vector<2x32xf32>
    %451 = vector.extract_strided_slice %448 {offsets = [0, 64], sizes = [2, 32], strides = [1, 1]} : vector<2x128xf32> to vector<2x32xf32>
    %cst_84 = arith.constant 2.000000e+00 : f32
    %452 = vector.broadcast %cst_84 : f32 to vector<2x32xf32>
    %453 = arith.mulf %452, %451 : vector<2x32xf32>
    %cst_85 = arith.constant 1.000000e+00 : f32
    %454 = vector.broadcast %cst_85 : f32 to vector<2x32xf32>
    %455 = arith.subf %453, %454 : vector<2x32xf32>
    %456 = vector.extract_strided_slice %448 {offsets = [0, 96], sizes = [2, 32], strides = [1, 1]} : vector<2x128xf32> to vector<2x32xf32>
    %457 = arith.mulf %450, %413 : vector<2x32xf32>
    %458 = arith.mulf %449, %455 : vector<2x32xf32>
    %459 = arith.addf %457, %458 : vector<2x32xf32>
    %460 = math.tanh %459 : vector<2x32xf32>
    %461 = arith.mulf %456, %460 : vector<2x32xf32>
    %462 = vector.extract_strided_slice %37 {offsets = [0, 9, 0], sizes = [2, 1, 128], strides = [1, 1, 1]} : vector<2x16x128xf32> to vector<2x1x128xf32>
    %463 = vector.shape_cast %462 : vector<2x1x128xf32> to vector<2x128xf32>
    %464 = vector.extract_strided_slice %440 {offsets = [0, 0], sizes = [2, 128], strides = [1, 1]} : vector<2x256xf32> to vector<2x128xf32>
    %465 = arith.addf %463, %464 : vector<2x128xf32>
    %466 = arith.negf %465 : vector<2x128xf32>
    %467 = math.exp %466 : vector<2x128xf32>
    %cst_86 = arith.constant 1.000000e+00 : f32
    %468 = vector.broadcast %cst_86 : f32 to vector<2x128xf32>
    %469 = arith.addf %468, %467 : vector<2x128xf32>
    %470 = arith.divf %468, %469 : vector<2x128xf32>
    %471 = vector.extract_strided_slice %470 {offsets = [0, 0], sizes = [2, 32], strides = [1, 1]} : vector<2x128xf32> to vector<2x32xf32>
    %472 = vector.extract_strided_slice %470 {offsets = [0, 32], sizes = [2, 32], strides = [1, 1]} : vector<2x128xf32> to vector<2x32xf32>
    %473 = vector.extract_strided_slice %470 {offsets = [0, 64], sizes = [2, 32], strides = [1, 1]} : vector<2x128xf32> to vector<2x32xf32>
    %cst_87 = arith.constant 2.000000e+00 : f32
    %474 = vector.broadcast %cst_87 : f32 to vector<2x32xf32>
    %475 = arith.mulf %474, %473 : vector<2x32xf32>
    %cst_88 = arith.constant 1.000000e+00 : f32
    %476 = vector.broadcast %cst_88 : f32 to vector<2x32xf32>
    %477 = arith.subf %475, %476 : vector<2x32xf32>
    %478 = vector.extract_strided_slice %470 {offsets = [0, 96], sizes = [2, 32], strides = [1, 1]} : vector<2x128xf32> to vector<2x32xf32>
    %479 = arith.mulf %472, %435 : vector<2x32xf32>
    %480 = arith.mulf %471, %477 : vector<2x32xf32>
    %481 = arith.addf %479, %480 : vector<2x32xf32>
    %482 = math.tanh %481 : vector<2x32xf32>
    %483 = arith.mulf %478, %482 : vector<2x32xf32>
    %484 = tpu.concatenate %483, %461 in 1 : vector<2x32xf32>, vector<2x32xf32> -> vector<2x64xf32>
    %485 = arith.truncf %484 : vector<2x64xf32> to vector<2x64xbf16>
    %cst_89 = arith.constant dense<0.000000e+00> : vector<2x256xf32>
    %486 = tpu.matmul %485, %39, %cst_89 {dimension_numbers = #tpu.dot_dimension_numbers<[1], [0], [0], [1], [0, 0, 1, 1], [], []>} : vector<2x64xbf16>, vector<64x256xbf16>, vector<2x256xf32> -> vector<2x256xf32>
    %487 = vector.extract_strided_slice %486 {offsets = [0, 128], sizes = [2, 128], strides = [1, 1]} : vector<2x256xf32> to vector<2x128xf32>
    %488 = vector.broadcast %40 : vector<1x128xf32> to vector<2x128xf32>
    %489 = arith.addf %488, %487 : vector<2x128xf32>
    %490 = arith.negf %489 : vector<2x128xf32>
    %491 = math.exp %490 : vector<2x128xf32>
    %cst_90 = arith.constant 1.000000e+00 : f32
    %492 = vector.broadcast %cst_90 : f32 to vector<2x128xf32>
    %493 = arith.addf %492, %491 : vector<2x128xf32>
    %494 = arith.divf %492, %493 : vector<2x128xf32>
    %495 = vector.extract_strided_slice %494 {offsets = [0, 0], sizes = [2, 32], strides = [1, 1]} : vector<2x128xf32> to vector<2x32xf32>
    %496 = vector.extract_strided_slice %494 {offsets = [0, 32], sizes = [2, 32], strides = [1, 1]} : vector<2x128xf32> to vector<2x32xf32>
    %497 = vector.extract_strided_slice %494 {offsets = [0, 64], sizes = [2, 32], strides = [1, 1]} : vector<2x128xf32> to vector<2x32xf32>
    %cst_91 = arith.constant 2.000000e+00 : f32
    %498 = vector.broadcast %cst_91 : f32 to vector<2x32xf32>
    %499 = arith.mulf %498, %497 : vector<2x32xf32>
    %cst_92 = arith.constant 1.000000e+00 : f32
    %500 = vector.broadcast %cst_92 : f32 to vector<2x32xf32>
    %501 = arith.subf %499, %500 : vector<2x32xf32>
    %502 = vector.extract_strided_slice %494 {offsets = [0, 96], sizes = [2, 32], strides = [1, 1]} : vector<2x128xf32> to vector<2x32xf32>
    %503 = arith.mulf %496, %459 : vector<2x32xf32>
    %504 = arith.mulf %495, %501 : vector<2x32xf32>
    %505 = arith.addf %503, %504 : vector<2x32xf32>
    %506 = math.tanh %505 : vector<2x32xf32>
    %507 = arith.mulf %502, %506 : vector<2x32xf32>
    %508 = vector.extract_strided_slice %37 {offsets = [0, 10, 0], sizes = [2, 1, 128], strides = [1, 1, 1]} : vector<2x16x128xf32> to vector<2x1x128xf32>
    %509 = vector.shape_cast %508 : vector<2x1x128xf32> to vector<2x128xf32>
    %510 = vector.extract_strided_slice %486 {offsets = [0, 0], sizes = [2, 128], strides = [1, 1]} : vector<2x256xf32> to vector<2x128xf32>
    %511 = arith.addf %509, %510 : vector<2x128xf32>
    %512 = arith.negf %511 : vector<2x128xf32>
    %513 = math.exp %512 : vector<2x128xf32>
    %cst_93 = arith.constant 1.000000e+00 : f32
    %514 = vector.broadcast %cst_93 : f32 to vector<2x128xf32>
    %515 = arith.addf %514, %513 : vector<2x128xf32>
    %516 = arith.divf %514, %515 : vector<2x128xf32>
    %517 = vector.extract_strided_slice %516 {offsets = [0, 0], sizes = [2, 32], strides = [1, 1]} : vector<2x128xf32> to vector<2x32xf32>
    %518 = vector.extract_strided_slice %516 {offsets = [0, 32], sizes = [2, 32], strides = [1, 1]} : vector<2x128xf32> to vector<2x32xf32>
    %519 = vector.extract_strided_slice %516 {offsets = [0, 64], sizes = [2, 32], strides = [1, 1]} : vector<2x128xf32> to vector<2x32xf32>
    %cst_94 = arith.constant 2.000000e+00 : f32
    %520 = vector.broadcast %cst_94 : f32 to vector<2x32xf32>
    %521 = arith.mulf %520, %519 : vector<2x32xf32>
    %cst_95 = arith.constant 1.000000e+00 : f32
    %522 = vector.broadcast %cst_95 : f32 to vector<2x32xf32>
    %523 = arith.subf %521, %522 : vector<2x32xf32>
    %524 = vector.extract_strided_slice %516 {offsets = [0, 96], sizes = [2, 32], strides = [1, 1]} : vector<2x128xf32> to vector<2x32xf32>
    %525 = arith.mulf %518, %481 : vector<2x32xf32>
    %526 = arith.mulf %517, %523 : vector<2x32xf32>
    %527 = arith.addf %525, %526 : vector<2x32xf32>
    %528 = math.tanh %527 : vector<2x32xf32>
    %529 = arith.mulf %524, %528 : vector<2x32xf32>
    %530 = tpu.concatenate %529, %507 in 1 : vector<2x32xf32>, vector<2x32xf32> -> vector<2x64xf32>
    %531 = arith.truncf %530 : vector<2x64xf32> to vector<2x64xbf16>
    %cst_96 = arith.constant dense<0.000000e+00> : vector<2x256xf32>
    %532 = tpu.matmul %531, %39, %cst_96 {dimension_numbers = #tpu.dot_dimension_numbers<[1], [0], [0], [1], [0, 0, 1, 1], [], []>} : vector<2x64xbf16>, vector<64x256xbf16>, vector<2x256xf32> -> vector<2x256xf32>
    %533 = vector.extract_strided_slice %532 {offsets = [0, 128], sizes = [2, 128], strides = [1, 1]} : vector<2x256xf32> to vector<2x128xf32>
    %534 = vector.broadcast %40 : vector<1x128xf32> to vector<2x128xf32>
    %535 = arith.addf %534, %533 : vector<2x128xf32>
    %536 = arith.negf %535 : vector<2x128xf32>
    %537 = math.exp %536 : vector<2x128xf32>
    %cst_97 = arith.constant 1.000000e+00 : f32
    %538 = vector.broadcast %cst_97 : f32 to vector<2x128xf32>
    %539 = arith.addf %538, %537 : vector<2x128xf32>
    %540 = arith.divf %538, %539 : vector<2x128xf32>
    %541 = vector.extract_strided_slice %540 {offsets = [0, 0], sizes = [2, 32], strides = [1, 1]} : vector<2x128xf32> to vector<2x32xf32>
    %542 = vector.extract_strided_slice %540 {offsets = [0, 32], sizes = [2, 32], strides = [1, 1]} : vector<2x128xf32> to vector<2x32xf32>
    %543 = vector.extract_strided_slice %540 {offsets = [0, 64], sizes = [2, 32], strides = [1, 1]} : vector<2x128xf32> to vector<2x32xf32>
    %cst_98 = arith.constant 2.000000e+00 : f32
    %544 = vector.broadcast %cst_98 : f32 to vector<2x32xf32>
    %545 = arith.mulf %544, %543 : vector<2x32xf32>
    %cst_99 = arith.constant 1.000000e+00 : f32
    %546 = vector.broadcast %cst_99 : f32 to vector<2x32xf32>
    %547 = arith.subf %545, %546 : vector<2x32xf32>
    %548 = vector.extract_strided_slice %540 {offsets = [0, 96], sizes = [2, 32], strides = [1, 1]} : vector<2x128xf32> to vector<2x32xf32>
    %549 = arith.mulf %542, %505 : vector<2x32xf32>
    %550 = arith.mulf %541, %547 : vector<2x32xf32>
    %551 = arith.addf %549, %550 : vector<2x32xf32>
    %552 = math.tanh %551 : vector<2x32xf32>
    %553 = arith.mulf %548, %552 : vector<2x32xf32>
    %554 = vector.extract_strided_slice %37 {offsets = [0, 11, 0], sizes = [2, 1, 128], strides = [1, 1, 1]} : vector<2x16x128xf32> to vector<2x1x128xf32>
    %555 = vector.shape_cast %554 : vector<2x1x128xf32> to vector<2x128xf32>
    %556 = vector.extract_strided_slice %532 {offsets = [0, 0], sizes = [2, 128], strides = [1, 1]} : vector<2x256xf32> to vector<2x128xf32>
    %557 = arith.addf %555, %556 : vector<2x128xf32>
    %558 = arith.negf %557 : vector<2x128xf32>
    %559 = math.exp %558 : vector<2x128xf32>
    %cst_100 = arith.constant 1.000000e+00 : f32
    %560 = vector.broadcast %cst_100 : f32 to vector<2x128xf32>
    %561 = arith.addf %560, %559 : vector<2x128xf32>
    %562 = arith.divf %560, %561 : vector<2x128xf32>
    %563 = vector.extract_strided_slice %562 {offsets = [0, 0], sizes = [2, 32], strides = [1, 1]} : vector<2x128xf32> to vector<2x32xf32>
    %564 = vector.extract_strided_slice %562 {offsets = [0, 32], sizes = [2, 32], strides = [1, 1]} : vector<2x128xf32> to vector<2x32xf32>
    %565 = vector.extract_strided_slice %562 {offsets = [0, 64], sizes = [2, 32], strides = [1, 1]} : vector<2x128xf32> to vector<2x32xf32>
    %cst_101 = arith.constant 2.000000e+00 : f32
    %566 = vector.broadcast %cst_101 : f32 to vector<2x32xf32>
    %567 = arith.mulf %566, %565 : vector<2x32xf32>
    %cst_102 = arith.constant 1.000000e+00 : f32
    %568 = vector.broadcast %cst_102 : f32 to vector<2x32xf32>
    %569 = arith.subf %567, %568 : vector<2x32xf32>
    %570 = vector.extract_strided_slice %562 {offsets = [0, 96], sizes = [2, 32], strides = [1, 1]} : vector<2x128xf32> to vector<2x32xf32>
    %571 = arith.mulf %564, %527 : vector<2x32xf32>
    %572 = arith.mulf %563, %569 : vector<2x32xf32>
    %573 = arith.addf %571, %572 : vector<2x32xf32>
    %574 = math.tanh %573 : vector<2x32xf32>
    %575 = arith.mulf %570, %574 : vector<2x32xf32>
    %576 = tpu.concatenate %575, %553 in 1 : vector<2x32xf32>, vector<2x32xf32> -> vector<2x64xf32>
    %577 = arith.truncf %576 : vector<2x64xf32> to vector<2x64xbf16>
    %cst_103 = arith.constant dense<0.000000e+00> : vector<2x256xf32>
    %578 = tpu.matmul %577, %39, %cst_103 {dimension_numbers = #tpu.dot_dimension_numbers<[1], [0], [0], [1], [0, 0, 1, 1], [], []>} : vector<2x64xbf16>, vector<64x256xbf16>, vector<2x256xf32> -> vector<2x256xf32>
    %579 = vector.extract_strided_slice %578 {offsets = [0, 128], sizes = [2, 128], strides = [1, 1]} : vector<2x256xf32> to vector<2x128xf32>
    %580 = vector.broadcast %40 : vector<1x128xf32> to vector<2x128xf32>
    %581 = arith.addf %580, %579 : vector<2x128xf32>
    %582 = arith.negf %581 : vector<2x128xf32>
    %583 = math.exp %582 : vector<2x128xf32>
    %cst_104 = arith.constant 1.000000e+00 : f32
    %584 = vector.broadcast %cst_104 : f32 to vector<2x128xf32>
    %585 = arith.addf %584, %583 : vector<2x128xf32>
    %586 = arith.divf %584, %585 : vector<2x128xf32>
    %587 = vector.extract_strided_slice %586 {offsets = [0, 0], sizes = [2, 32], strides = [1, 1]} : vector<2x128xf32> to vector<2x32xf32>
    %588 = vector.extract_strided_slice %586 {offsets = [0, 32], sizes = [2, 32], strides = [1, 1]} : vector<2x128xf32> to vector<2x32xf32>
    %589 = vector.extract_strided_slice %586 {offsets = [0, 64], sizes = [2, 32], strides = [1, 1]} : vector<2x128xf32> to vector<2x32xf32>
    %cst_105 = arith.constant 2.000000e+00 : f32
    %590 = vector.broadcast %cst_105 : f32 to vector<2x32xf32>
    %591 = arith.mulf %590, %589 : vector<2x32xf32>
    %cst_106 = arith.constant 1.000000e+00 : f32
    %592 = vector.broadcast %cst_106 : f32 to vector<2x32xf32>
    %593 = arith.subf %591, %592 : vector<2x32xf32>
    %594 = vector.extract_strided_slice %586 {offsets = [0, 96], sizes = [2, 32], strides = [1, 1]} : vector<2x128xf32> to vector<2x32xf32>
    %595 = arith.mulf %588, %551 : vector<2x32xf32>
    %596 = arith.mulf %587, %593 : vector<2x32xf32>
    %597 = arith.addf %595, %596 : vector<2x32xf32>
    %598 = math.tanh %597 : vector<2x32xf32>
    %599 = arith.mulf %594, %598 : vector<2x32xf32>
    %600 = vector.extract_strided_slice %37 {offsets = [0, 12, 0], sizes = [2, 1, 128], strides = [1, 1, 1]} : vector<2x16x128xf32> to vector<2x1x128xf32>
    %601 = vector.shape_cast %600 : vector<2x1x128xf32> to vector<2x128xf32>
    %602 = vector.extract_strided_slice %578 {offsets = [0, 0], sizes = [2, 128], strides = [1, 1]} : vector<2x256xf32> to vector<2x128xf32>
    %603 = arith.addf %601, %602 : vector<2x128xf32>
    %604 = arith.negf %603 : vector<2x128xf32>
    %605 = math.exp %604 : vector<2x128xf32>
    %cst_107 = arith.constant 1.000000e+00 : f32
    %606 = vector.broadcast %cst_107 : f32 to vector<2x128xf32>
    %607 = arith.addf %606, %605 : vector<2x128xf32>
    %608 = arith.divf %606, %607 : vector<2x128xf32>
    %609 = vector.extract_strided_slice %608 {offsets = [0, 0], sizes = [2, 32], strides = [1, 1]} : vector<2x128xf32> to vector<2x32xf32>
    %610 = vector.extract_strided_slice %608 {offsets = [0, 32], sizes = [2, 32], strides = [1, 1]} : vector<2x128xf32> to vector<2x32xf32>
    %611 = vector.extract_strided_slice %608 {offsets = [0, 64], sizes = [2, 32], strides = [1, 1]} : vector<2x128xf32> to vector<2x32xf32>
    %cst_108 = arith.constant 2.000000e+00 : f32
    %612 = vector.broadcast %cst_108 : f32 to vector<2x32xf32>
    %613 = arith.mulf %612, %611 : vector<2x32xf32>
    %cst_109 = arith.constant 1.000000e+00 : f32
    %614 = vector.broadcast %cst_109 : f32 to vector<2x32xf32>
    %615 = arith.subf %613, %614 : vector<2x32xf32>
    %616 = vector.extract_strided_slice %608 {offsets = [0, 96], sizes = [2, 32], strides = [1, 1]} : vector<2x128xf32> to vector<2x32xf32>
    %617 = arith.mulf %610, %573 : vector<2x32xf32>
    %618 = arith.mulf %609, %615 : vector<2x32xf32>
    %619 = arith.addf %617, %618 : vector<2x32xf32>
    %620 = math.tanh %619 : vector<2x32xf32>
    %621 = arith.mulf %616, %620 : vector<2x32xf32>
    %622 = tpu.concatenate %621, %599 in 1 : vector<2x32xf32>, vector<2x32xf32> -> vector<2x64xf32>
    %623 = arith.truncf %622 : vector<2x64xf32> to vector<2x64xbf16>
    %cst_110 = arith.constant dense<0.000000e+00> : vector<2x256xf32>
    %624 = tpu.matmul %623, %39, %cst_110 {dimension_numbers = #tpu.dot_dimension_numbers<[1], [0], [0], [1], [0, 0, 1, 1], [], []>} : vector<2x64xbf16>, vector<64x256xbf16>, vector<2x256xf32> -> vector<2x256xf32>
    %625 = vector.extract_strided_slice %624 {offsets = [0, 128], sizes = [2, 128], strides = [1, 1]} : vector<2x256xf32> to vector<2x128xf32>
    %626 = vector.broadcast %40 : vector<1x128xf32> to vector<2x128xf32>
    %627 = arith.addf %626, %625 : vector<2x128xf32>
    %628 = arith.negf %627 : vector<2x128xf32>
    %629 = math.exp %628 : vector<2x128xf32>
    %cst_111 = arith.constant 1.000000e+00 : f32
    %630 = vector.broadcast %cst_111 : f32 to vector<2x128xf32>
    %631 = arith.addf %630, %629 : vector<2x128xf32>
    %632 = arith.divf %630, %631 : vector<2x128xf32>
    %633 = vector.extract_strided_slice %632 {offsets = [0, 0], sizes = [2, 32], strides = [1, 1]} : vector<2x128xf32> to vector<2x32xf32>
    %634 = vector.extract_strided_slice %632 {offsets = [0, 32], sizes = [2, 32], strides = [1, 1]} : vector<2x128xf32> to vector<2x32xf32>
    %635 = vector.extract_strided_slice %632 {offsets = [0, 64], sizes = [2, 32], strides = [1, 1]} : vector<2x128xf32> to vector<2x32xf32>
    %cst_112 = arith.constant 2.000000e+00 : f32
    %636 = vector.broadcast %cst_112 : f32 to vector<2x32xf32>
    %637 = arith.mulf %636, %635 : vector<2x32xf32>
    %cst_113 = arith.constant 1.000000e+00 : f32
    %638 = vector.broadcast %cst_113 : f32 to vector<2x32xf32>
    %639 = arith.subf %637, %638 : vector<2x32xf32>
    %640 = vector.extract_strided_slice %632 {offsets = [0, 96], sizes = [2, 32], strides = [1, 1]} : vector<2x128xf32> to vector<2x32xf32>
    %641 = arith.mulf %634, %597 : vector<2x32xf32>
    %642 = arith.mulf %633, %639 : vector<2x32xf32>
    %643 = arith.addf %641, %642 : vector<2x32xf32>
    %644 = math.tanh %643 : vector<2x32xf32>
    %645 = arith.mulf %640, %644 : vector<2x32xf32>
    %646 = vector.extract_strided_slice %37 {offsets = [0, 13, 0], sizes = [2, 1, 128], strides = [1, 1, 1]} : vector<2x16x128xf32> to vector<2x1x128xf32>
    %647 = vector.shape_cast %646 : vector<2x1x128xf32> to vector<2x128xf32>
    %648 = vector.extract_strided_slice %624 {offsets = [0, 0], sizes = [2, 128], strides = [1, 1]} : vector<2x256xf32> to vector<2x128xf32>
    %649 = arith.addf %647, %648 : vector<2x128xf32>
    %650 = arith.negf %649 : vector<2x128xf32>
    %651 = math.exp %650 : vector<2x128xf32>
    %cst_114 = arith.constant 1.000000e+00 : f32
    %652 = vector.broadcast %cst_114 : f32 to vector<2x128xf32>
    %653 = arith.addf %652, %651 : vector<2x128xf32>
    %654 = arith.divf %652, %653 : vector<2x128xf32>
    %655 = vector.extract_strided_slice %654 {offsets = [0, 0], sizes = [2, 32], strides = [1, 1]} : vector<2x128xf32> to vector<2x32xf32>
    %656 = vector.extract_strided_slice %654 {offsets = [0, 32], sizes = [2, 32], strides = [1, 1]} : vector<2x128xf32> to vector<2x32xf32>
    %657 = vector.extract_strided_slice %654 {offsets = [0, 64], sizes = [2, 32], strides = [1, 1]} : vector<2x128xf32> to vector<2x32xf32>
    %cst_115 = arith.constant 2.000000e+00 : f32
    %658 = vector.broadcast %cst_115 : f32 to vector<2x32xf32>
    %659 = arith.mulf %658, %657 : vector<2x32xf32>
    %cst_116 = arith.constant 1.000000e+00 : f32
    %660 = vector.broadcast %cst_116 : f32 to vector<2x32xf32>
    %661 = arith.subf %659, %660 : vector<2x32xf32>
    %662 = vector.extract_strided_slice %654 {offsets = [0, 96], sizes = [2, 32], strides = [1, 1]} : vector<2x128xf32> to vector<2x32xf32>
    %663 = arith.mulf %656, %619 : vector<2x32xf32>
    %664 = arith.mulf %655, %661 : vector<2x32xf32>
    %665 = arith.addf %663, %664 : vector<2x32xf32>
    %666 = math.tanh %665 : vector<2x32xf32>
    %667 = arith.mulf %662, %666 : vector<2x32xf32>
    %668 = tpu.concatenate %667, %645 in 1 : vector<2x32xf32>, vector<2x32xf32> -> vector<2x64xf32>
    %669 = arith.truncf %668 : vector<2x64xf32> to vector<2x64xbf16>
    %cst_117 = arith.constant dense<0.000000e+00> : vector<2x256xf32>
    %670 = tpu.matmul %669, %39, %cst_117 {dimension_numbers = #tpu.dot_dimension_numbers<[1], [0], [0], [1], [0, 0, 1, 1], [], []>} : vector<2x64xbf16>, vector<64x256xbf16>, vector<2x256xf32> -> vector<2x256xf32>
    %671 = vector.extract_strided_slice %670 {offsets = [0, 128], sizes = [2, 128], strides = [1, 1]} : vector<2x256xf32> to vector<2x128xf32>
    %672 = vector.broadcast %40 : vector<1x128xf32> to vector<2x128xf32>
    %673 = arith.addf %672, %671 : vector<2x128xf32>
    %674 = arith.negf %673 : vector<2x128xf32>
    %675 = math.exp %674 : vector<2x128xf32>
    %cst_118 = arith.constant 1.000000e+00 : f32
    %676 = vector.broadcast %cst_118 : f32 to vector<2x128xf32>
    %677 = arith.addf %676, %675 : vector<2x128xf32>
    %678 = arith.divf %676, %677 : vector<2x128xf32>
    %679 = vector.extract_strided_slice %678 {offsets = [0, 0], sizes = [2, 32], strides = [1, 1]} : vector<2x128xf32> to vector<2x32xf32>
    %680 = vector.extract_strided_slice %678 {offsets = [0, 32], sizes = [2, 32], strides = [1, 1]} : vector<2x128xf32> to vector<2x32xf32>
    %681 = vector.extract_strided_slice %678 {offsets = [0, 64], sizes = [2, 32], strides = [1, 1]} : vector<2x128xf32> to vector<2x32xf32>
    %cst_119 = arith.constant 2.000000e+00 : f32
    %682 = vector.broadcast %cst_119 : f32 to vector<2x32xf32>
    %683 = arith.mulf %682, %681 : vector<2x32xf32>
    %cst_120 = arith.constant 1.000000e+00 : f32
    %684 = vector.broadcast %cst_120 : f32 to vector<2x32xf32>
    %685 = arith.subf %683, %684 : vector<2x32xf32>
    %686 = vector.extract_strided_slice %678 {offsets = [0, 96], sizes = [2, 32], strides = [1, 1]} : vector<2x128xf32> to vector<2x32xf32>
    %687 = arith.mulf %680, %643 : vector<2x32xf32>
    %688 = arith.mulf %679, %685 : vector<2x32xf32>
    %689 = arith.addf %687, %688 : vector<2x32xf32>
    %690 = math.tanh %689 : vector<2x32xf32>
    %691 = arith.mulf %686, %690 : vector<2x32xf32>
    %692 = vector.extract_strided_slice %37 {offsets = [0, 14, 0], sizes = [2, 1, 128], strides = [1, 1, 1]} : vector<2x16x128xf32> to vector<2x1x128xf32>
    %693 = vector.shape_cast %692 : vector<2x1x128xf32> to vector<2x128xf32>
    %694 = vector.extract_strided_slice %670 {offsets = [0, 0], sizes = [2, 128], strides = [1, 1]} : vector<2x256xf32> to vector<2x128xf32>
    %695 = arith.addf %693, %694 : vector<2x128xf32>
    %696 = arith.negf %695 : vector<2x128xf32>
    %697 = math.exp %696 : vector<2x128xf32>
    %cst_121 = arith.constant 1.000000e+00 : f32
    %698 = vector.broadcast %cst_121 : f32 to vector<2x128xf32>
    %699 = arith.addf %698, %697 : vector<2x128xf32>
    %700 = arith.divf %698, %699 : vector<2x128xf32>
    %701 = vector.extract_strided_slice %700 {offsets = [0, 0], sizes = [2, 32], strides = [1, 1]} : vector<2x128xf32> to vector<2x32xf32>
    %702 = vector.extract_strided_slice %700 {offsets = [0, 32], sizes = [2, 32], strides = [1, 1]} : vector<2x128xf32> to vector<2x32xf32>
    %703 = vector.extract_strided_slice %700 {offsets = [0, 64], sizes = [2, 32], strides = [1, 1]} : vector<2x128xf32> to vector<2x32xf32>
    %cst_122 = arith.constant 2.000000e+00 : f32
    %704 = vector.broadcast %cst_122 : f32 to vector<2x32xf32>
    %705 = arith.mulf %704, %703 : vector<2x32xf32>
    %cst_123 = arith.constant 1.000000e+00 : f32
    %706 = vector.broadcast %cst_123 : f32 to vector<2x32xf32>
    %707 = arith.subf %705, %706 : vector<2x32xf32>
    %708 = vector.extract_strided_slice %700 {offsets = [0, 96], sizes = [2, 32], strides = [1, 1]} : vector<2x128xf32> to vector<2x32xf32>
    %709 = arith.mulf %702, %665 : vector<2x32xf32>
    %710 = arith.mulf %701, %707 : vector<2x32xf32>
    %711 = arith.addf %709, %710 : vector<2x32xf32>
    %712 = math.tanh %711 : vector<2x32xf32>
    %713 = arith.mulf %708, %712 : vector<2x32xf32>
    %714 = tpu.concatenate %713, %691 in 1 : vector<2x32xf32>, vector<2x32xf32> -> vector<2x64xf32>
    %715 = arith.truncf %714 : vector<2x64xf32> to vector<2x64xbf16>
    %cst_124 = arith.constant dense<0.000000e+00> : vector<2x256xf32>
    %716 = tpu.matmul %715, %39, %cst_124 {dimension_numbers = #tpu.dot_dimension_numbers<[1], [0], [0], [1], [0, 0, 1, 1], [], []>} : vector<2x64xbf16>, vector<64x256xbf16>, vector<2x256xf32> -> vector<2x256xf32>
    %717 = vector.extract_strided_slice %716 {offsets = [0, 128], sizes = [2, 128], strides = [1, 1]} : vector<2x256xf32> to vector<2x128xf32>
    %718 = vector.broadcast %40 : vector<1x128xf32> to vector<2x128xf32>
    %719 = arith.addf %718, %717 : vector<2x128xf32>
    %720 = arith.negf %719 : vector<2x128xf32>
    %721 = math.exp %720 : vector<2x128xf32>
    %cst_125 = arith.constant 1.000000e+00 : f32
    %722 = vector.broadcast %cst_125 : f32 to vector<2x128xf32>
    %723 = arith.addf %722, %721 : vector<2x128xf32>
    %724 = arith.divf %722, %723 : vector<2x128xf32>
    %725 = vector.extract_strided_slice %724 {offsets = [0, 0], sizes = [2, 32], strides = [1, 1]} : vector<2x128xf32> to vector<2x32xf32>
    %726 = vector.extract_strided_slice %724 {offsets = [0, 32], sizes = [2, 32], strides = [1, 1]} : vector<2x128xf32> to vector<2x32xf32>
    %727 = vector.extract_strided_slice %724 {offsets = [0, 64], sizes = [2, 32], strides = [1, 1]} : vector<2x128xf32> to vector<2x32xf32>
    %cst_126 = arith.constant 2.000000e+00 : f32
    %728 = vector.broadcast %cst_126 : f32 to vector<2x32xf32>
    %729 = arith.mulf %728, %727 : vector<2x32xf32>
    %cst_127 = arith.constant 1.000000e+00 : f32
    %730 = vector.broadcast %cst_127 : f32 to vector<2x32xf32>
    %731 = arith.subf %729, %730 : vector<2x32xf32>
    %732 = vector.extract_strided_slice %724 {offsets = [0, 96], sizes = [2, 32], strides = [1, 1]} : vector<2x128xf32> to vector<2x32xf32>
    %733 = arith.mulf %726, %689 : vector<2x32xf32>
    %734 = arith.mulf %725, %731 : vector<2x32xf32>
    %735 = arith.addf %733, %734 : vector<2x32xf32>
    %736 = math.tanh %735 : vector<2x32xf32>
    %737 = arith.mulf %732, %736 : vector<2x32xf32>
    %738 = vector.extract_strided_slice %37 {offsets = [0, 15, 0], sizes = [2, 1, 128], strides = [1, 1, 1]} : vector<2x16x128xf32> to vector<2x1x128xf32>
    %739 = vector.shape_cast %738 : vector<2x1x128xf32> to vector<2x128xf32>
    %740 = vector.extract_strided_slice %716 {offsets = [0, 0], sizes = [2, 128], strides = [1, 1]} : vector<2x256xf32> to vector<2x128xf32>
    %741 = arith.addf %739, %740 : vector<2x128xf32>
    %742 = arith.negf %741 : vector<2x128xf32>
    %743 = math.exp %742 : vector<2x128xf32>
    %cst_128 = arith.constant 1.000000e+00 : f32
    %744 = vector.broadcast %cst_128 : f32 to vector<2x128xf32>
    %745 = arith.addf %744, %743 : vector<2x128xf32>
    %746 = arith.divf %744, %745 : vector<2x128xf32>
    %747 = vector.extract_strided_slice %746 {offsets = [0, 0], sizes = [2, 32], strides = [1, 1]} : vector<2x128xf32> to vector<2x32xf32>
    %748 = vector.extract_strided_slice %746 {offsets = [0, 32], sizes = [2, 32], strides = [1, 1]} : vector<2x128xf32> to vector<2x32xf32>
    %749 = vector.extract_strided_slice %746 {offsets = [0, 64], sizes = [2, 32], strides = [1, 1]} : vector<2x128xf32> to vector<2x32xf32>
    %cst_129 = arith.constant 2.000000e+00 : f32
    %750 = vector.broadcast %cst_129 : f32 to vector<2x32xf32>
    %751 = arith.mulf %750, %749 : vector<2x32xf32>
    %cst_130 = arith.constant 1.000000e+00 : f32
    %752 = vector.broadcast %cst_130 : f32 to vector<2x32xf32>
    %753 = arith.subf %751, %752 : vector<2x32xf32>
    %754 = vector.extract_strided_slice %746 {offsets = [0, 96], sizes = [2, 32], strides = [1, 1]} : vector<2x128xf32> to vector<2x32xf32>
    %755 = arith.mulf %748, %711 : vector<2x32xf32>
    %756 = arith.mulf %747, %753 : vector<2x32xf32>
    %757 = arith.addf %755, %756 : vector<2x32xf32>
    %758 = math.tanh %757 : vector<2x32xf32>
    %759 = arith.mulf %754, %758 : vector<2x32xf32>
    %760 = tpu.concatenate %759, %737 in 1 : vector<2x32xf32>, vector<2x32xf32> -> vector<2x64xf32>
    %761 = arith.truncf %760 : vector<2x64xf32> to vector<2x64xbf16>
    %cst_131 = arith.constant dense<0.000000e+00> : vector<2x256xf32>
    %762 = tpu.matmul %761, %39, %cst_131 {dimension_numbers = #tpu.dot_dimension_numbers<[1], [0], [0], [1], [0, 0, 1, 1], [], []>} : vector<2x64xbf16>, vector<64x256xbf16>, vector<2x256xf32> -> vector<2x256xf32>
    %763 = vector.extract_strided_slice %762 {offsets = [0, 128], sizes = [2, 128], strides = [1, 1]} : vector<2x256xf32> to vector<2x128xf32>
    %764 = vector.broadcast %40 : vector<1x128xf32> to vector<2x128xf32>
    %765 = arith.addf %764, %763 : vector<2x128xf32>
    %766 = arith.negf %765 : vector<2x128xf32>
    %767 = math.exp %766 : vector<2x128xf32>
    %cst_132 = arith.constant 1.000000e+00 : f32
    %768 = vector.broadcast %cst_132 : f32 to vector<2x128xf32>
    %769 = arith.addf %768, %767 : vector<2x128xf32>
    %770 = arith.divf %768, %769 : vector<2x128xf32>
    %771 = vector.extract_strided_slice %770 {offsets = [0, 0], sizes = [2, 32], strides = [1, 1]} : vector<2x128xf32> to vector<2x32xf32>
    %772 = vector.extract_strided_slice %770 {offsets = [0, 32], sizes = [2, 32], strides = [1, 1]} : vector<2x128xf32> to vector<2x32xf32>
    %773 = vector.extract_strided_slice %770 {offsets = [0, 64], sizes = [2, 32], strides = [1, 1]} : vector<2x128xf32> to vector<2x32xf32>
    %cst_133 = arith.constant 2.000000e+00 : f32
    %774 = vector.broadcast %cst_133 : f32 to vector<2x32xf32>
    %775 = arith.mulf %774, %773 : vector<2x32xf32>
    %cst_134 = arith.constant 1.000000e+00 : f32
    %776 = vector.broadcast %cst_134 : f32 to vector<2x32xf32>
    %777 = arith.subf %775, %776 : vector<2x32xf32>
    %778 = vector.extract_strided_slice %770 {offsets = [0, 96], sizes = [2, 32], strides = [1, 1]} : vector<2x128xf32> to vector<2x32xf32>
    %779 = arith.mulf %772, %735 : vector<2x32xf32>
    %780 = arith.mulf %771, %777 : vector<2x32xf32>
    %781 = arith.addf %779, %780 : vector<2x32xf32>
    %782 = math.tanh %781 : vector<2x32xf32>
    %783 = arith.mulf %778, %782 : vector<2x32xf32>
    %784 = arith.truncf %783 : vector<2x32xf32> to vector<2x32xbf16>
    %c184 = arith.constant 184 : index
    %c0_135 = arith.constant 0 : index
    %785 = vector.load %arg1[%c184, %c0_135] : memref<224x256xf32, #tpu.memory_space<vmem>>, vector<32x16xf32>
    %786 = arith.truncf %785 : vector<32x16xf32> to vector<32x16xbf16>
    %cst_136 = arith.constant dense<0.000000e+00> : vector<2x16xf32>
    %787 = tpu.matmul %784, %786, %cst_136 {dimension_numbers = #tpu.dot_dimension_numbers<[1], [0], [0], [1], [0, 0, 1, 1], [], []>} : vector<2x32xbf16>, vector<32x16xbf16>, vector<2x16xf32> -> vector<2x16xf32>
    %c216 = arith.constant 216 : index
    %c0_137 = arith.constant 0 : index
    %788 = vector.load %arg1[%c216, %c0_137] : memref<224x256xf32, #tpu.memory_space<vmem>>, vector<1x16xf32>
    %789 = vector.broadcast %788 : vector<1x16xf32> to vector<2x16xf32>
    %790 = arith.addf %787, %789 : vector<2x16xf32>
    %791 = arith.negf %790 : vector<2x16xf32>
    %792 = math.exp %791 : vector<2x16xf32>
    %cst_138 = arith.constant 1.000000e+00 : f32
    %793 = vector.broadcast %cst_138 : f32 to vector<2x16xf32>
    %794 = arith.addf %793, %792 : vector<2x16xf32>
    %795 = arith.divf %793, %794 : vector<2x16xf32>
    %c0_139 = arith.constant 0 : index
    %c0_140 = arith.constant 0 : index
    %796 = vector.load %arg2[%c0_139, %c0_140] : memref<2x16xf32, #tpu.memory_space<vmem>>, vector<2x16xf32>
    tpu.vector_store %arg2[%c0_139, %c0_140], %795 {strides = array<i32>} : memref<2x16xf32, #tpu.memory_space<vmem>>, vector<2x16xf32>,
    return
  }
}

</mosaic_0001>

<llo_original>
// kernel: fwd.1
$region0: #{fwd.1}
  #allocation0 [shape = 'u32[]', space=smem, size = 0x4, offset = 0x4, fixed_abs, tag = 'smem constant byte address 0x4 - core index']
  #allocation1 [shape = 'u32[144,128]{1,0:T(1,128)}', space=vmem, size = 0x12000, scoped, tag = 'internal scratch']
  %s0 = inlined_call_operand.vmem [shape: f32[2,16,8], index: 0, kind: input, shape index: {}]
  %s1 = inlined_call_operand.hbm [shape: f32[224,256], index: 1, kind: input, shape index: {}]
  %s2 = inlined_call_operand.hbm [shape: f32[2,16], index: 2, kind: output, shape index: {}]
  %s3 = sld [smem:[#allocation0]]
  $region22: #{fwd.1} parent=0
    _
  %s5 = ssub.s32 1, %s3
  %s6 = scalar_select 0, %s5, %s3
  $region1: #{fwd.1} parent=0
    #allocation2 [shape = 'u8[229376]{0}', space=vmem, size = 0x38000, scoped, tag = 'input window, operand 1, single buffered']
    #allocation3 [shape = 's32[1]{0}', space=sflag, size = 0x4, scoped, tag = 'scoped memory for fwd.1']
    #allocation4 [shape = 's32[1]{0}', space=sflag, size = 0x4, scoped, tag = 'scoped memory for fwd.1']
    #allocation5 [shape = 'u8[1024]{0}', space=vmem, size = 0x400, scoped, tag = 'output window, operand 0, single buffered']
    %7 = vsyncpa [#allocation3], 0
    %8 = vsyncpa [#allocation4], 0
    // Predicated region
    $region2: #{fwd.1} parent=1 // pred_check
      _
    $region3: #{fwd.1} parent=1 // pred_check_branch
      %10 = sbr.rel (0) target = $region5
    $region4: #{fwd.1} parent=1 // pred_region
      _
    $region5: #{fwd.1} parent=1 // pred_fallthru
      _
    // Predicated region
    $region6: #{fwd.1} parent=1 // pred_check
      _
    $region7: #{fwd.1} parent=1 // pred_check_branch
      %12 = sbr.rel (0) target = $region9
    $region8: #{fwd.1} parent=1 // pred_region
      %s14 = ssub.s32 7168, 7168
      %15 = vsyncadd [#allocation3], %s14
      %s16 = sshll.u32 [#allocation2], 4
      %s17 = int_to_ptr.vmem [resolvable:$true] %s16
      %22 = dma.hbm_to_vmem [thread:$0]  %s1, 7168, %s17, [#allocation3], 256, 256, 16
    $region9: #{fwd.1} parent=1 // pred_fallthru
      _
    // Predicated region
    $region10: #{fwd.1} parent=1 // pred_check
      _
    $region11: #{fwd.1} parent=1 // pred_check_branch
      %24 = sbr.rel (0) target = $region13
    $region12: #{fwd.1} parent=1 // pred_region
      %25 = dma.done [#allocation3], 7168
    $region13: #{fwd.1} parent=1 // pred_fallthru
      _
    %v27 = vld [vmem:[#allocation2] sm:$0xff]
    %v28 = vld [vmem:[#allocation2 + $0x10] sm:$0xff]
    %v29 = vpack.c.bf16 %v28, %v27
    %v30 = vld [vmem:[%s0] sm:$0xff]
    %v31 = vld [vmem:[%s0 + $0x8] sm:$0xff]
    %v32 = vld [vmem:[%s0 + $0x10] sm:$0xff]
    %v33 = vld [vmem:[%s0 + $0x18] sm:$0xff]
    %v34 = vpack.c.bf16 %v31, %v30
    %v35 = vpack.c.bf16 %v33, %v32
    %v38 = vpack.i.b16 %v35, %v34
    %v40 = vshrl.u32 %v34, 16
    %v41 = vshrl.u32 %v35, 16
    %v42 = vpack.i.b16 %v41, %v40
    %v45 = vpack.i.b16 0, 0
    %v47 = vshrl.u32 0, 16
    %v48 = vpack.i.b16 %v47, %v47
    %v50 = vcombine.high %v38, %v45
    %v52 = vunpack.c.l.s4 1983009808
    %v53 = vunpack.c.0.s8 %v52
    %v54 = vlaneseq
    %v55 = vshrl.u32 %v54, 7
    %v56 = vsub.s32 %v53, %v55
    %v57 = vrot.slane %v38, %v56
    %v59 = vunpack.c.l.s4 1983009808
    %v60 = vunpack.c.0.s8 %v59
    %v61 = vlaneseq
    %v62 = vshrl.u32 %v61, 7
    %v63 = vsub.s32 %v60, %v62
    %v64 = vrot.slane %v50, %v63
    %v65 = vcombine.high %v57, 0
    %v67 = vunpack.c.l.s4 1934713408
    %v68 = vunpack.c.0.s8 %v67
    %v69 = vlaneseq
    %v70 = vshrl.u32 %v69, 7
    %v71 = vsub.s32 %v68, %v70
    %v72 = vrot.slane %v57, %v71
    %v74 = vunpack.c.l.s4 1934713408
    %v75 = vunpack.c.0.s8 %v74
    %v76 = vlaneseq
    %v77 = vshrl.u32 %v76, 7
    %v78 = vsub.s32 %v75, %v77
    %v79 = vrot.slane %v65, %v78
    %v80 = vcombine.high %v64, 0
    %v82 = vunpack.c.l.s4 1934713408
    %v83 = vunpack.c.0.s8 %v82
    %v84 = vlaneseq
    %v85 = vshrl.u32 %v84, 7
    %v86 = vsub.s32 %v83, %v85
    %v87 = vrot.slane %v64, %v86
    %v89 = vunpack.c.l.s4 1934713408
    %v90 = vunpack.c.0.s8 %v89
    %v91 = vlaneseq
    %v92 = vshrl.u32 %v91, 7
    %v93 = vsub.s32 %v90, %v92
    %v94 = vrot.slane %v80, %v93
    %v95 = vcombine.high %v72, 0
    %v96 = vcombine.high %v79, 0
    %v97 = vcombine.high %v87, 0
    %v98 = vcombine.high %v94, 0
    %v99 = vcombine.high %v42, %v48
    %v101 = vunpack.c.l.s4 1983009808
    %v102 = vunpack.c.0.s8 %v101
    %v103 = vlaneseq
    %v104 = vshrl.u32 %v103, 7
    %v105 = vsub.s32 %v102, %v104
    %v106 = vrot.slane %v42, %v105
    %v108 = vunpack.c.l.s4 1983009808
    %v109 = vunpack.c.0.s8 %v108
    %v110 = vlaneseq
    %v111 = vshrl.u32 %v110, 7
    %v112 = vsub.s32 %v109, %v111
    %v113 = vrot.slane %v99, %v112
    %v114 = vcombine.high %v106, 0
    %v116 = vunpack.c.l.s4 1934713408
    %v117 = vunpack.c.0.s8 %v116
    %v118 = vlaneseq
    %v119 = vshrl.u32 %v118, 7
    %v120 = vsub.s32 %v117, %v119
    %v121 = vrot.slane %v106, %v120
    %v123 = vunpack.c.l.s4 1934713408
    %v124 = vunpack.c.0.s8 %v123
    %v125 = vlaneseq
    %v126 = vshrl.u32 %v125, 7
    %v127 = vsub.s32 %v124, %v126
    %v128 = vrot.slane %v114, %v127
    %v129 = vcombine.high %v113, 0
    %v131 = vunpack.c.l.s4 1934713408
    %v132 = vunpack.c.0.s8 %v131
    %v133 = vlaneseq
    %v134 = vshrl.u32 %v133, 7
    %v135 = vsub.s32 %v132, %v134
    %v136 = vrot.slane %v113, %v135
    %v138 = vunpack.c.l.s4 1934713408
    %v139 = vunpack.c.0.s8 %v138
    %v140 = vlaneseq
    %v141 = vshrl.u32 %v140, 7
    %v142 = vsub.s32 %v139, %v141
    %v143 = vrot.slane %v129, %v142
    %v144 = vcombine.high %v121, 0
    %v145 = vcombine.high %v128, 0
    %v146 = vcombine.high %v136, 0
    %v147 = vcombine.high %v143, 0
    %v148 = vcombine.low %v72, %v79
    %v150 = vunpack.c.l.s4 1983009808
    %v151 = vunpack.c.0.s8 %v150
    %v152 = vlaneseq
    %v153 = vshrl.u32 %v152, 7
    %v154 = vsub.s32 %v151, %v153
    %v155 = vrot.slane %v148, %v154
    %v156 = vcombine.low %v95, %v96
    %v158 = vunpack.c.l.s4 1983009808
    %v159 = vunpack.c.0.s8 %v158
    %v160 = vlaneseq
    %v161 = vshrl.u32 %v160, 7
    %v162 = vsub.s32 %v159, %v161
    %v163 = vrot.slane %v156, %v162
    %v164 = vcombine.low %v87, %v94
    %v166 = vunpack.c.l.s4 1983009808
    %v167 = vunpack.c.0.s8 %v166
    %v168 = vlaneseq
    %v169 = vshrl.u32 %v168, 7
    %v170 = vsub.s32 %v167, %v169
    %v171 = vrot.slane %v164, %v170
    %v172 = vcombine.low %v97, %v98
    %v174 = vunpack.c.l.s4 1983009808
    %v175 = vunpack.c.0.s8 %v174
    %v176 = vlaneseq
    %v177 = vshrl.u32 %v176, 7
    %v178 = vsub.s32 %v175, %v177
    %v179 = vrot.slane %v172, %v178
    %v180 = vcombine.low %v155, %v163
    %v182 = vunpack.c.l.s4 1934713408
    %v183 = vunpack.c.0.s8 %v182
    %v184 = vlaneseq
    %v185 = vshrl.u32 %v184, 7
    %v186 = vsub.s32 %v183, %v185
    %v187 = vrot.slane %v180, %v186
    %v188 = vcombine.low %v171, %v179
    %v190 = vunpack.c.l.s4 1934713408
    %v191 = vunpack.c.0.s8 %v190
    %v192 = vlaneseq
    %v193 = vshrl.u32 %v192, 7
    %v194 = vsub.s32 %v191, %v193
    %v195 = vrot.slane %v188, %v194
    %v196 = vcombine.low %v187, %v195
    %v197 = vcombine.low %v121, %v128
    %v199 = vunpack.c.l.s4 1983009808
    %v200 = vunpack.c.0.s8 %v199
    %v201 = vlaneseq
    %v202 = vshrl.u32 %v201, 7
    %v203 = vsub.s32 %v200, %v202
    %v204 = vrot.slane %v197, %v203
    %v205 = vcombine.low %v144, %v145
    %v207 = vunpack.c.l.s4 1983009808
    %v208 = vunpack.c.0.s8 %v207
    %v209 = vlaneseq
    %v210 = vshrl.u32 %v209, 7
    %v211 = vsub.s32 %v208, %v210
    %v212 = vrot.slane %v205, %v211
    %v213 = vcombine.low %v136, %v143
    %v215 = vunpack.c.l.s4 1983009808
    %v216 = vunpack.c.0.s8 %v215
    %v217 = vlaneseq
    %v218 = vshrl.u32 %v217, 7
    %v219 = vsub.s32 %v216, %v218
    %v220 = vrot.slane %v213, %v219
    %v221 = vcombine.low %v146, %v147
    %v223 = vunpack.c.l.s4 1983009808
    %v224 = vunpack.c.0.s8 %v223
    %v225 = vlaneseq
    %v226 = vshrl.u32 %v225, 7
    %v227 = vsub.s32 %v224, %v226
    %v228 = vrot.slane %v221, %v227
    %v229 = vcombine.low %v204, %v212
    %v231 = vunpack.c.l.s4 1934713408
    %v232 = vunpack.c.0.s8 %v231
    %v233 = vlaneseq
    %v234 = vshrl.u32 %v233, 7
    %v235 = vsub.s32 %v232, %v234
    %v236 = vrot.slane %v229, %v235
    %v237 = vcombine.low %v220, %v228
    %v239 = vunpack.c.l.s4 1934713408
    %v240 = vunpack.c.0.s8 %v239
    %v241 = vlaneseq
    %v242 = vshrl.u32 %v241, 7
    %v243 = vsub.s32 %v240, %v242
    %v244 = vrot.slane %v237, %v243
    %v245 = vcombine.low %v236, %v244
    %v248 = vpack.i.b16 %v245, %v196
    %v249 = vshrl.u32 %v196, 16
    %v250 = vshrl.u32 %v245, 16
    %v251 = vpack.i.b16 %v250, %v249
    %252 = vrot.lane.b32.xlu0 %v251, 8
    %v253 = vpop.permute.xlu0 %252
    %vm254 = vcmask 64512
    %v257 = vsel %vm254, %v248, %v253
    %v259 = vcombine.low 0.0, 0.0
    %v261 = vunpack.c.l.s4 1983009808
    %v262 = vunpack.c.0.s8 %v261
    %v263 = vlaneseq
    %v264 = vshrl.u32 %v263, 7
    %v265 = vsub.s32 %v262, %v264
    %v266 = vrot.slane %v259, %v265
    %v267 = vcombine.low %v266, %v266
    %v269 = vunpack.c.l.s4 1934713408
    %v270 = vunpack.c.0.s8 %v269
    %v271 = vlaneseq
    %v272 = vshrl.u32 %v271, 7
    %v273 = vsub.s32 %v270, %v272
    %v274 = vrot.slane %v267, %v273
    %v275 = vcombine.low %v274, %v274
    %v276 = vcombine.high %v274, %v274
    %278 = vrot.lane.b32.xlu0 %v276, 8
    %v279 = vpop.permute.xlu0 %278
    %v281 = vsel %vm254, %v275, %v279
    %vm282 = vcmask 130048
    %v284 = vsel %vm282, %v29, 0
    %286 = vmatprep.subr.bf16.mxu0 0
    %287 = vmatpush1.bf16.msra.mxu0 0
    %288 = vmatprep.subr.bf16.mxu0 0
    %289 = vmatpush1.bf16.msra.mxu0 0
    %290 = vmatprep.subr.bf16.mxu0 0
    %291 = vmatpush1.bf16.msra.mxu0 0
    %292 = vmatprep.subr.bf16.mxu0 0
    %293 = vmatpush1.bf16.msra.mxu0 0
    %294 = vmatprep.subr.bf16.mxu0 0
    %295 = vmatpush1.bf16.msra.mxu0 0
    %296 = vmatprep.subr.bf16.mxu0 0
    %297 = vmatpush1.bf16.msra.mxu0 0
    %298 = vmatprep.subr.bf16.mxu0 0
    %299 = vmatpush1.bf16.msra.mxu0 0
    %300 = vmatprep.subr.bf16.mxu0 0
    %301 = vmatpush1.bf16.msra.mxu0 %v257
    %302 = vmatprep.subr.bf16.mxu0 0
    %303 = vmatpush2.bf16.msra.mxu0 0
    %304 = vmatprep.subr.bf16.mxu0 0
    %305 = vmatpush2.bf16.msra.mxu0 0
    %306 = vmatprep.subr.bf16.mxu0 0
    %307 = vmatpush2.bf16.msra.mxu0 0
    %308 = vmatprep.subr.bf16.mxu0 0
    %309 = vmatpush2.bf16.msra.mxu0 0
    %310 = vmatprep.subr.bf16.mxu0 0
    %311 = vmatpush2.bf16.msra.mxu0 0
    %312 = vmatprep.subr.bf16.mxu0 0
    %313 = vmatpush2.bf16.msra.mxu0 0
    %314 = vmatprep.subr.bf16.mxu0 0
    %315 = vmatpush2.bf16.msra.mxu0 0
    %316 = vmatprep.subr.bf16.mxu0 0
    %317 = vmatpush2.bf16.msra.mxu0 0
    %318 = vmatprep.mubr.bf16.mxu0 0
    %319 = vmatmul.mubr.bf16.gmra.mxu0 %v284
    %v320 = vpop.f32.mrf.mxu0
    %v321 = vadd.f32 %v281, %v320
    %v322 = vpop.f32.mrf.mxu0
    %v323 = vpop.f32.mrf.mxu0
    %v324 = vadd.f32 %v281, %v323
    %v325 = vpop.f32.mrf.mxu0
    %326 = vdwg.mxu0
    %329 = vrot.lane.b32.xlu0 %v321, 120
    %v330 = vpop.permute.xlu0 %329
    %331 = vrot.lane.b32.xlu0 %v324, 120
    %v332 = vpop.permute.xlu0 %331
    %v335 = vcombine.high %v321, 0.0
    %v337 = vunpack.c.l.s4 1983009808
    %v338 = vunpack.c.0.s8 %v337
    %v339 = vlaneseq
    %v340 = vshrl.u32 %v339, 7
    %v341 = vsub.s32 %v338, %v340
    %v342 = vrot.slane %v321, %v341
    %v344 = vunpack.c.l.s4 1983009808
    %v345 = vunpack.c.0.s8 %v344
    %v346 = vlaneseq
    %v347 = vshrl.u32 %v346, 7
    %v348 = vsub.s32 %v345, %v347
    %v349 = vrot.slane %v335, %v348
    %v350 = vcombine.high %v330, 0.0
    %v352 = vunpack.c.l.s4 1983009808
    %v353 = vunpack.c.0.s8 %v352
    %v354 = vlaneseq
    %v355 = vshrl.u32 %v354, 7
    %v356 = vsub.s32 %v353, %v355
    %v357 = vrot.slane %v330, %v356
    %v359 = vunpack.c.l.s4 1983009808
    %v360 = vunpack.c.0.s8 %v359
    %v361 = vlaneseq
    %v362 = vshrl.u32 %v361, 7
    %v363 = vsub.s32 %v360, %v362
    %v364 = vrot.slane %v350, %v363
    %v365 = vcombine.low %v342, %v357
    %v366 = vcombine.high %v342, %v357
    %v368 = vunpack.c.l.s4 1934713408
    %v369 = vunpack.c.0.s8 %v368
    %v370 = vlaneseq
    %v371 = vshrl.u32 %v370, 7
    %v372 = vsub.s32 %v369, %v371
    %v373 = vrot.slane %v365, %v372
    %v375 = vunpack.c.l.s4 1934713408
    %v376 = vunpack.c.0.s8 %v375
    %v377 = vlaneseq
    %v378 = vshrl.u32 %v377, 7
    %v379 = vsub.s32 %v376, %v378
    %v380 = vrot.slane %v366, %v379
    %v381 = vcombine.low %v349, %v364
    %v382 = vcombine.high %v349, %v364
    %v384 = vunpack.c.l.s4 1934713408
    %v385 = vunpack.c.0.s8 %v384
    %v386 = vlaneseq
    %v387 = vshrl.u32 %v386, 7
    %v388 = vsub.s32 %v385, %v387
    %v389 = vrot.slane %v381, %v388
    %v391 = vunpack.c.l.s4 1934713408
    %v392 = vunpack.c.0.s8 %v391
    %v393 = vlaneseq
    %v394 = vshrl.u32 %v393, 7
    %v395 = vsub.s32 %v392, %v394
    %v396 = vrot.slane %v382, %v395
    %v397 = vcombine.high %v373, 0.0
    %v398 = vcombine.high %v380, 0.0
    %v399 = vcombine.high %v389, 0.0
    %v400 = vcombine.high %v396, 0.0
    %v401 = vcombine.high %v324, 0.0
    %v403 = vunpack.c.l.s4 1983009808
    %v404 = vunpack.c.0.s8 %v403
    %v405 = vlaneseq
    %v406 = vshrl.u32 %v405, 7
    %v407 = vsub.s32 %v404, %v406
    %v408 = vrot.slane %v324, %v407
    %v410 = vunpack.c.l.s4 1983009808
    %v411 = vunpack.c.0.s8 %v410
    %v412 = vlaneseq
    %v413 = vshrl.u32 %v412, 7
    %v414 = vsub.s32 %v411, %v413
    %v415 = vrot.slane %v401, %v414
    %v416 = vcombine.high %v332, 0.0
    %v418 = vunpack.c.l.s4 1983009808
    %v419 = vunpack.c.0.s8 %v418
    %v420 = vlaneseq
    %v421 = vshrl.u32 %v420, 7
    %v422 = vsub.s32 %v419, %v421
    %v423 = vrot.slane %v332, %v422
    %v425 = vunpack.c.l.s4 1983009808
    %v426 = vunpack.c.0.s8 %v425
    %v427 = vlaneseq
    %v428 = vshrl.u32 %v427, 7
    %v429 = vsub.s32 %v426, %v428
    %v430 = vrot.slane %v416, %v429
    %v431 = vcombine.low %v408, %v423
    %v432 = vcombine.high %v408, %v423
    %v434 = vunpack.c.l.s4 1934713408
    %v435 = vunpack.c.0.s8 %v434
    %v436 = vlaneseq
    %v437 = vshrl.u32 %v436, 7
    %v438 = vsub.s32 %v435, %v437
    %v439 = vrot.slane %v431, %v438
    %v441 = vunpack.c.l.s4 1934713408
    %v442 = vunpack.c.0.s8 %v441
    %v443 = vlaneseq
    %v444 = vshrl.u32 %v443, 7
    %v445 = vsub.s32 %v442, %v444
    %v446 = vrot.slane %v432, %v445
    %v447 = vcombine.low %v415, %v430
    %v448 = vcombine.high %v415, %v430
    %v450 = vunpack.c.l.s4 1934713408
    %v451 = vunpack.c.0.s8 %v450
    %v452 = vlaneseq
    %v453 = vshrl.u32 %v452, 7
    %v454 = vsub.s32 %v451, %v453
    %v455 = vrot.slane %v447, %v454
    %v457 = vunpack.c.l.s4 1934713408
    %v458 = vunpack.c.0.s8 %v457
    %v459 = vlaneseq
    %v460 = vshrl.u32 %v459, 7
    %v461 = vsub.s32 %v458, %v460
    %v462 = vrot.slane %v448, %v461
    %v463 = vcombine.high %v439, 0.0
    %v464 = vcombine.high %v446, 0.0
    %v465 = vcombine.high %v455, 0.0
    %v466 = vcombine.high %v462, 0.0
    %v467 = vpack.c.bf16 %v373, %v373
    %v468 = vpack.c.bf16 %v397, %v397
    %v469 = vpack.c.bf16 %v380, %v380
    %v470 = vpack.c.bf16 %v398, %v398
    %v471 = vpack.c.bf16 %v389, %v389
    %v472 = vpack.c.bf16 %v399, %v399
    %v473 = vpack.c.bf16 %v396, %v396
    %v474 = vpack.c.bf16 %v400, %v400
    %v475 = vpack.c.bf16 %v439, %v439
    %v476 = vpack.c.bf16 %v463, %v463
    %v477 = vpack.c.bf16 %v446, %v446
    %v478 = vpack.c.bf16 %v464, %v464
    %v479 = vpack.c.bf16 %v455, %v455
    %v480 = vpack.c.bf16 %v465, %v465
    %v481 = vpack.c.bf16 %v462, %v462
    %v482 = vpack.c.bf16 %v466, %v466
    %v483 = vld [vmem:[#allocation2 + $0x20] sm:$0xff]
    %v484 = vpack.c.bf16 %v483, %v483
    %v485 = vld [vmem:[#allocation2 + $0x30] sm:$0xff]
    %v486 = vld [vmem:[#allocation2 + $0x40] sm:$0xff]
    %v489 = vcombine.high %v485, %v485
    %v491 = vunpack.c.l.s4 1966171168
    %v492 = vunpack.c.0.s8 %v491
    %v493 = vlaneseq
    %v494 = vshrl.u32 %v493, 7
    %v495 = vsub.s32 %v492, %v494
    %v496 = vrot.slane %v485, %v495
    %v498 = vunpack.c.l.s4 1966171168
    %v499 = vunpack.c.0.s8 %v498
    %v500 = vlaneseq
    %v501 = vshrl.u32 %v500, 7
    %v502 = vsub.s32 %v499, %v501
    %v503 = vrot.slane %v489, %v502
    %v504 = vcombine.high %v496, %v496
    %v505 = vcombine.high %v503, %v503
    %v507 = vunpack.c.l.s4 1966171168
    %v508 = vunpack.c.0.s8 %v507
    %v509 = vlaneseq
    %v510 = vshrl.u32 %v509, 7
    %v511 = vsub.s32 %v508, %v510
    %v512 = vrot.slane %v496, %v511
    %v514 = vunpack.c.l.s4 1966171168
    %v515 = vunpack.c.0.s8 %v514
    %v516 = vlaneseq
    %v517 = vshrl.u32 %v516, 7
    %v518 = vsub.s32 %v515, %v517
    %v519 = vrot.slane %v503, %v518
    %v521 = vunpack.c.l.s4 1966171168
    %v522 = vunpack.c.0.s8 %v521
    %v523 = vlaneseq
    %v524 = vshrl.u32 %v523, 7
    %v525 = vsub.s32 %v522, %v524
    %v526 = vrot.slane %v504, %v525
    %v528 = vunpack.c.l.s4 1966171168
    %v529 = vunpack.c.0.s8 %v528
    %v530 = vlaneseq
    %v531 = vshrl.u32 %v530, 7
    %v532 = vsub.s32 %v529, %v531
    %v533 = vrot.slane %v505, %v532
    %v534 = vcombine.high %v512, %v512
    %v535 = vcombine.high %v519, %v519
    %v536 = vcombine.high %v526, %v526
    %v537 = vcombine.high %v533, %v533
    %v538 = vcombine.high %v486, %v486
    %v540 = vunpack.c.l.s4 1966171168
    %v541 = vunpack.c.0.s8 %v540
    %v542 = vlaneseq
    %v543 = vshrl.u32 %v542, 7
    %v544 = vsub.s32 %v541, %v543
    %v545 = vrot.slane %v486, %v544
    %v547 = vunpack.c.l.s4 1966171168
    %v548 = vunpack.c.0.s8 %v547
    %v549 = vlaneseq
    %v550 = vshrl.u32 %v549, 7
    %v551 = vsub.s32 %v548, %v550
    %v552 = vrot.slane %v538, %v551
    %v553 = vcombine.high %v545, %v545
    %v554 = vcombine.high %v552, %v552
    %v556 = vunpack.c.l.s4 1966171168
    %v557 = vunpack.c.0.s8 %v556
    %v558 = vlaneseq
    %v559 = vshrl.u32 %v558, 7
    %v560 = vsub.s32 %v557, %v559
    %v561 = vrot.slane %v545, %v560
    %v563 = vunpack.c.l.s4 1966171168
    %v564 = vunpack.c.0.s8 %v563
    %v565 = vlaneseq
    %v566 = vshrl.u32 %v565, 7
    %v567 = vsub.s32 %v564, %v566
    %v568 = vrot.slane %v552, %v567
    %v570 = vunpack.c.l.s4 1966171168
    %v571 = vunpack.c.0.s8 %v570
    %v572 = vlaneseq
    %v573 = vshrl.u32 %v572, 7
    %v574 = vsub.s32 %v571, %v573
    %v575 = vrot.slane %v553, %v574
    %v577 = vunpack.c.l.s4 1966171168
    %v578 = vunpack.c.0.s8 %v577
    %v579 = vlaneseq
    %v580 = vshrl.u32 %v579, 7
    %v581 = vsub.s32 %v578, %v580
    %v582 = vrot.slane %v554, %v581
    %v583 = vcombine.high %v561, %v561
    %v584 = vcombine.high %v568, %v568
    %v585 = vcombine.high %v575, %v575
    %v586 = vcombine.high %v582, %v582
    %v587 = vlaneseq
    %v588 = vshrl.u32 %v587, 7
    %v589 = vsub.s32 0, %v588
    %v590 = vrot.slane %v512, %v589
    %v591 = vlaneseq
    %v592 = vshrl.u32 %v591, 7
    %v593 = vsub.s32 0, %v592
    %v594 = vrot.slane %v526, %v593
    %v595 = vlaneseq
    %v596 = vshrl.u32 %v595, 7
    %v597 = vsub.s32 0, %v596
    %v598 = vrot.slane %v534, %v597
    %v599 = vlaneseq
    %v600 = vshrl.u32 %v599, 7
    %v601 = vsub.s32 0, %v600
    %v602 = vrot.slane %v536, %v601
    %v603 = vlaneseq
    %v604 = vshrl.u32 %v603, 7
    %v605 = vsub.s32 0, %v604
    %v606 = vrot.slane %v519, %v605
    %v607 = vlaneseq
    %v608 = vshrl.u32 %v607, 7
    %v609 = vsub.s32 0, %v608
    %v610 = vrot.slane %v533, %v609
    %v611 = vlaneseq
    %v612 = vshrl.u32 %v611, 7
    %v613 = vsub.s32 0, %v612
    %v614 = vrot.slane %v535, %v613
    %v615 = vlaneseq
    %v616 = vshrl.u32 %v615, 7
    %v617 = vsub.s32 0, %v616
    %v618 = vrot.slane %v537, %v617
    %v619 = vlaneseq
    %v620 = vshrl.u32 %v619, 7
    %v621 = vsub.s32 0, %v620
    %v622 = vrot.slane %v561, %v621
    %v623 = vlaneseq
    %v624 = vshrl.u32 %v623, 7
    %v625 = vsub.s32 0, %v624
    %v626 = vrot.slane %v575, %v625
    %v627 = vlaneseq
    %v628 = vshrl.u32 %v627, 7
    %v629 = vsub.s32 0, %v628
    %v630 = vrot.slane %v583, %v629
    %v631 = vlaneseq
    %v632 = vshrl.u32 %v631, 7
    %v633 = vsub.s32 0, %v632
    %v634 = vrot.slane %v585, %v633
    %v635 = vlaneseq
    %v636 = vshrl.u32 %v635, 7
    %v637 = vsub.s32 0, %v636
    %v638 = vrot.slane %v568, %v637
    %v639 = vlaneseq
    %v640 = vshrl.u32 %v639, 7
    %v641 = vsub.s32 0, %v640
    %v642 = vrot.slane %v582, %v641
    %v643 = vlaneseq
    %v644 = vshrl.u32 %v643, 7
    %v645 = vsub.s32 0, %v644
    %v646 = vrot.slane %v584, %v645
    %v647 = vlaneseq
    %v648 = vshrl.u32 %v647, 7
    %v649 = vsub.s32 0, %v648
    %v650 = vrot.slane %v586, %v649
    %651 = vset.pattern.permute.xlu0 0
    %652 = vperm.xlu0 %651, %v590
    %v653 = vpop.permute.xlu0 %652
    %654 = vset.pattern.permute.xlu0 0
    %655 = vperm.xlu0 %654, %v594
    %v656 = vpop.permute.xlu0 %655
    %657 = vset.pattern.permute.xlu0 0
    %658 = vperm.xlu0 %657, %v598
    %v659 = vpop.permute.xlu0 %658
    %660 = vset.pattern.permute.xlu0 0
    %661 = vperm.xlu0 %660, %v602
    %v662 = vpop.permute.xlu0 %661
    %663 = vset.pattern.permute.xlu0 0
    %664 = vperm.xlu0 %663, %v606
    %v665 = vpop.permute.xlu0 %664
    %666 = vset.pattern.permute.xlu0 0
    %667 = vperm.xlu0 %666, %v610
    %v668 = vpop.permute.xlu0 %667
    %669 = vset.pattern.permute.xlu0 0
    %670 = vperm.xlu0 %669, %v614
    %v671 = vpop.permute.xlu0 %670
    %672 = vset.pattern.permute.xlu0 0
    %673 = vperm.xlu0 %672, %v618
    %v674 = vpop.permute.xlu0 %673
    %675 = vset.pattern.permute.xlu0 0
    %676 = vperm.xlu0 %675, %v622
    %v677 = vpop.permute.xlu0 %676
    %678 = vset.pattern.permute.xlu0 0
    %679 = vperm.xlu0 %678, %v626
    %v680 = vpop.permute.xlu0 %679
    %681 = vset.pattern.permute.xlu0 0
    %682 = vperm.xlu0 %681, %v630
    %v683 = vpop.permute.xlu0 %682
    %684 = vset.pattern.permute.xlu0 0
    %685 = vperm.xlu0 %684, %v634
    %v686 = vpop.permute.xlu0 %685
    %687 = vset.pattern.permute.xlu0 0
    %688 = vperm.xlu0 %687, %v638
    %v689 = vpop.permute.xlu0 %688
    %690 = vset.pattern.permute.xlu0 0
    %691 = vperm.xlu0 %690, %v642
    %v692 = vpop.permute.xlu0 %691
    %693 = vset.pattern.permute.xlu0 0
    %694 = vperm.xlu0 %693, %v646
    %v695 = vpop.permute.xlu0 %694
    %696 = vset.pattern.permute.xlu0 0
    %697 = vperm.xlu0 %696, %v650
    %v698 = vpop.permute.xlu0 %697
    %v715 = vcombine.low %v467, %v468
    %v716 = vcombine.low %v469, %v470
    %v717 = vcombine.low %v471, %v472
    %v718 = vcombine.low %v473, %v474
    %v720 = vunpack.c.l.s4 1966171168
    %v721 = vunpack.c.0.s8 %v720
    %v722 = vlaneseq
    %v723 = vshrl.u32 %v722, 7
    %v724 = vsub.s32 %v721, %v723
    %v725 = vrot.slane %v715, %v724
    %v727 = vunpack.c.l.s4 1966171168
    %v728 = vunpack.c.0.s8 %v727
    %v729 = vlaneseq
    %v730 = vshrl.u32 %v729, 7
    %v731 = vsub.s32 %v728, %v730
    %v732 = vrot.slane %v716, %v731
    %v734 = vunpack.c.l.s4 1966171168
    %v735 = vunpack.c.0.s8 %v734
    %v736 = vlaneseq
    %v737 = vshrl.u32 %v736, 7
    %v738 = vsub.s32 %v735, %v737
    %v739 = vrot.slane %v717, %v738
    %v741 = vunpack.c.l.s4 1966171168
    %v742 = vunpack.c.0.s8 %v741
    %v743 = vlaneseq
    %v744 = vshrl.u32 %v743, 7
    %v745 = vsub.s32 %v742, %v744
    %v746 = vrot.slane %v718, %v745
    %v747 = vcombine.low %v725, %v732
    %v748 = vcombine.low %v739, %v746
    %v750 = vunpack.c.l.s4 1966171168
    %v751 = vunpack.c.0.s8 %v750
    %v752 = vlaneseq
    %v753 = vshrl.u32 %v752, 7
    %v754 = vsub.s32 %v751, %v753
    %v755 = vrot.slane %v747, %v754
    %v757 = vunpack.c.l.s4 1966171168
    %v758 = vunpack.c.0.s8 %v757
    %v759 = vlaneseq
    %v760 = vshrl.u32 %v759, 7
    %v761 = vsub.s32 %v758, %v760
    %v762 = vrot.slane %v748, %v761
    %v763 = vcombine.low %v755, %v762
    %v764 = vcombine.low %v475, %v476
    %v765 = vcombine.low %v477, %v478
    %v766 = vcombine.low %v479, %v480
    %v767 = vcombine.low %v481, %v482
    %v769 = vunpack.c.l.s4 1966171168
    %v770 = vunpack.c.0.s8 %v769
    %v771 = vlaneseq
    %v772 = vshrl.u32 %v771, 7
    %v773 = vsub.s32 %v770, %v772
    %v774 = vrot.slane %v764, %v773
    %v776 = vunpack.c.l.s4 1966171168
    %v777 = vunpack.c.0.s8 %v776
    %v778 = vlaneseq
    %v779 = vshrl.u32 %v778, 7
    %v780 = vsub.s32 %v777, %v779
    %v781 = vrot.slane %v765, %v780
    %v783 = vunpack.c.l.s4 1966171168
    %v784 = vunpack.c.0.s8 %v783
    %v785 = vlaneseq
    %v786 = vshrl.u32 %v785, 7
    %v787 = vsub.s32 %v784, %v786
    %v788 = vrot.slane %v766, %v787
    %v790 = vunpack.c.l.s4 1966171168
    %v791 = vunpack.c.0.s8 %v790
    %v792 = vlaneseq
    %v793 = vshrl.u32 %v792, 7
    %v794 = vsub.s32 %v791, %v793
    %v795 = vrot.slane %v767, %v794
    %v796 = vcombine.low %v774, %v781
    %v797 = vcombine.low %v788, %v795
    %v799 = vunpack.c.l.s4 1966171168
    %v800 = vunpack.c.0.s8 %v799
    %v801 = vlaneseq
    %v802 = vshrl.u32 %v801, 7
    %v803 = vsub.s32 %v800, %v802
    %v804 = vrot.slane %v796, %v803
    %v806 = vunpack.c.l.s4 1966171168
    %v807 = vunpack.c.0.s8 %v806
    %v808 = vlaneseq
    %v809 = vshrl.u32 %v808, 7
    %v810 = vsub.s32 %v807, %v809
    %v811 = vrot.slane %v797, %v810
    %v812 = vcombine.low %v804, %v811
    %v813 = vcombine.low %v653, %v656
    %v814 = vcombine.low %v659, %v662
    %v816 = vunpack.c.l.s4 1983009808
    %v817 = vunpack.c.0.s8 %v816
    %v818 = vlaneseq
    %v819 = vshrl.u32 %v818, 7
    %v820 = vsub.s32 %v817, %v819
    %v821 = vrot.slane %v813, %v820
    %v823 = vunpack.c.l.s4 1983009808
    %v824 = vunpack.c.0.s8 %v823
    %v825 = vlaneseq
    %v826 = vshrl.u32 %v825, 7
    %v827 = vsub.s32 %v824, %v826
    %v828 = vrot.slane %v814, %v827
    %v829 = vcombine.low %v821, %v828
    %v830 = vcombine.low %v665, %v668
    %v831 = vcombine.low %v671, %v674
    %v833 = vunpack.c.l.s4 1983009808
    %v834 = vunpack.c.0.s8 %v833
    %v835 = vlaneseq
    %v836 = vshrl.u32 %v835, 7
    %v837 = vsub.s32 %v834, %v836
    %v838 = vrot.slane %v830, %v837
    %v840 = vunpack.c.l.s4 1983009808
    %v841 = vunpack.c.0.s8 %v840
    %v842 = vlaneseq
    %v843 = vshrl.u32 %v842, 7
    %v844 = vsub.s32 %v841, %v843
    %v845 = vrot.slane %v831, %v844
    %v846 = vcombine.low %v838, %v845
    %v847 = vcombine.low %v677, %v680
    %v848 = vcombine.low %v683, %v686
    %v850 = vunpack.c.l.s4 1983009808
    %v851 = vunpack.c.0.s8 %v850
    %v852 = vlaneseq
    %v853 = vshrl.u32 %v852, 7
    %v854 = vsub.s32 %v851, %v853
    %v855 = vrot.slane %v847, %v854
    %v857 = vunpack.c.l.s4 1983009808
    %v858 = vunpack.c.0.s8 %v857
    %v859 = vlaneseq
    %v860 = vshrl.u32 %v859, 7
    %v861 = vsub.s32 %v858, %v860
    %v862 = vrot.slane %v848, %v861
    %v863 = vcombine.low %v855, %v862
    %v864 = vcombine.low %v689, %v692
    %v865 = vcombine.low %v695, %v698
    %v867 = vunpack.c.l.s4 1983009808
    %v868 = vunpack.c.0.s8 %v867
    %v869 = vlaneseq
    %v870 = vshrl.u32 %v869, 7
    %v871 = vsub.s32 %v868, %v870
    %v872 = vrot.slane %v864, %v871
    %v874 = vunpack.c.l.s4 1983009808
    %v875 = vunpack.c.0.s8 %v874
    %v876 = vlaneseq
    %v877 = vshrl.u32 %v876, 7
    %v878 = vsub.s32 %v875, %v877
    %v879 = vrot.slane %v865, %v878
    %v880 = vcombine.low %v872, %v879
    %v886 = vsel %vm254, %v763, 0
    %v889 = vsel %vm254, %v812, 0
    %vm891 = vcmask 1043456
    %v893 = vsel %vm891, %v484, 0
    %895 = vmatprep.subr.bf16.mxu0 0
    %896 = vmatpush1.bf16.msra.mxu0 0
    %897 = vmatprep.subr.bf16.mxu0 0
    %898 = vmatpush1.bf16.msra.mxu0 0
    %899 = vmatprep.subr.bf16.mxu0 0
    %900 = vmatpush1.bf16.msra.mxu0 0
    %901 = vmatprep.subr.bf16.mxu0 0
    %902 = vmatpush1.bf16.msra.mxu0 0
    %903 = vmatprep.subr.bf16.mxu0 0
    %904 = vmatpush1.bf16.msra.mxu0 0
    %905 = vmatprep.subr.bf16.mxu0 0
    %906 = vmatpush1.bf16.msra.mxu0 0
    %907 = vmatprep.subr.bf16.mxu0 0
    %908 = vmatpush1.bf16.msra.mxu0 0
    %909 = vmatprep.subr.bf16.mxu0 0
    %910 = vmatpush1.bf16.msra.mxu0 %v893
    %911 = vmatprep.subr.bf16.mxu0 0
    %912 = vmatpush2.bf16.msra.mxu0 0
    %913 = vmatprep.subr.bf16.mxu0 0
    %914 = vmatpush2.bf16.msra.mxu0 0
    %915 = vmatprep.subr.bf16.mxu0 0
    %916 = vmatpush2.bf16.msra.mxu0 0
    %917 = vmatprep.subr.bf16.mxu0 0
    %918 = vmatpush2.bf16.msra.mxu0 0
    %919 = vmatprep.subr.bf16.mxu0 0
    %920 = vmatpush2.bf16.msra.mxu0 0
    %921 = vmatprep.subr.bf16.mxu0 0
    %922 = vmatpush2.bf16.msra.mxu0 0
    %923 = vmatprep.subr.bf16.mxu0 0
    %924 = vmatpush2.bf16.msra.mxu0 0
    %925 = vmatprep.subr.bf16.mxu0 0
    %926 = vmatpush2.bf16.msra.mxu0 0
    %927 = vmatprep.mubr.bf16.mxu0 0
    %928 = vmatmul.mubr.bf16.gmra.mxu0 %v886
    %v929 = vpop.f32.mrf.mxu0
    %v930 = vadd.f32 %v829, %v929
    %v931 = vpop.f32.mrf.mxu0
    %v932 = vpop.f32.mrf.mxu0
    %v933 = vadd.f32 %v846, %v932
    %v934 = vpop.f32.mrf.mxu0
    %935 = vmatprep.mubr.bf16.mxu0 0
    %936 = vmatmul.mubr.bf16.gmra.mxu0 %v889
    %v937 = vpop.f32.mrf.mxu0
    %v938 = vadd.f32 %v863, %v937
    %v939 = vpop.f32.mrf.mxu0
    %v940 = vpop.f32.mrf.mxu0
    %v941 = vadd.f32 %v880, %v940
    %v942 = vpop.f32.mrf.mxu0
    %943 = vdwg.mxu0
    %v948 = vcombine.high %v930, %v930
    %v950 = vunpack.c.l.s4 1983009808
    %v951 = vunpack.c.0.s8 %v950
    %v952 = vlaneseq
    %v953 = vshrl.u32 %v952, 7
    %v954 = vsub.s32 %v951, %v953
    %v955 = vrot.slane %v930, %v954
    %v957 = vunpack.c.l.s4 1983009808
    %v958 = vunpack.c.0.s8 %v957
    %v959 = vlaneseq
    %v960 = vshrl.u32 %v959, 7
    %v961 = vsub.s32 %v958, %v960
    %v962 = vrot.slane %v948, %v961
    %v963 = vcombine.high %v955, %v955
    %v964 = vcombine.high %v962, %v962
    %v965 = vcombine.high %v933, %v933
    %v967 = vunpack.c.l.s4 1983009808
    %v968 = vunpack.c.0.s8 %v967
    %v969 = vlaneseq
    %v970 = vshrl.u32 %v969, 7
    %v971 = vsub.s32 %v968, %v970
    %v972 = vrot.slane %v933, %v971
    %v974 = vunpack.c.l.s4 1983009808
    %v975 = vunpack.c.0.s8 %v974
    %v976 = vlaneseq
    %v977 = vshrl.u32 %v976, 7
    %v978 = vsub.s32 %v975, %v977
    %v979 = vrot.slane %v965, %v978
    %v980 = vcombine.high %v972, %v972
    %v981 = vcombine.high %v979, %v979
    %v982 = vcombine.high %v938, %v938
    %v984 = vunpack.c.l.s4 1983009808
    %v985 = vunpack.c.0.s8 %v984
    %v986 = vlaneseq
    %v987 = vshrl.u32 %v986, 7
    %v988 = vsub.s32 %v985, %v987
    %v989 = vrot.slane %v938, %v988
    %v991 = vunpack.c.l.s4 1983009808
    %v992 = vunpack.c.0.s8 %v991
    %v993 = vlaneseq
    %v994 = vshrl.u32 %v993, 7
    %v995 = vsub.s32 %v992, %v994
    %v996 = vrot.slane %v982, %v995
    %v997 = vcombine.high %v989, %v989
    %v998 = vcombine.high %v996, %v996
    %v999 = vcombine.high %v941, %v941
    %v1001 = vunpack.c.l.s4 1983009808
    %v1002 = vunpack.c.0.s8 %v1001
    %v1003 = vlaneseq
    %v1004 = vshrl.u32 %v1003, 7
    %v1005 = vsub.s32 %v1002, %v1004
    %v1006 = vrot.slane %v941, %v1005
    %v1008 = vunpack.c.l.s4 1983009808
    %v1009 = vunpack.c.0.s8 %v1008
    %v1010 = vlaneseq
    %v1011 = vshrl.u32 %v1010, 7
    %v1012 = vsub.s32 %v1009, %v1011
    %v1013 = vrot.slane %v999, %v1012
    %v1014 = vcombine.high %v1006, %v1006
    %v1015 = vcombine.high %v1013, %v1013
    %v1032 = vmax.f32 %v955, 0.0
    %v1033 = vmax.f32 %v963, 0.0
    %v1034 = vmax.f32 %v962, 0.0
    %v1035 = vmax.f32 %v964, 0.0
    %v1036 = vmax.f32 %v972, 0.0
    %v1037 = vmax.f32 %v980, 0.0
    %v1038 = vmax.f32 %v979, 0.0
    %v1039 = vmax.f32 %v981, 0.0
    %v1040 = vmax.f32 %v989, 0.0
    %v1041 = vmax.f32 %v997, 0.0
    %v1042 = vmax.f32 %v996, 0.0
    %v1043 = vmax.f32 %v998, 0.0
    %v1044 = vmax.f32 %v1006, 0.0
    %v1045 = vmax.f32 %v1014, 0.0
    %v1046 = vmax.f32 %v1013, 0.0
    %v1047 = vmax.f32 %v1015, 0.0
    %v1048 = vcombine.low %v1032, %v1033
    %v1050 = vunpack.c.l.s4 1934713408
    %v1051 = vunpack.c.0.s8 %v1050
    %v1052 = vlaneseq
    %v1053 = vshrl.u32 %v1052, 7
    %v1054 = vsub.s32 %v1051, %v1053
    %v1055 = vrot.slane %v1048, %v1054
    %v1056 = vcombine.high %v1055, 0.0
    %v1057 = vcombine.low %v1034, %v1035
    %v1059 = vunpack.c.l.s4 1934713408
    %v1060 = vunpack.c.0.s8 %v1059
    %v1061 = vlaneseq
    %v1062 = vshrl.u32 %v1061, 7
    %v1063 = vsub.s32 %v1060, %v1062
    %v1064 = vrot.slane %v1057, %v1063
    %v1065 = vcombine.high %v1064, 0.0
    %v1066 = vcombine.low %v1036, %v1037
    %v1068 = vunpack.c.l.s4 1934713408
    %v1069 = vunpack.c.0.s8 %v1068
    %v1070 = vlaneseq
    %v1071 = vshrl.u32 %v1070, 7
    %v1072 = vsub.s32 %v1069, %v1071
    %v1073 = vrot.slane %v1066, %v1072
    %v1074 = vcombine.high %v1073, 0.0
    %v1075 = vcombine.low %v1038, %v1039
    %v1077 = vunpack.c.l.s4 1934713408
    %v1078 = vunpack.c.0.s8 %v1077
    %v1079 = vlaneseq
    %v1080 = vshrl.u32 %v1079, 7
    %v1081 = vsub.s32 %v1078, %v1080
    %v1082 = vrot.slane %v1075, %v1081
    %v1083 = vcombine.high %v1082, 0.0
    %v1084 = vcombine.low %v1040, %v1041
    %v1086 = vunpack.c.l.s4 1934713408
    %v1087 = vunpack.c.0.s8 %v1086
    %v1088 = vlaneseq
    %v1089 = vshrl.u32 %v1088, 7
    %v1090 = vsub.s32 %v1087, %v1089
    %v1091 = vrot.slane %v1084, %v1090
    %v1092 = vcombine.high %v1091, 0.0
    %v1093 = vcombine.low %v1042, %v1043
    %v1095 = vunpack.c.l.s4 1934713408
    %v1096 = vunpack.c.0.s8 %v1095
    %v1097 = vlaneseq
    %v1098 = vshrl.u32 %v1097, 7
    %v1099 = vsub.s32 %v1096, %v1098
    %v1100 = vrot.slane %v1093, %v1099
    %v1101 = vcombine.high %v1100, 0.0
    %v1102 = vcombine.low %v1044, %v1045
    %v1104 = vunpack.c.l.s4 1934713408
    %v1105 = vunpack.c.0.s8 %v1104
    %v1106 = vlaneseq
    %v1107 = vshrl.u32 %v1106, 7
    %v1108 = vsub.s32 %v1105, %v1107
    %v1109 = vrot.slane %v1102, %v1108
    %v1110 = vcombine.high %v1109, 0.0
    %v1111 = vcombine.low %v1046, %v1047
    %v1113 = vunpack.c.l.s4 1934713408
    %v1114 = vunpack.c.0.s8 %v1113
    %v1115 = vlaneseq
    %v1116 = vshrl.u32 %v1115, 7
    %v1117 = vsub.s32 %v1114, %v1116
    %v1118 = vrot.slane %v1111, %v1117
    %v1119 = vcombine.high %v1118, 0.0
    %v1136 = vcombine.low %v1055, %v1064
    %v1137 = vcombine.low %v1073, %v1082
    %v1139 = vunpack.c.l.s4 1983009808
    %v1140 = vunpack.c.0.s8 %v1139
    %v1141 = vlaneseq
    %v1142 = vshrl.u32 %v1141, 7
    %v1143 = vsub.s32 %v1140, %v1142
    %v1144 = vrot.slane %v1136, %v1143
    %v1146 = vunpack.c.l.s4 1983009808
    %v1147 = vunpack.c.0.s8 %v1146
    %v1148 = vlaneseq
    %v1149 = vshrl.u32 %v1148, 7
    %v1150 = vsub.s32 %v1147, %v1149
    %v1151 = vrot.slane %v1137, %v1150
    %v1152 = vcombine.low %v1144, %v1151
    %v1153 = vcombine.low %v1091, %v1100
    %v1154 = vcombine.low %v1109, %v1118
    %v1156 = vunpack.c.l.s4 1983009808
    %v1157 = vunpack.c.0.s8 %v1156
    %v1158 = vlaneseq
    %v1159 = vshrl.u32 %v1158, 7
    %v1160 = vsub.s32 %v1157, %v1159
    %v1161 = vrot.slane %v1153, %v1160
    %v1163 = vunpack.c.l.s4 1983009808
    %v1164 = vunpack.c.0.s8 %v1163
    %v1165 = vlaneseq
    %v1166 = vshrl.u32 %v1165, 7
    %v1167 = vsub.s32 %v1164, %v1166
    %v1168 = vrot.slane %v1154, %v1167
    %v1169 = vcombine.low %v1161, %v1168
    %v1170 = vcombine.low %v1056, %v1065
    %v1171 = vcombine.low %v1074, %v1083
    %v1173 = vunpack.c.l.s4 1983009808
    %v1174 = vunpack.c.0.s8 %v1173
    %v1175 = vlaneseq
    %v1176 = vshrl.u32 %v1175, 7
    %v1177 = vsub.s32 %v1174, %v1176
    %v1178 = vrot.slane %v1170, %v1177
    %v1180 = vunpack.c.l.s4 1983009808
    %v1181 = vunpack.c.0.s8 %v1180
    %v1182 = vlaneseq
    %v1183 = vshrl.u32 %v1182, 7
    %v1184 = vsub.s32 %v1181, %v1183
    %v1185 = vrot.slane %v1171, %v1184
    %v1186 = vcombine.low %v1178, %v1185
    %v1187 = vcombine.low %v1092, %v1101
    %v1188 = vcombine.low %v1110, %v1119
    %v1190 = vunpack.c.l.s4 1983009808
    %v1191 = vunpack.c.0.s8 %v1190
    %v1192 = vlaneseq
    %v1193 = vshrl.u32 %v1192, 7
    %v1194 = vsub.s32 %v1191, %v1193
    %v1195 = vrot.slane %v1187, %v1194
    %v1197 = vunpack.c.l.s4 1983009808
    %v1198 = vunpack.c.0.s8 %v1197
    %v1199 = vlaneseq
    %v1200 = vshrl.u32 %v1199, 7
    %v1201 = vsub.s32 %v1198, %v1200
    %v1202 = vrot.slane %v1188, %v1201
    %v1203 = vcombine.low %v1195, %v1202
    %v1208 = vpack.c.bf16 %v1169, %v1152
    %v1209 = vpack.c.bf16 %v1203, %v1186
    %v1212 = vpack.i.b16 %v1209, %v1208
    %v1214 = vshrl.u32 %v1208, 16
    %v1215 = vshrl.u32 %v1209, 16
    %v1216 = vpack.i.b16 %v1215, %v1214
    %v1218 = vcombine.high %v1212, %v45
    %v1220 = vunpack.c.l.s4 1983009808
    %v1221 = vunpack.c.0.s8 %v1220
    %v1222 = vlaneseq
    %v1223 = vshrl.u32 %v1222, 7
    %v1224 = vsub.s32 %v1221, %v1223
    %v1225 = vrot.slane %v1212, %v1224
    %v1227 = vunpack.c.l.s4 1983009808
    %v1228 = vunpack.c.0.s8 %v1227
    %v1229 = vlaneseq
    %v1230 = vshrl.u32 %v1229, 7
    %v1231 = vsub.s32 %v1228, %v1230
    %v1232 = vrot.slane %v1218, %v1231
    %v1233 = vcombine.high %v1225, 0
    %v1235 = vunpack.c.l.s4 1934713408
    %v1236 = vunpack.c.0.s8 %v1235
    %v1237 = vlaneseq
    %v1238 = vshrl.u32 %v1237, 7
    %v1239 = vsub.s32 %v1236, %v1238
    %v1240 = vrot.slane %v1225, %v1239
    %v1242 = vunpack.c.l.s4 1934713408
    %v1243 = vunpack.c.0.s8 %v1242
    %v1244 = vlaneseq
    %v1245 = vshrl.u32 %v1244, 7
    %v1246 = vsub.s32 %v1243, %v1245
    %v1247 = vrot.slane %v1233, %v1246
    %v1248 = vcombine.high %v1232, 0
    %v1250 = vunpack.c.l.s4 1934713408
    %v1251 = vunpack.c.0.s8 %v1250
    %v1252 = vlaneseq
    %v1253 = vshrl.u32 %v1252, 7
    %v1254 = vsub.s32 %v1251, %v1253
    %v1255 = vrot.slane %v1232, %v1254
    %v1257 = vunpack.c.l.s4 1934713408
    %v1258 = vunpack.c.0.s8 %v1257
    %v1259 = vlaneseq
    %v1260 = vshrl.u32 %v1259, 7
    %v1261 = vsub.s32 %v1258, %v1260
    %v1262 = vrot.slane %v1248, %v1261
    %v1263 = vcombine.high %v1240, 0
    %v1264 = vcombine.high %v1247, 0
    %v1265 = vcombine.high %v1255, 0
    %v1266 = vcombine.high %v1262, 0
    %v1267 = vcombine.high %v1216, %v48
    %v1269 = vunpack.c.l.s4 1983009808
    %v1270 = vunpack.c.0.s8 %v1269
    %v1271 = vlaneseq
    %v1272 = vshrl.u32 %v1271, 7
    %v1273 = vsub.s32 %v1270, %v1272
    %v1274 = vrot.slane %v1216, %v1273
    %v1276 = vunpack.c.l.s4 1983009808
    %v1277 = vunpack.c.0.s8 %v1276
    %v1278 = vlaneseq
    %v1279 = vshrl.u32 %v1278, 7
    %v1280 = vsub.s32 %v1277, %v1279
    %v1281 = vrot.slane %v1267, %v1280
    %v1282 = vcombine.high %v1274, 0
    %v1284 = vunpack.c.l.s4 1934713408
    %v1285 = vunpack.c.0.s8 %v1284
    %v1286 = vlaneseq
    %v1287 = vshrl.u32 %v1286, 7
    %v1288 = vsub.s32 %v1285, %v1287
    %v1289 = vrot.slane %v1274, %v1288
    %v1291 = vunpack.c.l.s4 1934713408
    %v1292 = vunpack.c.0.s8 %v1291
    %v1293 = vlaneseq
    %v1294 = vshrl.u32 %v1293, 7
    %v1295 = vsub.s32 %v1292, %v1294
    %v1296 = vrot.slane %v1282, %v1295
    %v1297 = vcombine.high %v1281, 0
    %v1299 = vunpack.c.l.s4 1934713408
    %v1300 = vunpack.c.0.s8 %v1299
    %v1301 = vlaneseq
    %v1302 = vshrl.u32 %v1301, 7
    %v1303 = vsub.s32 %v1300, %v1302
    %v1304 = vrot.slane %v1281, %v1303
    %v1306 = vunpack.c.l.s4 1934713408
    %v1307 = vunpack.c.0.s8 %v1306
    %v1308 = vlaneseq
    %v1309 = vshrl.u32 %v1308, 7
    %v1310 = vsub.s32 %v1307, %v1309
    %v1311 = vrot.slane %v1297, %v1310
    %v1312 = vcombine.high %v1289, 0
    %v1313 = vcombine.high %v1296, 0
    %v1314 = vcombine.high %v1304, 0
    %v1315 = vcombine.high %v1311, 0
    %v1316 = vcombine.low %v1240, %v1247
    %v1318 = vunpack.c.l.s4 1983009808
    %v1319 = vunpack.c.0.s8 %v1318
    %v1320 = vlaneseq
    %v1321 = vshrl.u32 %v1320, 7
    %v1322 = vsub.s32 %v1319, %v1321
    %v1323 = vrot.slane %v1316, %v1322
    %v1324 = vcombine.low %v1263, %v1264
    %v1326 = vunpack.c.l.s4 1983009808
    %v1327 = vunpack.c.0.s8 %v1326
    %v1328 = vlaneseq
    %v1329 = vshrl.u32 %v1328, 7
    %v1330 = vsub.s32 %v1327, %v1329
    %v1331 = vrot.slane %v1324, %v1330
    %v1332 = vcombine.low %v1255, %v1262
    %v1334 = vunpack.c.l.s4 1983009808
    %v1335 = vunpack.c.0.s8 %v1334
    %v1336 = vlaneseq
    %v1337 = vshrl.u32 %v1336, 7
    %v1338 = vsub.s32 %v1335, %v1337
    %v1339 = vrot.slane %v1332, %v1338
    %v1340 = vcombine.low %v1265, %v1266
    %v1342 = vunpack.c.l.s4 1983009808
    %v1343 = vunpack.c.0.s8 %v1342
    %v1344 = vlaneseq
    %v1345 = vshrl.u32 %v1344, 7
    %v1346 = vsub.s32 %v1343, %v1345
    %v1347 = vrot.slane %v1340, %v1346
    %v1348 = vcombine.low %v1323, %v1331
    %v1350 = vunpack.c.l.s4 1934713408
    %v1351 = vunpack.c.0.s8 %v1350
    %v1352 = vlaneseq
    %v1353 = vshrl.u32 %v1352, 7
    %v1354 = vsub.s32 %v1351, %v1353
    %v1355 = vrot.slane %v1348, %v1354
    %v1356 = vcombine.low %v1339, %v1347
    %v1358 = vunpack.c.l.s4 1934713408
    %v1359 = vunpack.c.0.s8 %v1358
    %v1360 = vlaneseq
    %v1361 = vshrl.u32 %v1360, 7
    %v1362 = vsub.s32 %v1359, %v1361
    %v1363 = vrot.slane %v1356, %v1362
    %v1364 = vcombine.low %v1355, %v1363
    %v1365 = vcombine.low %v1289, %v1296
    %v1367 = vunpack.c.l.s4 1983009808
    %v1368 = vunpack.c.0.s8 %v1367
    %v1369 = vlaneseq
    %v1370 = vshrl.u32 %v1369, 7
    %v1371 = vsub.s32 %v1368, %v1370
    %v1372 = vrot.slane %v1365, %v1371
    %v1373 = vcombine.low %v1312, %v1313
    %v1375 = vunpack.c.l.s4 1983009808
    %v1376 = vunpack.c.0.s8 %v1375
    %v1377 = vlaneseq
    %v1378 = vshrl.u32 %v1377, 7
    %v1379 = vsub.s32 %v1376, %v1378
    %v1380 = vrot.slane %v1373, %v1379
    %v1381 = vcombine.low %v1304, %v1311
    %v1383 = vunpack.c.l.s4 1983009808
    %v1384 = vunpack.c.0.s8 %v1383
    %v1385 = vlaneseq
    %v1386 = vshrl.u32 %v1385, 7
    %v1387 = vsub.s32 %v1384, %v1386
    %v1388 = vrot.slane %v1381, %v1387
    %v1389 = vcombine.low %v1314, %v1315
    %v1391 = vunpack.c.l.s4 1983009808
    %v1392 = vunpack.c.0.s8 %v1391
    %v1393 = vlaneseq
    %v1394 = vshrl.u32 %v1393, 7
    %v1395 = vsub.s32 %v1392, %v1394
    %v1396 = vrot.slane %v1389, %v1395
    %v1397 = vcombine.low %v1372, %v1380
    %v1399 = vunpack.c.l.s4 1934713408
    %v1400 = vunpack.c.0.s8 %v1399
    %v1401 = vlaneseq
    %v1402 = vshrl.u32 %v1401, 7
    %v1403 = vsub.s32 %v1400, %v1402
    %v1404 = vrot.slane %v1397, %v1403
    %v1405 = vcombine.low %v1388, %v1396
    %v1407 = vunpack.c.l.s4 1934713408
    %v1408 = vunpack.c.0.s8 %v1407
    %v1409 = vlaneseq
    %v1410 = vshrl.u32 %v1409, 7
    %v1411 = vsub.s32 %v1408, %v1410
    %v1412 = vrot.slane %v1405, %v1411
    %v1413 = vcombine.low %v1404, %v1412
    %v1416 = vpack.i.b16 %v1413, %v1364
    %v1417 = vshrl.u32 %v1364, 16
    %v1418 = vshrl.u32 %v1413, 16
    %v1419 = vpack.i.b16 %v1418, %v1417
    %1420 = vrot.lane.b32.xlu0 %v1419, 32
    %v1421 = vpop.permute.xlu0 %1420
    %vm1422 = vcmask 261120
    %v1425 = vsel %vm1422, %v1416, %v1421
    %1427 = vrot.lane.b32.xlu0 %v276, 32
    %v1428 = vpop.permute.xlu0 %1427
    %v1430 = vsel %vm1422, %v275, %v1428
    %1431 = vmatprep.subr.bf16.mxu0 0
    %1432 = vmatpush1.bf16.msra.mxu0 0
    %1433 = vmatprep.subr.bf16.mxu0 0
    %1434 = vmatpush1.bf16.msra.mxu0 0
    %1435 = vmatprep.subr.bf16.mxu0 0
    %1436 = vmatpush1.bf16.msra.mxu0 0
    %1437 = vmatprep.subr.bf16.mxu0 0
    %1438 = vmatpush1.bf16.msra.mxu0 0
    %1439 = vmatprep.subr.bf16.mxu0 0
    %1440 = vmatpush1.bf16.msra.mxu0 0
    %1441 = vmatprep.subr.bf16.mxu0 0
    %1442 = vmatpush1.bf16.msra.mxu0 0
    %1443 = vmatprep.subr.bf16.mxu0 0
    %1444 = vmatpush1.bf16.msra.mxu0 0
    %1445 = vmatprep.subr.bf16.mxu0 0
    %1446 = vmatpush1.bf16.msra.mxu0 %v1425
    %1447 = vmatprep.subr.bf16.mxu0 0
    %1448 = vmatpush2.bf16.msra.mxu0 0
    %1449 = vmatprep.subr.bf16.mxu0 0
    %1450 = vmatpush2.bf16.msra.mxu0 0
    %1451 = vmatprep.subr.bf16.mxu0 0
    %1452 = vmatpush2.bf16.msra.mxu0 0
    %1453 = vmatprep.subr.bf16.mxu0 0
    %1454 = vmatpush2.bf16.msra.mxu0 0
    %1455 = vmatprep.subr.bf16.mxu0 0
    %1456 = vmatpush2.bf16.msra.mxu0 0
    %1457 = vmatprep.subr.bf16.mxu0 0
    %1458 = vmatpush2.bf16.msra.mxu0 0
    %1459 = vmatprep.subr.bf16.mxu0 0
    %1460 = vmatpush2.bf16.msra.mxu0 0
    %1461 = vmatprep.subr.bf16.mxu0 0
    %1462 = vmatpush2.bf16.msra.mxu0 0
    %1463 = vmatprep.mubr.bf16.mxu0 0
    %1464 = vmatmul.mubr.bf16.gmra.mxu0 %v284
    %v1465 = vpop.f32.mrf.mxu0
    %v1466 = vadd.f32 %v1430, %v1465
    %v1467 = vpop.f32.mrf.mxu0
    %v1468 = vpop.f32.mrf.mxu0
    %v1469 = vadd.f32 %v1430, %v1468
    %v1470 = vpop.f32.mrf.mxu0
    %1471 = vdwg.mxu0
    %1474 = vrot.lane.b32.xlu0 %v1466, 96
    %v1475 = vpop.permute.xlu0 %1474
    %1476 = vrot.lane.b32.xlu0 %v1469, 96
    %v1477 = vpop.permute.xlu0 %1476
    %v1480 = vcombine.high %v1466, 0.0
    %v1482 = vunpack.c.l.s4 1983009808
    %v1483 = vunpack.c.0.s8 %v1482
    %v1484 = vlaneseq
    %v1485 = vshrl.u32 %v1484, 7
    %v1486 = vsub.s32 %v1483, %v1485
    %v1487 = vrot.slane %v1466, %v1486
    %v1489 = vunpack.c.l.s4 1983009808
    %v1490 = vunpack.c.0.s8 %v1489
    %v1491 = vlaneseq
    %v1492 = vshrl.u32 %v1491, 7
    %v1493 = vsub.s32 %v1490, %v1492
    %v1494 = vrot.slane %v1480, %v1493
    %v1495 = vcombine.high %v1475, 0.0
    %v1497 = vunpack.c.l.s4 1983009808
    %v1498 = vunpack.c.0.s8 %v1497
    %v1499 = vlaneseq
    %v1500 = vshrl.u32 %v1499, 7
    %v1501 = vsub.s32 %v1498, %v1500
    %v1502 = vrot.slane %v1475, %v1501
    %v1504 = vunpack.c.l.s4 1983009808
    %v1505 = vunpack.c.0.s8 %v1504
    %v1506 = vlaneseq
    %v1507 = vshrl.u32 %v1506, 7
    %v1508 = vsub.s32 %v1505, %v1507
    %v1509 = vrot.slane %v1495, %v1508
    %v1510 = vcombine.low %v1487, %v1502
    %v1511 = vcombine.high %v1487, %v1502
    %v1513 = vunpack.c.l.s4 1934713408
    %v1514 = vunpack.c.0.s8 %v1513
    %v1515 = vlaneseq
    %v1516 = vshrl.u32 %v1515, 7
    %v1517 = vsub.s32 %v1514, %v1516
    %v1518 = vrot.slane %v1510, %v1517
    %v1520 = vunpack.c.l.s4 1934713408
    %v1521 = vunpack.c.0.s8 %v1520
    %v1522 = vlaneseq
    %v1523 = vshrl.u32 %v1522, 7
    %v1524 = vsub.s32 %v1521, %v1523
    %v1525 = vrot.slane %v1511, %v1524
    %v1526 = vcombine.low %v1494, %v1509
    %v1527 = vcombine.high %v1494, %v1509
    %v1529 = vunpack.c.l.s4 1934713408
    %v1530 = vunpack.c.0.s8 %v1529
    %v1531 = vlaneseq
    %v1532 = vshrl.u32 %v1531, 7
    %v1533 = vsub.s32 %v1530, %v1532
    %v1534 = vrot.slane %v1526, %v1533
    %v1536 = vunpack.c.l.s4 1934713408
    %v1537 = vunpack.c.0.s8 %v1536
    %v1538 = vlaneseq
    %v1539 = vshrl.u32 %v1538, 7
    %v1540 = vsub.s32 %v1537, %v1539
    %v1541 = vrot.slane %v1527, %v1540
    %v1542 = vcombine.high %v1518, 0.0
    %v1543 = vcombine.high %v1525, 0.0
    %v1544 = vcombine.high %v1534, 0.0
    %v1545 = vcombine.high %v1541, 0.0
    %v1546 = vcombine.high %v1469, 0.0
    %v1548 = vunpack.c.l.s4 1983009808
    %v1549 = vunpack.c.0.s8 %v1548
    %v1550 = vlaneseq
    %v1551 = vshrl.u32 %v1550, 7
    %v1552 = vsub.s32 %v1549, %v1551
    %v1553 = vrot.slane %v1469, %v1552
    %v1555 = vunpack.c.l.s4 1983009808
    %v1556 = vunpack.c.0.s8 %v1555
    %v1557 = vlaneseq
    %v1558 = vshrl.u32 %v1557, 7
    %v1559 = vsub.s32 %v1556, %v1558
    %v1560 = vrot.slane %v1546, %v1559
    %v1561 = vcombine.high %v1477, 0.0
    %v1563 = vunpack.c.l.s4 1983009808
    %v1564 = vunpack.c.0.s8 %v1563
    %v1565 = vlaneseq
    %v1566 = vshrl.u32 %v1565, 7
    %v1567 = vsub.s32 %v1564, %v1566
    %v1568 = vrot.slane %v1477, %v1567
    %v1570 = vunpack.c.l.s4 1983009808
    %v1571 = vunpack.c.0.s8 %v1570
    %v1572 = vlaneseq
    %v1573 = vshrl.u32 %v1572, 7
    %v1574 = vsub.s32 %v1571, %v1573
    %v1575 = vrot.slane %v1561, %v1574
    %v1576 = vcombine.low %v1553, %v1568
    %v1577 = vcombine.high %v1553, %v1568
    %v1579 = vunpack.c.l.s4 1934713408
    %v1580 = vunpack.c.0.s8 %v1579
    %v1581 = vlaneseq
    %v1582 = vshrl.u32 %v1581, 7
    %v1583 = vsub.s32 %v1580, %v1582
    %v1584 = vrot.slane %v1576, %v1583
    %v1586 = vunpack.c.l.s4 1934713408
    %v1587 = vunpack.c.0.s8 %v1586
    %v1588 = vlaneseq
    %v1589 = vshrl.u32 %v1588, 7
    %v1590 = vsub.s32 %v1587, %v1589
    %v1591 = vrot.slane %v1577, %v1590
    %v1592 = vcombine.low %v1560, %v1575
    %v1593 = vcombine.high %v1560, %v1575
    %v1595 = vunpack.c.l.s4 1934713408
    %v1596 = vunpack.c.0.s8 %v1595
    %v1597 = vlaneseq
    %v1598 = vshrl.u32 %v1597, 7
    %v1599 = vsub.s32 %v1596, %v1598
    %v1600 = vrot.slane %v1592, %v1599
    %v1602 = vunpack.c.l.s4 1934713408
    %v1603 = vunpack.c.0.s8 %v1602
    %v1604 = vlaneseq
    %v1605 = vshrl.u32 %v1604, 7
    %v1606 = vsub.s32 %v1603, %v1605
    %v1607 = vrot.slane %v1593, %v1606
    %v1608 = vcombine.high %v1584, 0.0
    %v1609 = vcombine.high %v1591, 0.0
    %v1610 = vcombine.high %v1600, 0.0
    %v1611 = vcombine.high %v1607, 0.0
    %v1612 = vpack.c.bf16 %v1518, %v1518
    %v1613 = vpack.c.bf16 %v1542, %v1542
    %v1614 = vpack.c.bf16 %v1525, %v1525
    %v1615 = vpack.c.bf16 %v1543, %v1543
    %v1616 = vpack.c.bf16 %v1534, %v1534
    %v1617 = vpack.c.bf16 %v1544, %v1544
    %v1618 = vpack.c.bf16 %v1541, %v1541
    %v1619 = vpack.c.bf16 %v1545, %v1545
    %v1620 = vpack.c.bf16 %v1584, %v1584
    %v1621 = vpack.c.bf16 %v1608, %v1608
    %v1622 = vpack.c.bf16 %v1591, %v1591
    %v1623 = vpack.c.bf16 %v1609, %v1609
    %v1624 = vpack.c.bf16 %v1600, %v1600
    %v1625 = vpack.c.bf16 %v1610, %v1610
    %v1626 = vpack.c.bf16 %v1607, %v1607
    %v1627 = vpack.c.bf16 %v1611, %v1611
    %v1628 = vld [vmem:[#allocation2 + $0x50] sm:$0xff]
    %v1629 = vld [vmem:[#allocation2 + $0x60] sm:$0xff]
    %v1630 = vld [vmem:[#allocation2 + $0x70] sm:$0xff]
    %v1631 = vld [vmem:[#allocation2 + $0x80] sm:$0xff]
    %v1632 = vpack.c.bf16 %v1629, %v1628
    %v1633 = vpack.c.bf16 %v1631, %v1630
    %v1634 = vld [vmem:[#allocation2 + $0x90] sm:$0xff]
    %v1635 = vld [vmem:[#allocation2 + $0xa0] sm:$0xff]
    %v1638 = vcombine.high %v1634, %v1634
    %v1640 = vunpack.c.l.s4 1966171168
    %v1641 = vunpack.c.0.s8 %v1640
    %v1642 = vlaneseq
    %v1643 = vshrl.u32 %v1642, 7
    %v1644 = vsub.s32 %v1641, %v1643
    %v1645 = vrot.slane %v1634, %v1644
    %v1647 = vunpack.c.l.s4 1966171168
    %v1648 = vunpack.c.0.s8 %v1647
    %v1649 = vlaneseq
    %v1650 = vshrl.u32 %v1649, 7
    %v1651 = vsub.s32 %v1648, %v1650
    %v1652 = vrot.slane %v1638, %v1651
    %v1653 = vcombine.high %v1645, %v1645
    %v1654 = vcombine.high %v1652, %v1652
    %v1656 = vunpack.c.l.s4 1966171168
    %v1657 = vunpack.c.0.s8 %v1656
    %v1658 = vlaneseq
    %v1659 = vshrl.u32 %v1658, 7
    %v1660 = vsub.s32 %v1657, %v1659
    %v1661 = vrot.slane %v1645, %v1660
    %v1663 = vunpack.c.l.s4 1966171168
    %v1664 = vunpack.c.0.s8 %v1663
    %v1665 = vlaneseq
    %v1666 = vshrl.u32 %v1665, 7
    %v1667 = vsub.s32 %v1664, %v1666
    %v1668 = vrot.slane %v1652, %v1667
    %v1670 = vunpack.c.l.s4 1966171168
    %v1671 = vunpack.c.0.s8 %v1670
    %v1672 = vlaneseq
    %v1673 = vshrl.u32 %v1672, 7
    %v1674 = vsub.s32 %v1671, %v1673
    %v1675 = vrot.slane %v1653, %v1674
    %v1677 = vunpack.c.l.s4 1966171168
    %v1678 = vunpack.c.0.s8 %v1677
    %v1679 = vlaneseq
    %v1680 = vshrl.u32 %v1679, 7
    %v1681 = vsub.s32 %v1678, %v1680
    %v1682 = vrot.slane %v1654, %v1681
    %v1683 = vcombine.high %v1661, %v1661
    %v1684 = vcombine.high %v1668, %v1668
    %v1685 = vcombine.high %v1675, %v1675
    %v1686 = vcombine.high %v1682, %v1682
    %v1687 = vcombine.high %v1635, %v1635
    %v1689 = vunpack.c.l.s4 1966171168
    %v1690 = vunpack.c.0.s8 %v1689
    %v1691 = vlaneseq
    %v1692 = vshrl.u32 %v1691, 7
    %v1693 = vsub.s32 %v1690, %v1692
    %v1694 = vrot.slane %v1635, %v1693
    %v1696 = vunpack.c.l.s4 1966171168
    %v1697 = vunpack.c.0.s8 %v1696
    %v1698 = vlaneseq
    %v1699 = vshrl.u32 %v1698, 7
    %v1700 = vsub.s32 %v1697, %v1699
    %v1701 = vrot.slane %v1687, %v1700
    %v1702 = vcombine.high %v1694, %v1694
    %v1703 = vcombine.high %v1701, %v1701
    %v1705 = vunpack.c.l.s4 1966171168
    %v1706 = vunpack.c.0.s8 %v1705
    %v1707 = vlaneseq
    %v1708 = vshrl.u32 %v1707, 7
    %v1709 = vsub.s32 %v1706, %v1708
    %v1710 = vrot.slane %v1694, %v1709
    %v1712 = vunpack.c.l.s4 1966171168
    %v1713 = vunpack.c.0.s8 %v1712
    %v1714 = vlaneseq
    %v1715 = vshrl.u32 %v1714, 7
    %v1716 = vsub.s32 %v1713, %v1715
    %v1717 = vrot.slane %v1701, %v1716
    %v1719 = vunpack.c.l.s4 1966171168
    %v1720 = vunpack.c.0.s8 %v1719
    %v1721 = vlaneseq
    %v1722 = vshrl.u32 %v1721, 7
    %v1723 = vsub.s32 %v1720, %v1722
    %v1724 = vrot.slane %v1702, %v1723
    %v1726 = vunpack.c.l.s4 1966171168
    %v1727 = vunpack.c.0.s8 %v1726
    %v1728 = vlaneseq
    %v1729 = vshrl.u32 %v1728, 7
    %v1730 = vsub.s32 %v1727, %v1729
    %v1731 = vrot.slane %v1703, %v1730
    %v1732 = vcombine.high %v1710, %v1710
    %v1733 = vcombine.high %v1717, %v1717
    %v1734 = vcombine.high %v1724, %v1724
    %v1735 = vcombine.high %v1731, %v1731
    %v1736 = vlaneseq
    %v1737 = vshrl.u32 %v1736, 7
    %v1738 = vsub.s32 0, %v1737
    %v1739 = vrot.slane %v1661, %v1738
    %v1740 = vlaneseq
    %v1741 = vshrl.u32 %v1740, 7
    %v1742 = vsub.s32 0, %v1741
    %v1743 = vrot.slane %v1675, %v1742
    %v1744 = vlaneseq
    %v1745 = vshrl.u32 %v1744, 7
    %v1746 = vsub.s32 0, %v1745
    %v1747 = vrot.slane %v1683, %v1746
    %v1748 = vlaneseq
    %v1749 = vshrl.u32 %v1748, 7
    %v1750 = vsub.s32 0, %v1749
    %v1751 = vrot.slane %v1685, %v1750
    %v1752 = vlaneseq
    %v1753 = vshrl.u32 %v1752, 7
    %v1754 = vsub.s32 0, %v1753
    %v1755 = vrot.slane %v1668, %v1754
    %v1756 = vlaneseq
    %v1757 = vshrl.u32 %v1756, 7
    %v1758 = vsub.s32 0, %v1757
    %v1759 = vrot.slane %v1682, %v1758
    %v1760 = vlaneseq
    %v1761 = vshrl.u32 %v1760, 7
    %v1762 = vsub.s32 0, %v1761
    %v1763 = vrot.slane %v1684, %v1762
    %v1764 = vlaneseq
    %v1765 = vshrl.u32 %v1764, 7
    %v1766 = vsub.s32 0, %v1765
    %v1767 = vrot.slane %v1686, %v1766
    %v1768 = vlaneseq
    %v1769 = vshrl.u32 %v1768, 7
    %v1770 = vsub.s32 0, %v1769
    %v1771 = vrot.slane %v1710, %v1770
    %v1772 = vlaneseq
    %v1773 = vshrl.u32 %v1772, 7
    %v1774 = vsub.s32 0, %v1773
    %v1775 = vrot.slane %v1724, %v1774
    %v1776 = vlaneseq
    %v1777 = vshrl.u32 %v1776, 7
    %v1778 = vsub.s32 0, %v1777
    %v1779 = vrot.slane %v1732, %v1778
    %v1780 = vlaneseq
    %v1781 = vshrl.u32 %v1780, 7
    %v1782 = vsub.s32 0, %v1781
    %v1783 = vrot.slane %v1734, %v1782
    %v1784 = vlaneseq
    %v1785 = vshrl.u32 %v1784, 7
    %v1786 = vsub.s32 0, %v1785
    %v1787 = vrot.slane %v1717, %v1786
    %v1788 = vlaneseq
    %v1789 = vshrl.u32 %v1788, 7
    %v1790 = vsub.s32 0, %v1789
    %v1791 = vrot.slane %v1731, %v1790
    %v1792 = vlaneseq
    %v1793 = vshrl.u32 %v1792, 7
    %v1794 = vsub.s32 0, %v1793
    %v1795 = vrot.slane %v1733, %v1794
    %v1796 = vlaneseq
    %v1797 = vshrl.u32 %v1796, 7
    %v1798 = vsub.s32 0, %v1797
    %v1799 = vrot.slane %v1735, %v1798
    %1800 = vset.pattern.permute.xlu0 0
    %1801 = vperm.xlu0 %1800, %v1739
    %v1802 = vpop.permute.xlu0 %1801
    %1803 = vset.pattern.permute.xlu0 0
    %1804 = vperm.xlu0 %1803, %v1743
    %v1805 = vpop.permute.xlu0 %1804
    %1806 = vset.pattern.permute.xlu0 0
    %1807 = vperm.xlu0 %1806, %v1747
    %v1808 = vpop.permute.xlu0 %1807
    %1809 = vset.pattern.permute.xlu0 0
    %1810 = vperm.xlu0 %1809, %v1751
    %v1811 = vpop.permute.xlu0 %1810
    %1812 = vset.pattern.permute.xlu0 0
    %1813 = vperm.xlu0 %1812, %v1755
    %v1814 = vpop.permute.xlu0 %1813
    %1815 = vset.pattern.permute.xlu0 0
    %1816 = vperm.xlu0 %1815, %v1759
    %v1817 = vpop.permute.xlu0 %1816
    %1818 = vset.pattern.permute.xlu0 0
    %1819 = vperm.xlu0 %1818, %v1763
    %v1820 = vpop.permute.xlu0 %1819
    %1821 = vset.pattern.permute.xlu0 0
    %1822 = vperm.xlu0 %1821, %v1767
    %v1823 = vpop.permute.xlu0 %1822
    %1824 = vset.pattern.permute.xlu0 0
    %1825 = vperm.xlu0 %1824, %v1771
    %v1826 = vpop.permute.xlu0 %1825
    %1827 = vset.pattern.permute.xlu0 0
    %1828 = vperm.xlu0 %1827, %v1775
    %v1829 = vpop.permute.xlu0 %1828
    %1830 = vset.pattern.permute.xlu0 0
    %1831 = vperm.xlu0 %1830, %v1779
    %v1832 = vpop.permute.xlu0 %1831
    %1833 = vset.pattern.permute.xlu0 0
    %1834 = vperm.xlu0 %1833, %v1783
    %v1835 = vpop.permute.xlu0 %1834
    %1836 = vset.pattern.permute.xlu0 0
    %1837 = vperm.xlu0 %1836, %v1787
    %v1838 = vpop.permute.xlu0 %1837
    %1839 = vset.pattern.permute.xlu0 0
    %1840 = vperm.xlu0 %1839, %v1791
    %v1841 = vpop.permute.xlu0 %1840
    %1842 = vset.pattern.permute.xlu0 0
    %1843 = vperm.xlu0 %1842, %v1795
    %v1844 = vpop.permute.xlu0 %1843
    %1845 = vset.pattern.permute.xlu0 0
    %1846 = vperm.xlu0 %1845, %v1799
    %v1847 = vpop.permute.xlu0 %1846
    %v1864 = vcombine.low %v1612, %v1613
    %v1865 = vcombine.low %v1614, %v1615
    %v1866 = vcombine.low %v1616, %v1617
    %v1867 = vcombine.low %v1618, %v1619
    %v1869 = vunpack.c.l.s4 1966171168
    %v1870 = vunpack.c.0.s8 %v1869
    %v1871 = vlaneseq
    %v1872 = vshrl.u32 %v1871, 7
    %v1873 = vsub.s32 %v1870, %v1872
    %v1874 = vrot.slane %v1864, %v1873
    %v1876 = vunpack.c.l.s4 1966171168
    %v1877 = vunpack.c.0.s8 %v1876
    %v1878 = vlaneseq
    %v1879 = vshrl.u32 %v1878, 7
    %v1880 = vsub.s32 %v1877, %v1879
    %v1881 = vrot.slane %v1865, %v1880
    %v1883 = vunpack.c.l.s4 1966171168
    %v1884 = vunpack.c.0.s8 %v1883
    %v1885 = vlaneseq
    %v1886 = vshrl.u32 %v1885, 7
    %v1887 = vsub.s32 %v1884, %v1886
    %v1888 = vrot.slane %v1866, %v1887
    %v1890 = vunpack.c.l.s4 1966171168
    %v1891 = vunpack.c.0.s8 %v1890
    %v1892 = vlaneseq
    %v1893 = vshrl.u32 %v1892, 7
    %v1894 = vsub.s32 %v1891, %v1893
    %v1895 = vrot.slane %v1867, %v1894
    %v1896 = vcombine.low %v1874, %v1881
    %v1897 = vcombine.low %v1888, %v1895
    %v1899 = vunpack.c.l.s4 1966171168
    %v1900 = vunpack.c.0.s8 %v1899
    %v1901 = vlaneseq
    %v1902 = vshrl.u32 %v1901, 7
    %v1903 = vsub.s32 %v1900, %v1902
    %v1904 = vrot.slane %v1896, %v1903
    %v1906 = vunpack.c.l.s4 1966171168
    %v1907 = vunpack.c.0.s8 %v1906
    %v1908 = vlaneseq
    %v1909 = vshrl.u32 %v1908, 7
    %v1910 = vsub.s32 %v1907, %v1909
    %v1911 = vrot.slane %v1897, %v1910
    %v1912 = vcombine.low %v1904, %v1911
    %v1913 = vcombine.low %v1620, %v1621
    %v1914 = vcombine.low %v1622, %v1623
    %v1915 = vcombine.low %v1624, %v1625
    %v1916 = vcombine.low %v1626, %v1627
    %v1918 = vunpack.c.l.s4 1966171168
    %v1919 = vunpack.c.0.s8 %v1918
    %v1920 = vlaneseq
    %v1921 = vshrl.u32 %v1920, 7
    %v1922 = vsub.s32 %v1919, %v1921
    %v1923 = vrot.slane %v1913, %v1922
    %v1925 = vunpack.c.l.s4 1966171168
    %v1926 = vunpack.c.0.s8 %v1925
    %v1927 = vlaneseq
    %v1928 = vshrl.u32 %v1927, 7
    %v1929 = vsub.s32 %v1926, %v1928
    %v1930 = vrot.slane %v1914, %v1929
    %v1932 = vunpack.c.l.s4 1966171168
    %v1933 = vunpack.c.0.s8 %v1932
    %v1934 = vlaneseq
    %v1935 = vshrl.u32 %v1934, 7
    %v1936 = vsub.s32 %v1933, %v1935
    %v1937 = vrot.slane %v1915, %v1936
    %v1939 = vunpack.c.l.s4 1966171168
    %v1940 = vunpack.c.0.s8 %v1939
    %v1941 = vlaneseq
    %v1942 = vshrl.u32 %v1941, 7
    %v1943 = vsub.s32 %v1940, %v1942
    %v1944 = vrot.slane %v1916, %v1943
    %v1945 = vcombine.low %v1923, %v1930
    %v1946 = vcombine.low %v1937, %v1944
    %v1948 = vunpack.c.l.s4 1966171168
    %v1949 = vunpack.c.0.s8 %v1948
    %v1950 = vlaneseq
    %v1951 = vshrl.u32 %v1950, 7
    %v1952 = vsub.s32 %v1949, %v1951
    %v1953 = vrot.slane %v1945, %v1952
    %v1955 = vunpack.c.l.s4 1966171168
    %v1956 = vunpack.c.0.s8 %v1955
    %v1957 = vlaneseq
    %v1958 = vshrl.u32 %v1957, 7
    %v1959 = vsub.s32 %v1956, %v1958
    %v1960 = vrot.slane %v1946, %v1959
    %v1961 = vcombine.low %v1953, %v1960
    %v1962 = vcombine.low %v1802, %v1805
    %v1963 = vcombine.low %v1808, %v1811
    %v1965 = vunpack.c.l.s4 1983009808
    %v1966 = vunpack.c.0.s8 %v1965
    %v1967 = vlaneseq
    %v1968 = vshrl.u32 %v1967, 7
    %v1969 = vsub.s32 %v1966, %v1968
    %v1970 = vrot.slane %v1962, %v1969
    %v1972 = vunpack.c.l.s4 1983009808
    %v1973 = vunpack.c.0.s8 %v1972
    %v1974 = vlaneseq
    %v1975 = vshrl.u32 %v1974, 7
    %v1976 = vsub.s32 %v1973, %v1975
    %v1977 = vrot.slane %v1963, %v1976
    %v1978 = vcombine.low %v1970, %v1977
    %v1979 = vcombine.low %v1814, %v1817
    %v1980 = vcombine.low %v1820, %v1823
    %v1982 = vunpack.c.l.s4 1983009808
    %v1983 = vunpack.c.0.s8 %v1982
    %v1984 = vlaneseq
    %v1985 = vshrl.u32 %v1984, 7
    %v1986 = vsub.s32 %v1983, %v1985
    %v1987 = vrot.slane %v1979, %v1986
    %v1989 = vunpack.c.l.s4 1983009808
    %v1990 = vunpack.c.0.s8 %v1989
    %v1991 = vlaneseq
    %v1992 = vshrl.u32 %v1991, 7
    %v1993 = vsub.s32 %v1990, %v1992
    %v1994 = vrot.slane %v1980, %v1993
    %v1995 = vcombine.low %v1987, %v1994
    %v1996 = vcombine.low %v1826, %v1829
    %v1997 = vcombine.low %v1832, %v1835
    %v1999 = vunpack.c.l.s4 1983009808
    %v2000 = vunpack.c.0.s8 %v1999
    %v2001 = vlaneseq
    %v2002 = vshrl.u32 %v2001, 7
    %v2003 = vsub.s32 %v2000, %v2002
    %v2004 = vrot.slane %v1996, %v2003
    %v2006 = vunpack.c.l.s4 1983009808
    %v2007 = vunpack.c.0.s8 %v2006
    %v2008 = vlaneseq
    %v2009 = vshrl.u32 %v2008, 7
    %v2010 = vsub.s32 %v2007, %v2009
    %v2011 = vrot.slane %v1997, %v2010
    %v2012 = vcombine.low %v2004, %v2011
    %v2013 = vcombine.low %v1838, %v1841
    %v2014 = vcombine.low %v1844, %v1847
    %v2016 = vunpack.c.l.s4 1983009808
    %v2017 = vunpack.c.0.s8 %v2016
    %v2018 = vlaneseq
    %v2019 = vshrl.u32 %v2018, 7
    %v2020 = vsub.s32 %v2017, %v2019
    %v2021 = vrot.slane %v2013, %v2020
    %v2023 = vunpack.c.l.s4 1983009808
    %v2024 = vunpack.c.0.s8 %v2023
    %v2025 = vlaneseq
    %v2026 = vshrl.u32 %v2025, 7
    %v2027 = vsub.s32 %v2024, %v2026
    %v2028 = vrot.slane %v2014, %v2027
    %v2029 = vcombine.low %v2021, %v2028
    %v2035 = vsel %vm1422, %v1912, 0
    %v2038 = vsel %vm1422, %v1961, 0
    %2040 = vmatprep.subr.bf16.mxu0 0
    %2041 = vmatpush1.bf16.msra.mxu0 0
    %2042 = vmatprep.subr.bf16.mxu0 0
    %2043 = vmatpush1.bf16.msra.mxu0 0
    %2044 = vmatprep.subr.bf16.mxu0 0
    %2045 = vmatpush1.bf16.msra.mxu0 0
    %2046 = vmatprep.subr.bf16.mxu0 0
    %2047 = vmatpush1.bf16.msra.mxu0 0
    %2048 = vmatprep.subr.bf16.mxu0 0
    %2049 = vmatpush1.bf16.msra.mxu0 0
    %2050 = vmatprep.subr.bf16.mxu0 0
    %2051 = vmatpush1.bf16.msra.mxu0 0
    %2052 = vmatprep.subr.bf16.mxu0 0
    %2053 = vmatpush1.bf16.msra.mxu0 %v1633
    %2054 = vmatprep.subr.bf16.mxu0 0
    %2055 = vmatpush1.bf16.msra.mxu0 %v1632
    %2056 = vmatprep.subr.bf16.mxu0 0
    %2057 = vmatpush2.bf16.msra.mxu0 0
    %2058 = vmatprep.subr.bf16.mxu0 0
    %2059 = vmatpush2.bf16.msra.mxu0 0
    %2060 = vmatprep.subr.bf16.mxu0 0
    %2061 = vmatpush2.bf16.msra.mxu0 0
    %2062 = vmatprep.subr.bf16.mxu0 0
    %2063 = vmatpush2.bf16.msra.mxu0 0
    %2064 = vmatprep.subr.bf16.mxu0 0
    %2065 = vmatpush2.bf16.msra.mxu0 0
    %2066 = vmatprep.subr.bf16.mxu0 0
    %2067 = vmatpush2.bf16.msra.mxu0 0
    %2068 = vmatprep.subr.bf16.mxu0 0
    %2069 = vmatpush2.bf16.msra.mxu0 0
    %2070 = vmatprep.subr.bf16.mxu0 0
    %2071 = vmatpush2.bf16.msra.mxu0 0
    %2072 = vmatprep.mubr.bf16.mxu0 0
    %2073 = vmatmul.mubr.bf16.gmra.mxu0 %v2035
    %v2074 = vpop.f32.mrf.mxu0
    %v2075 = vadd.f32 %v1978, %v2074
    %v2076 = vpop.f32.mrf.mxu0
    %v2077 = vpop.f32.mrf.mxu0
    %v2078 = vadd.f32 %v1995, %v2077
    %v2079 = vpop.f32.mrf.mxu0
    %2080 = vmatprep.mubr.bf16.mxu0 0
    %2081 = vmatmul.mubr.bf16.gmra.mxu0 %v2038
    %v2082 = vpop.f32.mrf.mxu0
    %v2083 = vadd.f32 %v2012, %v2082
    %v2084 = vpop.f32.mrf.mxu0
    %v2085 = vpop.f32.mrf.mxu0
    %v2086 = vadd.f32 %v2029, %v2085
    %v2087 = vpop.f32.mrf.mxu0
    %2088 = vdwg.mxu0
    %v2093 = vcombine.high %v2075, %v2075
    %v2095 = vunpack.c.l.s4 1983009808
    %v2096 = vunpack.c.0.s8 %v2095
    %v2097 = vlaneseq
    %v2098 = vshrl.u32 %v2097, 7
    %v2099 = vsub.s32 %v2096, %v2098
    %v2100 = vrot.slane %v2075, %v2099
    %v2102 = vunpack.c.l.s4 1983009808
    %v2103 = vunpack.c.0.s8 %v2102
    %v2104 = vlaneseq
    %v2105 = vshrl.u32 %v2104, 7
    %v2106 = vsub.s32 %v2103, %v2105
    %v2107 = vrot.slane %v2093, %v2106
    %v2108 = vcombine.high %v2100, %v2100
    %v2109 = vcombine.high %v2107, %v2107
    %v2110 = vcombine.high %v2078, %v2078
    %v2112 = vunpack.c.l.s4 1983009808
    %v2113 = vunpack.c.0.s8 %v2112
    %v2114 = vlaneseq
    %v2115 = vshrl.u32 %v2114, 7
    %v2116 = vsub.s32 %v2113, %v2115
    %v2117 = vrot.slane %v2078, %v2116
    %v2119 = vunpack.c.l.s4 1983009808
    %v2120 = vunpack.c.0.s8 %v2119
    %v2121 = vlaneseq
    %v2122 = vshrl.u32 %v2121, 7
    %v2123 = vsub.s32 %v2120, %v2122
    %v2124 = vrot.slane %v2110, %v2123
    %v2125 = vcombine.high %v2117, %v2117
    %v2126 = vcombine.high %v2124, %v2124
    %v2127 = vcombine.high %v2083, %v2083
    %v2129 = vunpack.c.l.s4 1983009808
    %v2130 = vunpack.c.0.s8 %v2129
    %v2131 = vlaneseq
    %v2132 = vshrl.u32 %v2131, 7
    %v2133 = vsub.s32 %v2130, %v2132
    %v2134 = vrot.slane %v2083, %v2133
    %v2136 = vunpack.c.l.s4 1983009808
    %v2137 = vunpack.c.0.s8 %v2136
    %v2138 = vlaneseq
    %v2139 = vshrl.u32 %v2138, 7
    %v2140 = vsub.s32 %v2137, %v2139
    %v2141 = vrot.slane %v2127, %v2140
    %v2142 = vcombine.high %v2134, %v2134
    %v2143 = vcombine.high %v2141, %v2141
    %v2144 = vcombine.high %v2086, %v2086
    %v2146 = vunpack.c.l.s4 1983009808
    %v2147 = vunpack.c.0.s8 %v2146
    %v2148 = vlaneseq
    %v2149 = vshrl.u32 %v2148, 7
    %v2150 = vsub.s32 %v2147, %v2149
    %v2151 = vrot.slane %v2086, %v2150
    %v2153 = vunpack.c.l.s4 1983009808
    %v2154 = vunpack.c.0.s8 %v2153
    %v2155 = vlaneseq
    %v2156 = vshrl.u32 %v2155, 7
    %v2157 = vsub.s32 %v2154, %v2156
    %v2158 = vrot.slane %v2144, %v2157
    %v2159 = vcombine.high %v2151, %v2151
    %v2160 = vcombine.high %v2158, %v2158
    %v2177 = vmax.f32 %v2100, 0.0
    %v2178 = vmax.f32 %v2108, 0.0
    %v2179 = vmax.f32 %v2107, 0.0
    %v2180 = vmax.f32 %v2109, 0.0
    %v2181 = vmax.f32 %v2117, 0.0
    %v2182 = vmax.f32 %v2125, 0.0
    %v2183 = vmax.f32 %v2124, 0.0
    %v2184 = vmax.f32 %v2126, 0.0
    %v2185 = vmax.f32 %v2134, 0.0
    %v2186 = vmax.f32 %v2142, 0.0
    %v2187 = vmax.f32 %v2141, 0.0
    %v2188 = vmax.f32 %v2143, 0.0
    %v2189 = vmax.f32 %v2151, 0.0
    %v2190 = vmax.f32 %v2159, 0.0
    %v2191 = vmax.f32 %v2158, 0.0
    %v2192 = vmax.f32 %v2160, 0.0
    %v2193 = vcombine.low %v2177, %v2178
    %v2195 = vunpack.c.l.s4 1934713408
    %v2196 = vunpack.c.0.s8 %v2195
    %v2197 = vlaneseq
    %v2198 = vshrl.u32 %v2197, 7
    %v2199 = vsub.s32 %v2196, %v2198
    %v2200 = vrot.slane %v2193, %v2199
    %v2201 = vcombine.high %v2200, 0.0
    %v2202 = vcombine.low %v2179, %v2180
    %v2204 = vunpack.c.l.s4 1934713408
    %v2205 = vunpack.c.0.s8 %v2204
    %v2206 = vlaneseq
    %v2207 = vshrl.u32 %v2206, 7
    %v2208 = vsub.s32 %v2205, %v2207
    %v2209 = vrot.slane %v2202, %v2208
    %v2210 = vcombine.high %v2209, 0.0
    %v2211 = vcombine.low %v2181, %v2182
    %v2213 = vunpack.c.l.s4 1934713408
    %v2214 = vunpack.c.0.s8 %v2213
    %v2215 = vlaneseq
    %v2216 = vshrl.u32 %v2215, 7
    %v2217 = vsub.s32 %v2214, %v2216
    %v2218 = vrot.slane %v2211, %v2217
    %v2219 = vcombine.high %v2218, 0.0
    %v2220 = vcombine.low %v2183, %v2184
    %v2222 = vunpack.c.l.s4 1934713408
    %v2223 = vunpack.c.0.s8 %v2222
    %v2224 = vlaneseq
    %v2225 = vshrl.u32 %v2224, 7
    %v2226 = vsub.s32 %v2223, %v2225
    %v2227 = vrot.slane %v2220, %v2226
    %v2228 = vcombine.high %v2227, 0.0
    %v2229 = vcombine.low %v2185, %v2186
    %v2231 = vunpack.c.l.s4 1934713408
    %v2232 = vunpack.c.0.s8 %v2231
    %v2233 = vlaneseq
    %v2234 = vshrl.u32 %v2233, 7
    %v2235 = vsub.s32 %v2232, %v2234
    %v2236 = vrot.slane %v2229, %v2235
    %v2237 = vcombine.high %v2236, 0.0
    %v2238 = vcombine.low %v2187, %v2188
    %v2240 = vunpack.c.l.s4 1934713408
    %v2241 = vunpack.c.0.s8 %v2240
    %v2242 = vlaneseq
    %v2243 = vshrl.u32 %v2242, 7
    %v2244 = vsub.s32 %v2241, %v2243
    %v2245 = vrot.slane %v2238, %v2244
    %v2246 = vcombine.high %v2245, 0.0
    %v2247 = vcombine.low %v2189, %v2190
    %v2249 = vunpack.c.l.s4 1934713408
    %v2250 = vunpack.c.0.s8 %v2249
    %v2251 = vlaneseq
    %v2252 = vshrl.u32 %v2251, 7
    %v2253 = vsub.s32 %v2250, %v2252
    %v2254 = vrot.slane %v2247, %v2253
    %v2255 = vcombine.high %v2254, 0.0
    %v2256 = vcombine.low %v2191, %v2192
    %v2258 = vunpack.c.l.s4 1934713408
    %v2259 = vunpack.c.0.s8 %v2258
    %v2260 = vlaneseq
    %v2261 = vshrl.u32 %v2260, 7
    %v2262 = vsub.s32 %v2259, %v2261
    %v2263 = vrot.slane %v2256, %v2262
    %v2264 = vcombine.high %v2263, 0.0
    %v2281 = vcombine.low %v2200, %v2209
    %v2282 = vcombine.low %v2218, %v2227
    %v2284 = vunpack.c.l.s4 1983009808
    %v2285 = vunpack.c.0.s8 %v2284
    %v2286 = vlaneseq
    %v2287 = vshrl.u32 %v2286, 7
    %v2288 = vsub.s32 %v2285, %v2287
    %v2289 = vrot.slane %v2281, %v2288
    %v2291 = vunpack.c.l.s4 1983009808
    %v2292 = vunpack.c.0.s8 %v2291
    %v2293 = vlaneseq
    %v2294 = vshrl.u32 %v2293, 7
    %v2295 = vsub.s32 %v2292, %v2294
    %v2296 = vrot.slane %v2282, %v2295
    %v2297 = vcombine.low %v2289, %v2296
    %v2298 = vcombine.low %v2236, %v2245
    %v2299 = vcombine.low %v2254, %v2263
    %v2301 = vunpack.c.l.s4 1983009808
    %v2302 = vunpack.c.0.s8 %v2301
    %v2303 = vlaneseq
    %v2304 = vshrl.u32 %v2303, 7
    %v2305 = vsub.s32 %v2302, %v2304
    %v2306 = vrot.slane %v2298, %v2305
    %v2308 = vunpack.c.l.s4 1983009808
    %v2309 = vunpack.c.0.s8 %v2308
    %v2310 = vlaneseq
    %v2311 = vshrl.u32 %v2310, 7
    %v2312 = vsub.s32 %v2309, %v2311
    %v2313 = vrot.slane %v2299, %v2312
    %v2314 = vcombine.low %v2306, %v2313
    %v2315 = vcombine.low %v2201, %v2210
    %v2316 = vcombine.low %v2219, %v2228
    %v2318 = vunpack.c.l.s4 1983009808
    %v2319 = vunpack.c.0.s8 %v2318
    %v2320 = vlaneseq
    %v2321 = vshrl.u32 %v2320, 7
    %v2322 = vsub.s32 %v2319, %v2321
    %v2323 = vrot.slane %v2315, %v2322
    %v2325 = vunpack.c.l.s4 1983009808
    %v2326 = vunpack.c.0.s8 %v2325
    %v2327 = vlaneseq
    %v2328 = vshrl.u32 %v2327, 7
    %v2329 = vsub.s32 %v2326, %v2328
    %v2330 = vrot.slane %v2316, %v2329
    %v2331 = vcombine.low %v2323, %v2330
    %v2332 = vcombine.low %v2237, %v2246
    %v2333 = vcombine.low %v2255, %v2264
    %v2335 = vunpack.c.l.s4 1983009808
    %v2336 = vunpack.c.0.s8 %v2335
    %v2337 = vlaneseq
    %v2338 = vshrl.u32 %v2337, 7
    %v2339 = vsub.s32 %v2336, %v2338
    %v2340 = vrot.slane %v2332, %v2339
    %v2342 = vunpack.c.l.s4 1983009808
    %v2343 = vunpack.c.0.s8 %v2342
    %v2344 = vlaneseq
    %v2345 = vshrl.u32 %v2344, 7
    %v2346 = vsub.s32 %v2343, %v2345
    %v2347 = vrot.slane %v2333, %v2346
    %v2348 = vcombine.low %v2340, %v2347
    %2353 = vxpose.xlu0.b32.start [1/16] %v2297, 128
    %2354 = vxpose.xlu0.b32.cont [2/16] %v2314, 128
    %2355 = vxpose.xlu0.b32.cont [3/16] 0.0, 128
    %2356 = vxpose.xlu0.b32.cont [4/16] 0.0, 128
    %2357 = vxpose.xlu0.b32.cont [5/16] 0.0, 128
    %2358 = vxpose.xlu0.b32.cont [6/16] 0.0, 128
    %2359 = vxpose.xlu0.b32.cont [7/16] 0.0, 128
    %2360 = vxpose.xlu0.b32.cont [8/16] 0.0, 128
    %2361 = vxpose.xlu0.b32.cont [9/16] 0.0, 128
    %2362 = vxpose.xlu0.b32.cont [10/16] 0.0, 128
    %2363 = vxpose.xlu0.b32.cont [11/16] 0.0, 128
    %2364 = vxpose.xlu0.b32.cont [12/16] 0.0, 128
    %2365 = vxpose.xlu0.b32.cont [13/16] 0.0, 128
    %2366 = vxpose.xlu0.b32.cont [14/16] 0.0, 128
    %2367 = vxpose.xlu0.b32.cont [15/16] 0.0, 128
    %2368 = vxpose.xlu0.b32.end [16/16] 0.0, 128
    %v2369 = vpop.trf.xlu0
    %v2370 = vpop.trf.xlu0
    %v2371 = vpop.trf.xlu0
    %v2372 = vpop.trf.xlu0
    %v2373 = vpop.trf.xlu0
    %v2374 = vpop.trf.xlu0
    %v2375 = vpop.trf.xlu0
    %v2376 = vpop.trf.xlu0
    %v2377 = vpop.trf.xlu0
    %v2378 = vpop.trf.xlu0
    %v2379 = vpop.trf.xlu0
    %v2380 = vpop.trf.xlu0
    %v2381 = vpop.trf.xlu0
    %v2382 = vpop.trf.xlu0
    %v2383 = vpop.trf.xlu0
    %v2384 = vpop.trf.xlu0
    %2385 = vxpose.xlu0.b32.start [1/16] %v2331, 128
    %2386 = vxpose.xlu0.b32.cont [2/16] %v2348, 128
    %2387 = vxpose.xlu0.b32.cont [3/16] 0.0, 128
    %2388 = vxpose.xlu0.b32.cont [4/16] 0.0, 128
    %2389 = vxpose.xlu0.b32.cont [5/16] 0.0, 128
    %2390 = vxpose.xlu0.b32.cont [6/16] 0.0, 128
    %2391 = vxpose.xlu0.b32.cont [7/16] 0.0, 128
    %2392 = vxpose.xlu0.b32.cont [8/16] 0.0, 128
    %2393 = vxpose.xlu0.b32.cont [9/16] 0.0, 128
    %2394 = vxpose.xlu0.b32.cont [10/16] 0.0, 128
    %2395 = vxpose.xlu0.b32.cont [11/16] 0.0, 128
    %2396 = vxpose.xlu0.b32.cont [12/16] 0.0, 128
    %2397 = vxpose.xlu0.b32.cont [13/16] 0.0, 128
    %2398 = vxpose.xlu0.b32.cont [14/16] 0.0, 128
    %2399 = vxpose.xlu0.b32.cont [15/16] 0.0, 128
    %2400 = vxpose.xlu0.b32.end [16/16] 0.0, 128
    %v2401 = vpop.trf.xlu0
    %v2402 = vpop.trf.xlu0
    %v2403 = vpop.trf.xlu0
    %v2404 = vpop.trf.xlu0
    %v2405 = vpop.trf.xlu0
    %v2406 = vpop.trf.xlu0
    %v2407 = vpop.trf.xlu0
    %v2408 = vpop.trf.xlu0
    %v2409 = vpop.trf.xlu0
    %v2410 = vpop.trf.xlu0
    %v2411 = vpop.trf.xlu0
    %v2412 = vpop.trf.xlu0
    %v2413 = vpop.trf.xlu0
    %v2414 = vpop.trf.xlu0
    %v2415 = vpop.trf.xlu0
    %v2416 = vpop.trf.xlu0
    %v2417 = vpack.c.bf16 %v2370, %v2369
    %v2418 = vpack.c.bf16 %v2402, %v2401
    %v2419 = vld [vmem:[#allocation2 + $0xb0] sm:$0xff]
    %v2420 = vld [vmem:[#allocation2 + $0xc0] sm:$0xff]
    %v2421 = vpack.c.bf16 %v2420, %v2419
    %v2422 = vld [vmem:[#allocation2 + $0xd0] ss:$0 sm:$0xff]
    %v2424 = vsel %vm282, %v2417, 0
    %v2427 = vsel %vm282, %v2418, 0
    %2429 = vmatprep.subr.bf16.mxu0 0
    %2430 = vmatpush1.bf16.msra.mxu0 0
    %2431 = vmatprep.subr.bf16.mxu0 0
    %2432 = vmatpush1.bf16.msra.mxu0 0
    %2433 = vmatprep.subr.bf16.mxu0 0
    %2434 = vmatpush1.bf16.msra.mxu0 0
    %2435 = vmatprep.subr.bf16.mxu0 0
    %2436 = vmatpush1.bf16.msra.mxu0 0
    %2437 = vmatprep.subr.bf16.mxu0 0
    %2438 = vmatpush1.bf16.msra.mxu0 0
    %2439 = vmatprep.subr.bf16.mxu0 0
    %2440 = vmatpush1.bf16.msra.mxu0 0
    %2441 = vmatprep.subr.bf16.mxu0 0
    %2442 = vmatpush1.bf16.msra.mxu0 0
    %2443 = vmatprep.subr.bf16.mxu0 0
    %2444 = vmatpush1.bf16.msra.mxu0 %v2421
    %2445 = vmatprep.subr.bf16.mxu0 0
    %2446 = vmatpush2.bf16.msra.mxu0 0
    %2447 = vmatprep.subr.bf16.mxu0 0
    %2448 = vmatpush2.bf16.msra.mxu0 0
    %2449 = vmatprep.subr.bf16.mxu0 0
    %2450 = vmatpush2.bf16.msra.mxu0 0
    %2451 = vmatprep.subr.bf16.mxu0 0
    %2452 = vmatpush2.bf16.msra.mxu0 0
    %2453 = vmatprep.subr.bf16.mxu0 0
    %2454 = vmatpush2.bf16.msra.mxu0 0
    %2455 = vmatprep.subr.bf16.mxu0 0
    %2456 = vmatpush2.bf16.msra.mxu0 0
    %2457 = vmatprep.subr.bf16.mxu0 0
    %2458 = vmatpush2.bf16.msra.mxu0 0
    %2459 = vmatprep.subr.bf16.mxu0 0
    %2460 = vmatpush2.bf16.msra.mxu0 0
    %2461 = vmatprep.mubr.bf16.mxu0 0
    %2462 = vmatmul.mubr.bf16.gmra.mxu0 %v2424
    %v2463 = vpop.f32.mrf.mxu0
    %v2464 = vadd.f32 %v2422, %v2463
    %v2465 = vpop.f32.mrf.mxu0
    %v2466 = vpop.f32.mrf.mxu0
    %v2467 = vadd.f32 %v2422, %v2466
    %v2468 = vpop.f32.mrf.mxu0
    %2469 = vmatprep.mubr.bf16.mxu0 0
    %2470 = vmatmul.mubr.bf16.gmra.mxu0 %v2427
    %v2471 = vpop.f32.mrf.mxu0
    %v2472 = vadd.f32 %v2422, %v2471
    %v2473 = vpop.f32.mrf.mxu0
    %v2474 = vpop.f32.mrf.mxu0
    %v2475 = vadd.f32 %v2422, %v2474
    %v2476 = vpop.f32.mrf.mxu0
    %2477 = vdwg.mxu0
    %v2478 = vld [vmem:[#allocation2 + $0xe0] sm:$0xff]
    %v2479 = vld [vmem:[#allocation2 + $0xe8] sm:$0xff]
    %v2480 = vld [vmem:[#allocation2 + $0xf0] sm:$0xff]
    %v2481 = vld [vmem:[#allocation2 + $0xf8] sm:$0xff]
    %v2482 = vld [vmem:[#allocation2 + $0x100] sm:$0xff]
    %v2483 = vld [vmem:[#allocation2 + $0x108] sm:$0xff]
    %v2484 = vld [vmem:[#allocation2 + $0x110] sm:$0xff]
    %v2485 = vld [vmem:[#allocation2 + $0x118] sm:$0xff]
    %v2486 = vld [vmem:[#allocation2 + $0x120] sm:$0xff]
    %v2487 = vld [vmem:[#allocation2 + $0x128] sm:$0xff]
    %v2488 = vld [vmem:[#allocation2 + $0x130] sm:$0xff]
    %v2489 = vld [vmem:[#allocation2 + $0x138] sm:$0xff]
    %v2490 = vld [vmem:[#allocation2 + $0x140] sm:$0xff]
    %v2491 = vld [vmem:[#allocation2 + $0x148] sm:$0xff]
    %v2492 = vld [vmem:[#allocation2 + $0x150] sm:$0xff]
    %v2493 = vld [vmem:[#allocation2 + $0x158] sm:$0xff]
    %v2494 = vpack.c.bf16 %v2480, %v2478
    %v2495 = vpack.c.bf16 %v2481, %v2479
    %v2496 = vpack.c.bf16 %v2484, %v2482
    %v2497 = vpack.c.bf16 %v2485, %v2483
    %v2498 = vpack.c.bf16 %v2488, %v2486
    %v2499 = vpack.c.bf16 %v2489, %v2487
    %v2500 = vpack.c.bf16 %v2492, %v2490
    %v2501 = vpack.c.bf16 %v2493, %v2491
    %v2502 = vld [vmem:[#allocation2 + $0x160] ss:$0 sm:$0xff]
    %v2503 = vpack.c.bf16 0.0, 0.0
    %vm2504 = vcmask 523264
    %v2506 = vsel %vm2504, %v2503, 0
    %2508 = vmatprep.subr.bf16.mxu0 0
    %2509 = vmatpush1.bf16.msra.mxu0 0
    %2510 = vmatprep.subr.bf16.mxu0 0
    %2511 = vmatpush1.bf16.msra.mxu0 0
    %2512 = vmatprep.subr.bf16.mxu0 0
    %2513 = vmatpush1.bf16.msra.mxu0 0
    %2514 = vmatprep.subr.bf16.mxu0 0
    %2515 = vmatpush1.bf16.msra.mxu0 0
    %2516 = vmatprep.subr.bf16.mxu0 %v2501
    %2517 = vmatpush1.bf16.msra.mxu0 %v2500
    %2518 = vmatprep.subr.bf16.mxu0 %v2499
    %2519 = vmatpush1.bf16.msra.mxu0 %v2498
    %2520 = vmatprep.subr.bf16.mxu0 %v2497
    %2521 = vmatpush1.bf16.msra.mxu0 %v2496
    %2522 = vmatprep.subr.bf16.mxu0 %v2495
    %2523 = vmatpush1.bf16.msra.mxu0 %v2494
    %2524 = vmatprep.subr.bf16.mxu0 0
    %2525 = vmatpush2.bf16.msra.mxu0 0
    %2526 = vmatprep.subr.bf16.mxu0 0
    %2527 = vmatpush2.bf16.msra.mxu0 0
    %2528 = vmatprep.subr.bf16.mxu0 0
    %2529 = vmatpush2.bf16.msra.mxu0 0
    %2530 = vmatprep.subr.bf16.mxu0 0
    %2531 = vmatpush2.bf16.msra.mxu0 0
    %2532 = vmatprep.subr.bf16.mxu0 0
    %2533 = vmatpush2.bf16.msra.mxu0 0
    %2534 = vmatprep.subr.bf16.mxu0 0
    %2535 = vmatpush2.bf16.msra.mxu0 0
    %2536 = vmatprep.subr.bf16.mxu0 0
    %2537 = vmatpush2.bf16.msra.mxu0 0
    %2538 = vmatprep.subr.bf16.mxu0 0
    %2539 = vmatpush2.bf16.msra.mxu0 0
    %2540 = vmatprep.mubr.bf16.mxu0 0
    %2541 = vmatmul.mubr.bf16.gmra.mxu0 %v2506
    %v2542 = vpop.f32.mrf.mxu0
    %v2543 = vadd.f32 0.0, %v2542
    %v2544 = vpop.f32.mrf.mxu0
    %v2545 = vpop.f32.mrf.mxu0
    %v2546 = vpop.f32.mrf.mxu0
    %2547 = vdwg.mxu0
    %v2549 = vrot.slane %v2543, 1
    %v2552 = vadd.f32 %v2464, %v2543
    %v2553 = vadd.f32 %v2472, %v2549
    %v2554 = vxor.u32 %v2552, 2147483648
    %v2555 = vxor.u32 %v2553, 2147483648
    %v2556 = vmul.f32 %v2554, 1.442695
    %v2557 = vpow.pop %v2556
    %v2558 = vmul.f32 %v2555, 1.442695
    %v2559 = vpow.pop %v2558
    %v2560 = vadd.f32 %v2557, 1.0
    %v2561 = vadd.f32 %v2559, 1.0
    %v2562 = vrcp.pop %v2560
    %v2563 = vmul.f32 1.0, %v2562
    %v2564 = vrcp.pop %v2561
    %v2565 = vmul.f32 1.0, %v2564
    %v2566 = vmul.f32 %v2563, 2.0
    %v2567 = vmul.f32 %v2565, 2.0
    %v2568 = vsub.f32 %v2566, 1.0
    %v2569 = vsub.f32 %v2567, 1.0
    %v2570 = vmul.f32 %v2563, 0.0
    %v2571 = vmul.f32 %v2565, 0.0
    %2574 = vrot.lane.b32.xlu0 %v2568, 64
    %v2575 = vpop.permute.xlu0 %2574
    %2576 = vrot.lane.b32.xlu0 %v2569, 64
    %v2577 = vpop.permute.xlu0 %2576
    %v2580 = vmul.f32 %v2563, %v2575
    %v2581 = vmul.f32 %v2565, %v2577
    %2584 = vrot.lane.b32.xlu0 %v2580, 32
    %v2585 = vpop.permute.xlu0 %2584
    %2586 = vrot.lane.b32.xlu0 %v2581, 32
    %v2587 = vpop.permute.xlu0 %2586
    %v2590 = vadd.f32 %v2570, %v2585
    %v2591 = vadd.f32 %v2571, %v2587
    %v2592 = vtanh.pop %v2590
    %v2593 = vtanh.pop %v2591
    %2596 = vrot.lane.b32.xlu0 %v2592, 64
    %v2597 = vpop.permute.xlu0 %2596
    %2598 = vrot.lane.b32.xlu0 %v2593, 64
    %v2599 = vpop.permute.xlu0 %2598
    %v2602 = vmul.f32 %v2563, %v2597
    %v2603 = vmul.f32 %v2565, %v2599
    %v2606 = vrot.slane %v2603, 7
    %vm2607 = vcmask 1041409
    %v2608 = vsel %vm2607, %v2606, %v2602
    %2609 = vrot.lane.b32.xlu0 %v2608, 32
    %v2610 = vpop.permute.xlu0 %2609
    %v2612 = vsel %vm1422, %v2610, 0.0
    %v2613 = vpack.c.bf16 %v2612, %v2612
    %v2615 = vsel %vm2504, %v2613, 0
    %2617 = vmatprep.subr.bf16.mxu0 0
    %2618 = vmatpush1.bf16.msra.mxu0 0
    %2619 = vmatprep.subr.bf16.mxu0 0
    %2620 = vmatpush1.bf16.msra.mxu0 0
    %2621 = vmatprep.subr.bf16.mxu0 0
    %2622 = vmatpush1.bf16.msra.mxu0 0
    %2623 = vmatprep.subr.bf16.mxu0 0
    %2624 = vmatpush1.bf16.msra.mxu0 0
    %2625 = vmatprep.subr.bf16.mxu0 %v2501
    %2626 = vmatpush1.bf16.msra.mxu0 %v2500
    %2627 = vmatprep.subr.bf16.mxu0 %v2499
    %2628 = vmatpush1.bf16.msra.mxu0 %v2498
    %2629 = vmatprep.subr.bf16.mxu0 %v2497
    %2630 = vmatpush1.bf16.msra.mxu0 %v2496
    %2631 = vmatprep.subr.bf16.mxu0 %v2495
    %2632 = vmatpush1.bf16.msra.mxu0 %v2494
    %2633 = vmatprep.subr.bf16.mxu0 0
    %2634 = vmatpush2.bf16.msra.mxu0 0
    %2635 = vmatprep.subr.bf16.mxu0 0
    %2636 = vmatpush2.bf16.msra.mxu0 0
    %2637 = vmatprep.subr.bf16.mxu0 0
    %2638 = vmatpush2.bf16.msra.mxu0 0
    %2639 = vmatprep.subr.bf16.mxu0 0
    %2640 = vmatpush2.bf16.msra.mxu0 0
    %2641 = vmatprep.subr.bf16.mxu0 0
    %2642 = vmatpush2.bf16.msra.mxu0 0
    %2643 = vmatprep.subr.bf16.mxu0 0
    %2644 = vmatpush2.bf16.msra.mxu0 0
    %2645 = vmatprep.subr.bf16.mxu0 0
    %2646 = vmatpush2.bf16.msra.mxu0 0
    %2647 = vmatprep.subr.bf16.mxu0 0
    %2648 = vmatpush2.bf16.msra.mxu0 0
    %2649 = vmatprep.mubr.bf16.mxu0 0
    %2650 = vmatmul.mubr.bf16.gmra.mxu0 %v2615
    %v2651 = vpop.f32.mrf.mxu0
    %v2652 = vadd.f32 0.0, %v2651
    %v2653 = vpop.f32.mrf.mxu0
    %v2654 = vadd.f32 0.0, %v2653
    %v2655 = vpop.f32.mrf.mxu0
    %v2656 = vpop.f32.mrf.mxu0
    %2657 = vdwg.mxu0
    %v2658 = vadd.f32 %v2502, %v2654
    %v2659 = vxor.u32 %v2658, 2147483648
    %v2660 = vmul.f32 %v2659, 1.442695
    %v2661 = vpow.pop %v2660
    %v2662 = vadd.f32 %v2661, 1.0
    %v2663 = vrcp.pop %v2662
    %v2664 = vmul.f32 1.0, %v2663
    %v2665 = vmul.f32 %v2664, 2.0
    %v2666 = vsub.f32 %v2665, 1.0
    %v2667 = vmul.f32 %v2664, 0.0
    %2669 = vrot.lane.b32.xlu0 %v2666, 64
    %v2670 = vpop.permute.xlu0 %2669
    %v2672 = vmul.f32 %v2664, %v2670
    %2674 = vrot.lane.b32.xlu0 %v2672, 32
    %v2675 = vpop.permute.xlu0 %2674
    %v2677 = vadd.f32 %v2667, %v2675
    %v2678 = vtanh.pop %v2677
    %2680 = vrot.lane.b32.xlu0 %v2678, 64
    %v2681 = vpop.permute.xlu0 %2680
    %v2683 = vmul.f32 %v2664, %v2681
    %v2685 = vrot.slane %v2652, 7
    %v2688 = vadd.f32 %v2464, %v2685
    %v2689 = vadd.f32 %v2472, %v2652
    %v2690 = vxor.u32 %v2688, 2147483648
    %v2691 = vxor.u32 %v2689, 2147483648
    %v2692 = vmul.f32 %v2690, 1.442695
    %v2693 = vpow.pop %v2692
    %v2694 = vmul.f32 %v2691, 1.442695
    %v2695 = vpow.pop %v2694
    %v2696 = vadd.f32 %v2693, 1.0
    %v2697 = vadd.f32 %v2695, 1.0
    %v2698 = vrcp.pop %v2696
    %v2699 = vmul.f32 1.0, %v2698
    %v2700 = vrcp.pop %v2697
    %v2701 = vmul.f32 1.0, %v2700
    %v2702 = vmul.f32 %v2699, 2.0
    %v2703 = vmul.f32 %v2701, 2.0
    %v2704 = vsub.f32 %v2702, 1.0
    %v2705 = vsub.f32 %v2703, 1.0
    %v2708 = vrot.slane %v2590, 7
    %v2709 = vrot.slane %v2591, 7
    %v2712 = vmul.f32 %v2699, %v2708
    %v2713 = vmul.f32 %v2701, %v2709
    %2716 = vrot.lane.b32.xlu0 %v2704, 64
    %v2717 = vpop.permute.xlu0 %2716
    %2718 = vrot.lane.b32.xlu0 %v2705, 64
    %v2719 = vpop.permute.xlu0 %2718
    %v2722 = vmul.f32 %v2699, %v2717
    %v2723 = vmul.f32 %v2701, %v2719
    %2726 = vrot.lane.b32.xlu0 %v2722, 32
    %v2727 = vpop.permute.xlu0 %2726
    %2728 = vrot.lane.b32.xlu0 %v2723, 32
    %v2729 = vpop.permute.xlu0 %2728
    %v2732 = vadd.f32 %v2712, %v2727
    %v2733 = vadd.f32 %v2713, %v2729
    %v2734 = vtanh.pop %v2732
    %v2735 = vtanh.pop %v2733
    %2738 = vrot.lane.b32.xlu0 %v2734, 64
    %v2739 = vpop.permute.xlu0 %2738
    %2740 = vrot.lane.b32.xlu0 %v2735, 64
    %v2741 = vpop.permute.xlu0 %2740
    %v2744 = vmul.f32 %v2699, %v2739
    %v2745 = vmul.f32 %v2701, %v2741
    %v2748 = vrot.slane %v2745, 7
    %vm2749 = vcmask 1042434
    %v2750 = vsel %vm2749, %v2748, %v2744
    %2751 = vrot.lane.b32.xlu0 %v2750, 32
    %v2752 = vpop.permute.xlu0 %2751
    %v2755 = vrot.slane %v2683, 7
    %2756 = vrot.lane.b32.xlu0 %v2755, 64
    %v2757 = vpop.permute.xlu0 %2756
    %v2759 = vsel %vm1422, %v2752, %v2757
    %v2760 = vpack.c.bf16 %v2759, %v2759
    %v2762 = vshrl.u32 %v2760, 16
    %v2764 = vshll.u32 %v2760, 16
    %v2766 = vrot.slane %v2764, 1
    %v2767 = vor.u32 %v2762, %v2766
    %v2769 = vsel %vm2504, %v2767, 0
    %2771 = vmatprep.subr.bf16.mxu0 0
    %2772 = vmatpush1.bf16.msra.mxu0 0
    %2773 = vmatprep.subr.bf16.mxu0 0
    %2774 = vmatpush1.bf16.msra.mxu0 0
    %2775 = vmatprep.subr.bf16.mxu0 0
    %2776 = vmatpush1.bf16.msra.mxu0 0
    %2777 = vmatprep.subr.bf16.mxu0 0
    %2778 = vmatpush1.bf16.msra.mxu0 0
    %2779 = vmatprep.subr.bf16.mxu0 %v2501
    %2780 = vmatpush1.bf16.msra.mxu0 %v2500
    %2781 = vmatprep.subr.bf16.mxu0 %v2499
    %2782 = vmatpush1.bf16.msra.mxu0 %v2498
    %2783 = vmatprep.subr.bf16.mxu0 %v2497
    %2784 = vmatpush1.bf16.msra.mxu0 %v2496
    %2785 = vmatprep.subr.bf16.mxu0 %v2495
    %2786 = vmatpush1.bf16.msra.mxu0 %v2494
    %2787 = vmatprep.subr.bf16.mxu0 0
    %2788 = vmatpush2.bf16.msra.mxu0 0
    %2789 = vmatprep.subr.bf16.mxu0 0
    %2790 = vmatpush2.bf16.msra.mxu0 0
    %2791 = vmatprep.subr.bf16.mxu0 0
    %2792 = vmatpush2.bf16.msra.mxu0 0
    %2793 = vmatprep.subr.bf16.mxu0 0
    %2794 = vmatpush2.bf16.msra.mxu0 0
    %2795 = vmatprep.subr.bf16.mxu0 0
    %2796 = vmatpush2.bf16.msra.mxu0 0
    %2797 = vmatprep.subr.bf16.mxu0 0
    %2798 = vmatpush2.bf16.msra.mxu0 0
    %2799 = vmatprep.subr.bf16.mxu0 0
    %2800 = vmatpush2.bf16.msra.mxu0 0
    %2801 = vmatprep.subr.bf16.mxu0 0
    %2802 = vmatpush2.bf16.msra.mxu0 0
    %2803 = vmatprep.mubr.bf16.mxu0 0
    %2804 = vmatmul.mubr.bf16.gmra.mxu0 %v2769
    %v2805 = vpop.f32.mrf.mxu0
    %v2806 = vadd.f32 0.0, %v2805
    %v2807 = vpop.f32.mrf.mxu0
    %v2808 = vadd.f32 0.0, %v2807
    %v2809 = vpop.f32.mrf.mxu0
    %v2810 = vpop.f32.mrf.mxu0
    %2811 = vdwg.mxu0
    %v2812 = vadd.f32 %v2502, %v2808
    %v2813 = vxor.u32 %v2812, 2147483648
    %v2814 = vmul.f32 %v2813, 1.442695
    %v2815 = vpow.pop %v2814
    %v2816 = vadd.f32 %v2815, 1.0
    %v2817 = vrcp.pop %v2816
    %v2818 = vmul.f32 1.0, %v2817
    %v2819 = vmul.f32 %v2818, 2.0
    %v2820 = vsub.f32 %v2819, 1.0
    %v2821 = vmul.f32 %v2818, %v2677
    %2823 = vrot.lane.b32.xlu0 %v2820, 64
    %v2824 = vpop.permute.xlu0 %2823
    %v2826 = vmul.f32 %v2818, %v2824
    %2828 = vrot.lane.b32.xlu0 %v2826, 32
    %v2829 = vpop.permute.xlu0 %2828
    %v2831 = vadd.f32 %v2821, %v2829
    %v2832 = vtanh.pop %v2831
    %2834 = vrot.lane.b32.xlu0 %v2832, 64
    %v2835 = vpop.permute.xlu0 %2834
    %v2837 = vmul.f32 %v2818, %v2835
    %v2839 = vrot.slane %v2806, 6
    %v2840 = vrot.slane %v2806, 7
    %v2843 = vadd.f32 %v2464, %v2839
    %v2844 = vadd.f32 %v2472, %v2840
    %v2845 = vxor.u32 %v2843, 2147483648
    %v2846 = vxor.u32 %v2844, 2147483648
    %v2847 = vmul.f32 %v2845, 1.442695
    %v2848 = vpow.pop %v2847
    %v2849 = vmul.f32 %v2846, 1.442695
    %v2850 = vpow.pop %v2849
    %v2851 = vadd.f32 %v2848, 1.0
    %v2852 = vadd.f32 %v2850, 1.0
    %v2853 = vrcp.pop %v2851
    %v2854 = vmul.f32 1.0, %v2853
    %v2855 = vrcp.pop %v2852
    %v2856 = vmul.f32 1.0, %v2855
    %v2857 = vmul.f32 %v2854, 2.0
    %v2858 = vmul.f32 %v2856, 2.0
    %v2859 = vsub.f32 %v2857, 1.0
    %v2860 = vsub.f32 %v2858, 1.0
    %v2863 = vrot.slane %v2732, 7
    %v2864 = vrot.slane %v2733, 7
    %v2867 = vmul.f32 %v2854, %v2863
    %v2868 = vmul.f32 %v2856, %v2864
    %2871 = vrot.lane.b32.xlu0 %v2859, 64
    %v2872 = vpop.permute.xlu0 %2871
    %2873 = vrot.lane.b32.xlu0 %v2860, 64
    %v2874 = vpop.permute.xlu0 %2873
    %v2877 = vmul.f32 %v2854, %v2872
    %v2878 = vmul.f32 %v2856, %v2874
    %2881 = vrot.lane.b32.xlu0 %v2877, 32
    %v2882 = vpop.permute.xlu0 %2881
    %2883 = vrot.lane.b32.xlu0 %v2878, 32
    %v2884 = vpop.permute.xlu0 %2883
    %v2887 = vadd.f32 %v2867, %v2882
    %v2888 = vadd.f32 %v2868, %v2884
    %v2889 = vtanh.pop %v2887
    %v2890 = vtanh.pop %v2888
    %2893 = vrot.lane.b32.xlu0 %v2889, 64
    %v2894 = vpop.permute.xlu0 %2893
    %2895 = vrot.lane.b32.xlu0 %v2890, 64
    %v2896 = vpop.permute.xlu0 %2895
    %v2899 = vmul.f32 %v2854, %v2894
    %v2900 = vmul.f32 %v2856, %v2896
    %v2903 = vrot.slane %v2900, 7
    %vm2904 = vcmask 1043459
    %v2905 = vsel %vm2904, %v2903, %v2899
    %2906 = vrot.lane.b32.xlu0 %v2905, 32
    %v2907 = vpop.permute.xlu0 %2906
    %v2910 = vrot.slane %v2837, 6
    %2911 = vrot.lane.b32.xlu0 %v2910, 64
    %v2912 = vpop.permute.xlu0 %2911
    %v2914 = vsel %vm1422, %v2907, %v2912
    %v2915 = vpack.c.bf16 %v2914, %v2914
    %v2917 = vrot.slane %v2915, 1
    %v2919 = vsel %vm2504, %v2917, 0
    %2921 = vmatprep.subr.bf16.mxu0 0
    %2922 = vmatpush1.bf16.msra.mxu0 0
    %2923 = vmatprep.subr.bf16.mxu0 0
    %2924 = vmatpush1.bf16.msra.mxu0 0
    %2925 = vmatprep.subr.bf16.mxu0 0
    %2926 = vmatpush1.bf16.msra.mxu0 0
    %2927 = vmatprep.subr.bf16.mxu0 0
    %2928 = vmatpush1.bf16.msra.mxu0 0
    %2929 = vmatprep.subr.bf16.mxu0 %v2501
    %2930 = vmatpush1.bf16.msra.mxu0 %v2500
    %2931 = vmatprep.subr.bf16.mxu0 %v2499
    %2932 = vmatpush1.bf16.msra.mxu0 %v2498
    %2933 = vmatprep.subr.bf16.mxu0 %v2497
    %2934 = vmatpush1.bf16.msra.mxu0 %v2496
    %2935 = vmatprep.subr.bf16.mxu0 %v2495
    %2936 = vmatpush1.bf16.msra.mxu0 %v2494
    %2937 = vmatprep.subr.bf16.mxu0 0
    %2938 = vmatpush2.bf16.msra.mxu0 0
    %2939 = vmatprep.subr.bf16.mxu0 0
    %2940 = vmatpush2.bf16.msra.mxu0 0
    %2941 = vmatprep.subr.bf16.mxu0 0
    %2942 = vmatpush2.bf16.msra.mxu0 0
    %2943 = vmatprep.subr.bf16.mxu0 0
    %2944 = vmatpush2.bf16.msra.mxu0 0
    %2945 = vmatprep.subr.bf16.mxu0 0
    %2946 = vmatpush2.bf16.msra.mxu0 0
    %2947 = vmatprep.subr.bf16.mxu0 0
    %2948 = vmatpush2.bf16.msra.mxu0 0
    %2949 = vmatprep.subr.bf16.mxu0 0
    %2950 = vmatpush2.bf16.msra.mxu0 0
    %2951 = vmatprep.subr.bf16.mxu0 0
    %2952 = vmatpush2.bf16.msra.mxu0 0
    %2953 = vmatprep.mubr.bf16.mxu0 0
    %2954 = vmatmul.mubr.bf16.gmra.mxu0 %v2919
    %v2955 = vpop.f32.mrf.mxu0
    %v2956 = vadd.f32 0.0, %v2955
    %v2957 = vpop.f32.mrf.mxu0
    %v2958 = vadd.f32 0.0, %v2957
    %v2959 = vpop.f32.mrf.mxu0
    %v2960 = vpop.f32.mrf.mxu0
    %2961 = vdwg.mxu0
    %v2962 = vadd.f32 %v2502, %v2958
    %v2963 = vxor.u32 %v2962, 2147483648
    %v2964 = vmul.f32 %v2963, 1.442695
    %v2965 = vpow.pop %v2964
    %v2966 = vadd.f32 %v2965, 1.0
    %v2967 = vrcp.pop %v2966
    %v2968 = vmul.f32 1.0, %v2967
    %v2969 = vmul.f32 %v2968, 2.0
    %v2970 = vsub.f32 %v2969, 1.0
    %v2971 = vmul.f32 %v2968, %v2831
    %2973 = vrot.lane.b32.xlu0 %v2970, 64
    %v2974 = vpop.permute.xlu0 %2973
    %v2976 = vmul.f32 %v2968, %v2974
    %2978 = vrot.lane.b32.xlu0 %v2976, 32
    %v2979 = vpop.permute.xlu0 %2978
    %v2981 = vadd.f32 %v2971, %v2979
    %v2982 = vtanh.pop %v2981
    %2984 = vrot.lane.b32.xlu0 %v2982, 64
    %v2985 = vpop.permute.xlu0 %2984
    %v2987 = vmul.f32 %v2968, %v2985
    %v2989 = vrot.slane %v2956, 5
    %v2990 = vrot.slane %v2956, 6
    %v2993 = vadd.f32 %v2464, %v2989
    %v2994 = vadd.f32 %v2472, %v2990
    %v2995 = vxor.u32 %v2993, 2147483648
    %v2996 = vxor.u32 %v2994, 2147483648
    %v2997 = vmul.f32 %v2995, 1.442695
    %v2998 = vpow.pop %v2997
    %v2999 = vmul.f32 %v2996, 1.442695
    %v3000 = vpow.pop %v2999
    %v3001 = vadd.f32 %v2998, 1.0
    %v3002 = vadd.f32 %v3000, 1.0
    %v3003 = vrcp.pop %v3001
    %v3004 = vmul.f32 1.0, %v3003
    %v3005 = vrcp.pop %v3002
    %v3006 = vmul.f32 1.0, %v3005
    %v3007 = vmul.f32 %v3004, 2.0
    %v3008 = vmul.f32 %v3006, 2.0
    %v3009 = vsub.f32 %v3007, 1.0
    %v3010 = vsub.f32 %v3008, 1.0
    %v3013 = vrot.slane %v2887, 7
    %v3014 = vrot.slane %v2888, 7
    %v3017 = vmul.f32 %v3004, %v3013
    %v3018 = vmul.f32 %v3006, %v3014
    %3021 = vrot.lane.b32.xlu0 %v3009, 64
    %v3022 = vpop.permute.xlu0 %3021
    %3023 = vrot.lane.b32.xlu0 %v3010, 64
    %v3024 = vpop.permute.xlu0 %3023
    %v3027 = vmul.f32 %v3004, %v3022
    %v3028 = vmul.f32 %v3006, %v3024
    %3031 = vrot.lane.b32.xlu0 %v3027, 32
    %v3032 = vpop.permute.xlu0 %3031
    %3033 = vrot.lane.b32.xlu0 %v3028, 32
    %v3034 = vpop.permute.xlu0 %3033
    %v3037 = vadd.f32 %v3017, %v3032
    %v3038 = vadd.f32 %v3018, %v3034
    %v3039 = vtanh.pop %v3037
    %v3040 = vtanh.pop %v3038
    %3043 = vrot.lane.b32.xlu0 %v3039, 64
    %v3044 = vpop.permute.xlu0 %3043
    %3045 = vrot.lane.b32.xlu0 %v3040, 64
    %v3046 = vpop.permute.xlu0 %3045
    %v3049 = vmul.f32 %v3004, %v3044
    %v3050 = vmul.f32 %v3006, %v3046
    %v3053 = vrot.slane %v3050, 7
    %vm3054 = vcmask 1044484
    %v3055 = vsel %vm3054, %v3053, %v3049
    %3056 = vrot.lane.b32.xlu0 %v3055, 32
    %v3057 = vpop.permute.xlu0 %3056
    %v3060 = vrot.slane %v2987, 5
    %3061 = vrot.lane.b32.xlu0 %v3060, 64
    %v3062 = vpop.permute.xlu0 %3061
    %v3064 = vsel %vm1422, %v3057, %v3062
    %v3065 = vpack.c.bf16 %v3064, %v3064
    %v3067 = vshrl.u32 %v3065, 16
    %v3069 = vrot.slane %v3067, 1
    %v3070 = vshll.u32 %v3065, 16
    %v3072 = vrot.slane %v3070, 2
    %v3073 = vor.u32 %v3069, %v3072
    %v3075 = vsel %vm2504, %v3073, 0
    %3077 = vmatprep.subr.bf16.mxu0 0
    %3078 = vmatpush1.bf16.msra.mxu0 0
    %3079 = vmatprep.subr.bf16.mxu0 0
    %3080 = vmatpush1.bf16.msra.mxu0 0
    %3081 = vmatprep.subr.bf16.mxu0 0
    %3082 = vmatpush1.bf16.msra.mxu0 0
    %3083 = vmatprep.subr.bf16.mxu0 0
    %3084 = vmatpush1.bf16.msra.mxu0 0
    %3085 = vmatprep.subr.bf16.mxu0 %v2501
    %3086 = vmatpush1.bf16.msra.mxu0 %v2500
    %3087 = vmatprep.subr.bf16.mxu0 %v2499
    %3088 = vmatpush1.bf16.msra.mxu0 %v2498
    %3089 = vmatprep.subr.bf16.mxu0 %v2497
    %3090 = vmatpush1.bf16.msra.mxu0 %v2496
    %3091 = vmatprep.subr.bf16.mxu0 %v2495
    %3092 = vmatpush1.bf16.msra.mxu0 %v2494
    %3093 = vmatprep.subr.bf16.mxu0 0
    %3094 = vmatpush2.bf16.msra.mxu0 0
    %3095 = vmatprep.subr.bf16.mxu0 0
    %3096 = vmatpush2.bf16.msra.mxu0 0
    %3097 = vmatprep.subr.bf16.mxu0 0
    %3098 = vmatpush2.bf16.msra.mxu0 0
    %3099 = vmatprep.subr.bf16.mxu0 0
    %3100 = vmatpush2.bf16.msra.mxu0 0
    %3101 = vmatprep.subr.bf16.mxu0 0
    %3102 = vmatpush2.bf16.msra.mxu0 0
    %3103 = vmatprep.subr.bf16.mxu0 0
    %3104 = vmatpush2.bf16.msra.mxu0 0
    %3105 = vmatprep.subr.bf16.mxu0 0
    %3106 = vmatpush2.bf16.msra.mxu0 0
    %3107 = vmatprep.subr.bf16.mxu0 0
    %3108 = vmatpush2.bf16.msra.mxu0 0
    %3109 = vmatprep.mubr.bf16.mxu0 0
    %3110 = vmatmul.mubr.bf16.gmra.mxu0 %v3075
    %v3111 = vpop.f32.mrf.mxu0
    %v3112 = vadd.f32 0.0, %v3111
    %v3113 = vpop.f32.mrf.mxu0
    %v3114 = vadd.f32 0.0, %v3113
    %v3115 = vpop.f32.mrf.mxu0
    %v3116 = vpop.f32.mrf.mxu0
    %3117 = vdwg.mxu0
    %v3118 = vadd.f32 %v2502, %v3114
    %v3119 = vxor.u32 %v3118, 2147483648
    %v3120 = vmul.f32 %v3119, 1.442695
    %v3121 = vpow.pop %v3120
    %v3122 = vadd.f32 %v3121, 1.0
    %v3123 = vrcp.pop %v3122
    %v3124 = vmul.f32 1.0, %v3123
    %v3125 = vmul.f32 %v3124, 2.0
    %v3126 = vsub.f32 %v3125, 1.0
    %v3127 = vmul.f32 %v3124, %v2981
    %3129 = vrot.lane.b32.xlu0 %v3126, 64
    %v3130 = vpop.permute.xlu0 %3129
    %v3132 = vmul.f32 %v3124, %v3130
    %3134 = vrot.lane.b32.xlu0 %v3132, 32
    %v3135 = vpop.permute.xlu0 %3134
    %v3137 = vadd.f32 %v3127, %v3135
    %v3138 = vtanh.pop %v3137
    %3140 = vrot.lane.b32.xlu0 %v3138, 64
    %v3141 = vpop.permute.xlu0 %3140
    %v3143 = vmul.f32 %v3124, %v3141
    %v3145 = vrot.slane %v3112, 4
    %v3146 = vrot.slane %v3112, 5
    %v3149 = vadd.f32 %v2464, %v3145
    %v3150 = vadd.f32 %v2472, %v3146
    %v3151 = vxor.u32 %v3149, 2147483648
    %v3152 = vxor.u32 %v3150, 2147483648
    %v3153 = vmul.f32 %v3151, 1.442695
    %v3154 = vpow.pop %v3153
    %v3155 = vmul.f32 %v3152, 1.442695
    %v3156 = vpow.pop %v3155
    %v3157 = vadd.f32 %v3154, 1.0
    %v3158 = vadd.f32 %v3156, 1.0
    %v3159 = vrcp.pop %v3157
    %v3160 = vmul.f32 1.0, %v3159
    %v3161 = vrcp.pop %v3158
    %v3162 = vmul.f32 1.0, %v3161
    %v3163 = vmul.f32 %v3160, 2.0
    %v3164 = vmul.f32 %v3162, 2.0
    %v3165 = vsub.f32 %v3163, 1.0
    %v3166 = vsub.f32 %v3164, 1.0
    %v3169 = vrot.slane %v3037, 7
    %v3170 = vrot.slane %v3038, 7
    %v3173 = vmul.f32 %v3160, %v3169
    %v3174 = vmul.f32 %v3162, %v3170
    %3177 = vrot.lane.b32.xlu0 %v3165, 64
    %v3178 = vpop.permute.xlu0 %3177
    %3179 = vrot.lane.b32.xlu0 %v3166, 64
    %v3180 = vpop.permute.xlu0 %3179
    %v3183 = vmul.f32 %v3160, %v3178
    %v3184 = vmul.f32 %v3162, %v3180
    %3187 = vrot.lane.b32.xlu0 %v3183, 32
    %v3188 = vpop.permute.xlu0 %3187
    %3189 = vrot.lane.b32.xlu0 %v3184, 32
    %v3190 = vpop.permute.xlu0 %3189
    %v3193 = vadd.f32 %v3173, %v3188
    %v3194 = vadd.f32 %v3174, %v3190
    %v3195 = vtanh.pop %v3193
    %v3196 = vtanh.pop %v3194
    %3199 = vrot.lane.b32.xlu0 %v3195, 64
    %v3200 = vpop.permute.xlu0 %3199
    %3201 = vrot.lane.b32.xlu0 %v3196, 64
    %v3202 = vpop.permute.xlu0 %3201
    %v3205 = vmul.f32 %v3160, %v3200
    %v3206 = vmul.f32 %v3162, %v3202
    %v3209 = vrot.slane %v3206, 7
    %vm3210 = vcmask 1045509
    %v3211 = vsel %vm3210, %v3209, %v3205
    %3212 = vrot.lane.b32.xlu0 %v3211, 32
    %v3213 = vpop.permute.xlu0 %3212
    %v3216 = vrot.slane %v3143, 4
    %3217 = vrot.lane.b32.xlu0 %v3216, 64
    %v3218 = vpop.permute.xlu0 %3217
    %v3220 = vsel %vm1422, %v3213, %v3218
    %v3221 = vpack.c.bf16 %v3220, %v3220
    %v3223 = vrot.slane %v3221, 2
    %v3225 = vsel %vm2504, %v3223, 0
    %3227 = vmatprep.subr.bf16.mxu0 0
    %3228 = vmatpush1.bf16.msra.mxu0 0
    %3229 = vmatprep.subr.bf16.mxu0 0
    %3230 = vmatpush1.bf16.msra.mxu0 0
    %3231 = vmatprep.subr.bf16.mxu0 0
    %3232 = vmatpush1.bf16.msra.mxu0 0
    %3233 = vmatprep.subr.bf16.mxu0 0
    %3234 = vmatpush1.bf16.msra.mxu0 0
    %3235 = vmatprep.subr.bf16.mxu0 %v2501
    %3236 = vmatpush1.bf16.msra.mxu0 %v2500
    %3237 = vmatprep.subr.bf16.mxu0 %v2499
    %3238 = vmatpush1.bf16.msra.mxu0 %v2498
    %3239 = vmatprep.subr.bf16.mxu0 %v2497
    %3240 = vmatpush1.bf16.msra.mxu0 %v2496
    %3241 = vmatprep.subr.bf16.mxu0 %v2495
    %3242 = vmatpush1.bf16.msra.mxu0 %v2494
    %3243 = vmatprep.subr.bf16.mxu0 0
    %3244 = vmatpush2.bf16.msra.mxu0 0
    %3245 = vmatprep.subr.bf16.mxu0 0
    %3246 = vmatpush2.bf16.msra.mxu0 0
    %3247 = vmatprep.subr.bf16.mxu0 0
    %3248 = vmatpush2.bf16.msra.mxu0 0
    %3249 = vmatprep.subr.bf16.mxu0 0
    %3250 = vmatpush2.bf16.msra.mxu0 0
    %3251 = vmatprep.subr.bf16.mxu0 0
    %3252 = vmatpush2.bf16.msra.mxu0 0
    %3253 = vmatprep.subr.bf16.mxu0 0
    %3254 = vmatpush2.bf16.msra.mxu0 0
    %3255 = vmatprep.subr.bf16.mxu0 0
    %3256 = vmatpush2.bf16.msra.mxu0 0
    %3257 = vmatprep.subr.bf16.mxu0 0
    %3258 = vmatpush2.bf16.msra.mxu0 0
    %3259 = vmatprep.mubr.bf16.mxu0 0
    %3260 = vmatmul.mubr.bf16.gmra.mxu0 %v3225
    %v3261 = vpop.f32.mrf.mxu0
    %v3262 = vadd.f32 0.0, %v3261
    %v3263 = vpop.f32.mrf.mxu0
    %v3264 = vadd.f32 0.0, %v3263
    %v3265 = vpop.f32.mrf.mxu0
    %v3266 = vpop.f32.mrf.mxu0
    %3267 = vdwg.mxu0
    %v3268 = vadd.f32 %v2502, %v3264
    %v3269 = vxor.u32 %v3268, 2147483648
    %v3270 = vmul.f32 %v3269, 1.442695
    %v3271 = vpow.pop %v3270
    %v3272 = vadd.f32 %v3271, 1.0
    %v3273 = vrcp.pop %v3272
    %v3274 = vmul.f32 1.0, %v3273
    %v3275 = vmul.f32 %v3274, 2.0
    %v3276 = vsub.f32 %v3275, 1.0
    %v3277 = vmul.f32 %v3274, %v3137
    %3279 = vrot.lane.b32.xlu0 %v3276, 64
    %v3280 = vpop.permute.xlu0 %3279
    %v3282 = vmul.f32 %v3274, %v3280
    %3284 = vrot.lane.b32.xlu0 %v3282, 32
    %v3285 = vpop.permute.xlu0 %3284
    %v3287 = vadd.f32 %v3277, %v3285
    %v3288 = vtanh.pop %v3287
    %3290 = vrot.lane.b32.xlu0 %v3288, 64
    %v3291 = vpop.permute.xlu0 %3290
    %v3293 = vmul.f32 %v3274, %v3291
    %v3295 = vrot.slane %v3262, 3
    %v3296 = vrot.slane %v3262, 4
    %v3299 = vadd.f32 %v2464, %v3295
    %v3300 = vadd.f32 %v2472, %v3296
    %v3301 = vxor.u32 %v3299, 2147483648
    %v3302 = vxor.u32 %v3300, 2147483648
    %v3303 = vmul.f32 %v3301, 1.442695
    %v3304 = vpow.pop %v3303
    %v3305 = vmul.f32 %v3302, 1.442695
    %v3306 = vpow.pop %v3305
    %v3307 = vadd.f32 %v3304, 1.0
    %v3308 = vadd.f32 %v3306, 1.0
    %v3309 = vrcp.pop %v3307
    %v3310 = vmul.f32 1.0, %v3309
    %v3311 = vrcp.pop %v3308
    %v3312 = vmul.f32 1.0, %v3311
    %v3313 = vmul.f32 %v3310, 2.0
    %v3314 = vmul.f32 %v3312, 2.0
    %v3315 = vsub.f32 %v3313, 1.0
    %v3316 = vsub.f32 %v3314, 1.0
    %v3319 = vrot.slane %v3193, 7
    %v3320 = vrot.slane %v3194, 7
    %v3323 = vmul.f32 %v3310, %v3319
    %v3324 = vmul.f32 %v3312, %v3320
    %3327 = vrot.lane.b32.xlu0 %v3315, 64
    %v3328 = vpop.permute.xlu0 %3327
    %3329 = vrot.lane.b32.xlu0 %v3316, 64
    %v3330 = vpop.permute.xlu0 %3329
    %v3333 = vmul.f32 %v3310, %v3328
    %v3334 = vmul.f32 %v3312, %v3330
    %3337 = vrot.lane.b32.xlu0 %v3333, 32
    %v3338 = vpop.permute.xlu0 %3337
    %3339 = vrot.lane.b32.xlu0 %v3334, 32
    %v3340 = vpop.permute.xlu0 %3339
    %v3343 = vadd.f32 %v3323, %v3338
    %v3344 = vadd.f32 %v3324, %v3340
    %v3345 = vtanh.pop %v3343
    %v3346 = vtanh.pop %v3344
    %3349 = vrot.lane.b32.xlu0 %v3345, 64
    %v3350 = vpop.permute.xlu0 %3349
    %3351 = vrot.lane.b32.xlu0 %v3346, 64
    %v3352 = vpop.permute.xlu0 %3351
    %v3355 = vmul.f32 %v3310, %v3350
    %v3356 = vmul.f32 %v3312, %v3352
    %v3359 = vrot.slane %v3356, 7
    %vm3360 = vcmask 1046534
    %v3361 = vsel %vm3360, %v3359, %v3355
    %3362 = vrot.lane.b32.xlu0 %v3361, 32
    %v3363 = vpop.permute.xlu0 %3362
    %v3366 = vrot.slane %v3293, 3
    %3367 = vrot.lane.b32.xlu0 %v3366, 64
    %v3368 = vpop.permute.xlu0 %3367
    %v3370 = vsel %vm1422, %v3363, %v3368
    %v3371 = vpack.c.bf16 %v3370, %v3370
    %v3373 = vshrl.u32 %v3371, 16
    %v3375 = vrot.slane %v3373, 2
    %v3376 = vshll.u32 %v3371, 16
    %v3378 = vrot.slane %v3376, 3
    %v3379 = vor.u32 %v3375, %v3378
    %v3381 = vsel %vm2504, %v3379, 0
    %3383 = vmatprep.subr.bf16.mxu0 0
    %3384 = vmatpush1.bf16.msra.mxu0 0
    %3385 = vmatprep.subr.bf16.mxu0 0
    %3386 = vmatpush1.bf16.msra.mxu0 0
    %3387 = vmatprep.subr.bf16.mxu0 0
    %3388 = vmatpush1.bf16.msra.mxu0 0
    %3389 = vmatprep.subr.bf16.mxu0 0
    %3390 = vmatpush1.bf16.msra.mxu0 0
    %3391 = vmatprep.subr.bf16.mxu0 %v2501
    %3392 = vmatpush1.bf16.msra.mxu0 %v2500
    %3393 = vmatprep.subr.bf16.mxu0 %v2499
    %3394 = vmatpush1.bf16.msra.mxu0 %v2498
    %3395 = vmatprep.subr.bf16.mxu0 %v2497
    %3396 = vmatpush1.bf16.msra.mxu0 %v2496
    %3397 = vmatprep.subr.bf16.mxu0 %v2495
    %3398 = vmatpush1.bf16.msra.mxu0 %v2494
    %3399 = vmatprep.subr.bf16.mxu0 0
    %3400 = vmatpush2.bf16.msra.mxu0 0
    %3401 = vmatprep.subr.bf16.mxu0 0
    %3402 = vmatpush2.bf16.msra.mxu0 0
    %3403 = vmatprep.subr.bf16.mxu0 0
    %3404 = vmatpush2.bf16.msra.mxu0 0
    %3405 = vmatprep.subr.bf16.mxu0 0
    %3406 = vmatpush2.bf16.msra.mxu0 0
    %3407 = vmatprep.subr.bf16.mxu0 0
    %3408 = vmatpush2.bf16.msra.mxu0 0
    %3409 = vmatprep.subr.bf16.mxu0 0
    %3410 = vmatpush2.bf16.msra.mxu0 0
    %3411 = vmatprep.subr.bf16.mxu0 0
    %3412 = vmatpush2.bf16.msra.mxu0 0
    %3413 = vmatprep.subr.bf16.mxu0 0
    %3414 = vmatpush2.bf16.msra.mxu0 0
    %3415 = vmatprep.mubr.bf16.mxu0 0
    %3416 = vmatmul.mubr.bf16.gmra.mxu0 %v3381
    %v3417 = vpop.f32.mrf.mxu0
    %v3418 = vadd.f32 0.0, %v3417
    %v3419 = vpop.f32.mrf.mxu0
    %v3420 = vadd.f32 0.0, %v3419
    %v3421 = vpop.f32.mrf.mxu0
    %v3422 = vpop.f32.mrf.mxu0
    %3423 = vdwg.mxu0
    %v3424 = vadd.f32 %v2502, %v3420
    %v3425 = vxor.u32 %v3424, 2147483648
    %v3426 = vmul.f32 %v3425, 1.442695
    %v3427 = vpow.pop %v3426
    %v3428 = vadd.f32 %v3427, 1.0
    %v3429 = vrcp.pop %v3428
    %v3430 = vmul.f32 1.0, %v3429
    %v3431 = vmul.f32 %v3430, 2.0
    %v3432 = vsub.f32 %v3431, 1.0
    %v3433 = vmul.f32 %v3430, %v3287
    %3435 = vrot.lane.b32.xlu0 %v3432, 64
    %v3436 = vpop.permute.xlu0 %3435
    %v3438 = vmul.f32 %v3430, %v3436
    %3440 = vrot.lane.b32.xlu0 %v3438, 32
    %v3441 = vpop.permute.xlu0 %3440
    %v3443 = vadd.f32 %v3433, %v3441
    %v3444 = vtanh.pop %v3443
    %3446 = vrot.lane.b32.xlu0 %v3444, 64
    %v3447 = vpop.permute.xlu0 %3446
    %v3449 = vmul.f32 %v3430, %v3447
    %v3451 = vrot.slane %v3418, 2
    %v3452 = vrot.slane %v3418, 3
    %v3455 = vadd.f32 %v2464, %v3451
    %v3456 = vadd.f32 %v2472, %v3452
    %v3457 = vxor.u32 %v3455, 2147483648
    %v3458 = vxor.u32 %v3456, 2147483648
    %v3459 = vmul.f32 %v3457, 1.442695
    %v3460 = vpow.pop %v3459
    %v3461 = vmul.f32 %v3458, 1.442695
    %v3462 = vpow.pop %v3461
    %v3463 = vadd.f32 %v3460, 1.0
    %v3464 = vadd.f32 %v3462, 1.0
    %v3465 = vrcp.pop %v3463
    %v3466 = vmul.f32 1.0, %v3465
    %v3467 = vrcp.pop %v3464
    %v3468 = vmul.f32 1.0, %v3467
    %v3469 = vmul.f32 %v3466, 2.0
    %v3470 = vmul.f32 %v3468, 2.0
    %v3471 = vsub.f32 %v3469, 1.0
    %v3472 = vsub.f32 %v3470, 1.0
    %v3475 = vrot.slane %v3343, 7
    %v3476 = vrot.slane %v3344, 7
    %v3479 = vmul.f32 %v3466, %v3475
    %v3480 = vmul.f32 %v3468, %v3476
    %3483 = vrot.lane.b32.xlu0 %v3471, 64
    %v3484 = vpop.permute.xlu0 %3483
    %3485 = vrot.lane.b32.xlu0 %v3472, 64
    %v3486 = vpop.permute.xlu0 %3485
    %v3489 = vmul.f32 %v3466, %v3484
    %v3490 = vmul.f32 %v3468, %v3486
    %3493 = vrot.lane.b32.xlu0 %v3489, 32
    %v3494 = vpop.permute.xlu0 %3493
    %3495 = vrot.lane.b32.xlu0 %v3490, 32
    %v3496 = vpop.permute.xlu0 %3495
    %v3499 = vadd.f32 %v3479, %v3494
    %v3500 = vadd.f32 %v3480, %v3496
    %v3501 = vtanh.pop %v3499
    %v3502 = vtanh.pop %v3500
    %3505 = vrot.lane.b32.xlu0 %v3501, 64
    %v3506 = vpop.permute.xlu0 %3505
    %3507 = vrot.lane.b32.xlu0 %v3502, 64
    %v3508 = vpop.permute.xlu0 %3507
    %v3511 = vmul.f32 %v3466, %v3506
    %v3512 = vmul.f32 %v3468, %v3508
    %v3515 = vrot.slane %v3512, 7
    %vm3516 = vcmask 1047559
    %v3517 = vsel %vm3516, %v3515, %v3511
    %3518 = vrot.lane.b32.xlu0 %v3517, 32
    %v3519 = vpop.permute.xlu0 %3518
    %v3522 = vrot.slane %v3449, 2
    %3523 = vrot.lane.b32.xlu0 %v3522, 64
    %v3524 = vpop.permute.xlu0 %3523
    %v3526 = vsel %vm1422, %v3519, %v3524
    %v3527 = vpack.c.bf16 %v3526, %v3526
    %v3529 = vrot.slane %v3527, 3
    %v3531 = vsel %vm2504, %v3529, 0
    %3533 = vmatprep.subr.bf16.mxu0 0
    %3534 = vmatpush1.bf16.msra.mxu0 0
    %3535 = vmatprep.subr.bf16.mxu0 0
    %3536 = vmatpush1.bf16.msra.mxu0 0
    %3537 = vmatprep.subr.bf16.mxu0 0
    %3538 = vmatpush1.bf16.msra.mxu0 0
    %3539 = vmatprep.subr.bf16.mxu0 0
    %3540 = vmatpush1.bf16.msra.mxu0 0
    %3541 = vmatprep.subr.bf16.mxu0 %v2501
    %3542 = vmatpush1.bf16.msra.mxu0 %v2500
    %3543 = vmatprep.subr.bf16.mxu0 %v2499
    %3544 = vmatpush1.bf16.msra.mxu0 %v2498
    %3545 = vmatprep.subr.bf16.mxu0 %v2497
    %3546 = vmatpush1.bf16.msra.mxu0 %v2496
    %3547 = vmatprep.subr.bf16.mxu0 %v2495
    %3548 = vmatpush1.bf16.msra.mxu0 %v2494
    %3549 = vmatprep.subr.bf16.mxu0 0
    %3550 = vmatpush2.bf16.msra.mxu0 0
    %3551 = vmatprep.subr.bf16.mxu0 0
    %3552 = vmatpush2.bf16.msra.mxu0 0
    %3553 = vmatprep.subr.bf16.mxu0 0
    %3554 = vmatpush2.bf16.msra.mxu0 0
    %3555 = vmatprep.subr.bf16.mxu0 0
    %3556 = vmatpush2.bf16.msra.mxu0 0
    %3557 = vmatprep.subr.bf16.mxu0 0
    %3558 = vmatpush2.bf16.msra.mxu0 0
    %3559 = vmatprep.subr.bf16.mxu0 0
    %3560 = vmatpush2.bf16.msra.mxu0 0
    %3561 = vmatprep.subr.bf16.mxu0 0
    %3562 = vmatpush2.bf16.msra.mxu0 0
    %3563 = vmatprep.subr.bf16.mxu0 0
    %3564 = vmatpush2.bf16.msra.mxu0 0
    %3565 = vmatprep.mubr.bf16.mxu0 0
    %3566 = vmatmul.mubr.bf16.gmra.mxu0 %v3531
    %v3567 = vpop.f32.mrf.mxu0
    %v3568 = vadd.f32 0.0, %v3567
    %v3569 = vpop.f32.mrf.mxu0
    %v3570 = vadd.f32 0.0, %v3569
    %v3571 = vpop.f32.mrf.mxu0
    %v3572 = vpop.f32.mrf.mxu0
    %3573 = vdwg.mxu0
    %v3574 = vadd.f32 %v2502, %v3570
    %v3575 = vxor.u32 %v3574, 2147483648
    %v3576 = vmul.f32 %v3575, 1.442695
    %v3577 = vpow.pop %v3576
    %v3578 = vadd.f32 %v3577, 1.0
    %v3579 = vrcp.pop %v3578
    %v3580 = vmul.f32 1.0, %v3579
    %v3581 = vmul.f32 %v3580, 2.0
    %v3582 = vsub.f32 %v3581, 1.0
    %v3583 = vmul.f32 %v3580, %v3443
    %3585 = vrot.lane.b32.xlu0 %v3582, 64
    %v3586 = vpop.permute.xlu0 %3585
    %v3588 = vmul.f32 %v3580, %v3586
    %3590 = vrot.lane.b32.xlu0 %v3588, 32
    %v3591 = vpop.permute.xlu0 %3590
    %v3593 = vadd.f32 %v3583, %v3591
    %v3594 = vtanh.pop %v3593
    %3596 = vrot.lane.b32.xlu0 %v3594, 64
    %v3597 = vpop.permute.xlu0 %3596
    %v3599 = vmul.f32 %v3580, %v3597
    %v3601 = vrot.slane %v3568, 1
    %v3602 = vrot.slane %v3568, 2
    %v3605 = vadd.f32 %v2464, %v3601
    %v3606 = vadd.f32 %v2472, %v3602
    %v3607 = vxor.u32 %v3605, 2147483648
    %v3608 = vxor.u32 %v3606, 2147483648
    %v3609 = vmul.f32 %v3607, 1.442695
    %v3610 = vpow.pop %v3609
    %v3611 = vmul.f32 %v3608, 1.442695
    %v3612 = vpow.pop %v3611
    %v3613 = vadd.f32 %v3610, 1.0
    %v3614 = vadd.f32 %v3612, 1.0
    %v3615 = vrcp.pop %v3613
    %v3616 = vmul.f32 1.0, %v3615
    %v3617 = vrcp.pop %v3614
    %v3618 = vmul.f32 1.0, %v3617
    %v3619 = vmul.f32 %v3616, 2.0
    %v3620 = vmul.f32 %v3618, 2.0
    %v3621 = vsub.f32 %v3619, 1.0
    %v3622 = vsub.f32 %v3620, 1.0
    %v3625 = vrot.slane %v3499, 7
    %v3626 = vrot.slane %v3500, 7
    %v3629 = vmul.f32 %v3616, %v3625
    %v3630 = vmul.f32 %v3618, %v3626
    %3633 = vrot.lane.b32.xlu0 %v3621, 64
    %v3634 = vpop.permute.xlu0 %3633
    %3635 = vrot.lane.b32.xlu0 %v3622, 64
    %v3636 = vpop.permute.xlu0 %3635
    %v3639 = vmul.f32 %v3616, %v3634
    %v3640 = vmul.f32 %v3618, %v3636
    %3643 = vrot.lane.b32.xlu0 %v3639, 32
    %v3644 = vpop.permute.xlu0 %3643
    %3645 = vrot.lane.b32.xlu0 %v3640, 32
    %v3646 = vpop.permute.xlu0 %3645
    %v3649 = vadd.f32 %v3629, %v3644
    %v3650 = vadd.f32 %v3630, %v3646
    %v3651 = vtanh.pop %v3649
    %v3652 = vtanh.pop %v3650
    %3655 = vrot.lane.b32.xlu0 %v3651, 64
    %v3656 = vpop.permute.xlu0 %3655
    %3657 = vrot.lane.b32.xlu0 %v3652, 64
    %v3658 = vpop.permute.xlu0 %3657
    %v3661 = vmul.f32 %v3616, %v3656
    %v3662 = vmul.f32 %v3618, %v3658
    %v3665 = vrot.slane %v3662, 7
    %3666 = vrot.lane.b32.xlu0 %v3661, 32
    %v3667 = vpop.permute.xlu0 %3666
    %3668 = vrot.lane.b32.xlu0 %v3665, 32
    %v3669 = vpop.permute.xlu0 %3668
    %v3673 = vrot.slane %v3599, 1
    %3674 = vrot.lane.b32.xlu0 %v3673, 64
    %v3675 = vpop.permute.xlu0 %3674
    %v3677 = vsel %vm1422, %v3667, %v3675
    %v3678 = vsel %vm1422, %v3669, %v3675
    %v3679 = vpack.c.bf16 %v3678, %v3677
    %v3681 = vshrl.u32 %v3679, 16
    %v3683 = vrot.slane %v3681, 3
    %v3684 = vshll.u32 %v3679, 16
    %v3686 = vrot.slane %v3684, 4
    %v3687 = vor.u32 %v3683, %v3686
    %v3689 = vsel %vm2504, %v3687, 0
    %3691 = vmatprep.subr.bf16.mxu0 0
    %3692 = vmatpush1.bf16.msra.mxu0 0
    %3693 = vmatprep.subr.bf16.mxu0 0
    %3694 = vmatpush1.bf16.msra.mxu0 0
    %3695 = vmatprep.subr.bf16.mxu0 0
    %3696 = vmatpush1.bf16.msra.mxu0 0
    %3697 = vmatprep.subr.bf16.mxu0 0
    %3698 = vmatpush1.bf16.msra.mxu0 0
    %3699 = vmatprep.subr.bf16.mxu0 %v2501
    %3700 = vmatpush1.bf16.msra.mxu0 %v2500
    %3701 = vmatprep.subr.bf16.mxu0 %v2499
    %3702 = vmatpush1.bf16.msra.mxu0 %v2498
    %3703 = vmatprep.subr.bf16.mxu0 %v2497
    %3704 = vmatpush1.bf16.msra.mxu0 %v2496
    %3705 = vmatprep.subr.bf16.mxu0 %v2495
    %3706 = vmatpush1.bf16.msra.mxu0 %v2494
    %3707 = vmatprep.subr.bf16.mxu0 0
    %3708 = vmatpush2.bf16.msra.mxu0 0
    %3709 = vmatprep.subr.bf16.mxu0 0
    %3710 = vmatpush2.bf16.msra.mxu0 0
    %3711 = vmatprep.subr.bf16.mxu0 0
    %3712 = vmatpush2.bf16.msra.mxu0 0
    %3713 = vmatprep.subr.bf16.mxu0 0
    %3714 = vmatpush2.bf16.msra.mxu0 0
    %3715 = vmatprep.subr.bf16.mxu0 0
    %3716 = vmatpush2.bf16.msra.mxu0 0
    %3717 = vmatprep.subr.bf16.mxu0 0
    %3718 = vmatpush2.bf16.msra.mxu0 0
    %3719 = vmatprep.subr.bf16.mxu0 0
    %3720 = vmatpush2.bf16.msra.mxu0 0
    %3721 = vmatprep.subr.bf16.mxu0 0
    %3722 = vmatpush2.bf16.msra.mxu0 0
    %3723 = vmatprep.mubr.bf16.mxu0 0
    %3724 = vmatmul.mubr.bf16.gmra.mxu0 %v3689
    %v3725 = vpop.f32.mrf.mxu0
    %v3726 = vadd.f32 0.0, %v3725
    %v3727 = vpop.f32.mrf.mxu0
    %v3728 = vadd.f32 0.0, %v3727
    %v3729 = vpop.f32.mrf.mxu0
    %v3730 = vpop.f32.mrf.mxu0
    %3731 = vdwg.mxu0
    %v3732 = vadd.f32 %v2502, %v3728
    %v3733 = vxor.u32 %v3732, 2147483648
    %v3734 = vmul.f32 %v3733, 1.442695
    %v3735 = vpow.pop %v3734
    %v3736 = vadd.f32 %v3735, 1.0
    %v3737 = vrcp.pop %v3736
    %v3738 = vmul.f32 1.0, %v3737
    %v3739 = vmul.f32 %v3738, 2.0
    %v3740 = vsub.f32 %v3739, 1.0
    %v3741 = vmul.f32 %v3738, %v3593
    %3743 = vrot.lane.b32.xlu0 %v3740, 64
    %v3744 = vpop.permute.xlu0 %3743
    %v3746 = vmul.f32 %v3738, %v3744
    %3748 = vrot.lane.b32.xlu0 %v3746, 32
    %v3749 = vpop.permute.xlu0 %3748
    %v3751 = vadd.f32 %v3741, %v3749
    %v3752 = vtanh.pop %v3751
    %3754 = vrot.lane.b32.xlu0 %v3752, 64
    %v3755 = vpop.permute.xlu0 %3754
    %v3757 = vmul.f32 %v3738, %v3755
    %v3759 = vrot.slane %v3726, 1
    %v3762 = vadd.f32 %v2467, %v3726
    %v3763 = vadd.f32 %v2475, %v3759
    %v3764 = vxor.u32 %v3762, 2147483648
    %v3765 = vxor.u32 %v3763, 2147483648
    %v3766 = vmul.f32 %v3764, 1.442695
    %v3767 = vpow.pop %v3766
    %v3768 = vmul.f32 %v3765, 1.442695
    %v3769 = vpow.pop %v3768
    %v3770 = vadd.f32 %v3767, 1.0
    %v3771 = vadd.f32 %v3769, 1.0
    %v3772 = vrcp.pop %v3770
    %v3773 = vmul.f32 1.0, %v3772
    %v3774 = vrcp.pop %v3771
    %v3775 = vmul.f32 1.0, %v3774
    %v3776 = vmul.f32 %v3773, 2.0
    %v3777 = vmul.f32 %v3775, 2.0
    %v3778 = vsub.f32 %v3776, 1.0
    %v3779 = vsub.f32 %v3777, 1.0
    %v3782 = vrot.slane %v3649, 7
    %v3783 = vrot.slane %v3650, 7
    %v3786 = vmul.f32 %v3773, %v3782
    %v3787 = vmul.f32 %v3775, %v3783
    %3790 = vrot.lane.b32.xlu0 %v3778, 64
    %v3791 = vpop.permute.xlu0 %3790
    %3792 = vrot.lane.b32.xlu0 %v3779, 64
    %v3793 = vpop.permute.xlu0 %3792
    %v3796 = vmul.f32 %v3773, %v3791
    %v3797 = vmul.f32 %v3775, %v3793
    %3800 = vrot.lane.b32.xlu0 %v3796, 32
    %v3801 = vpop.permute.xlu0 %3800
    %3802 = vrot.lane.b32.xlu0 %v3797, 32
    %v3803 = vpop.permute.xlu0 %3802
    %v3806 = vadd.f32 %v3786, %v3801
    %v3807 = vadd.f32 %v3787, %v3803
    %v3808 = vtanh.pop %v3806
    %v3809 = vtanh.pop %v3807
    %3812 = vrot.lane.b32.xlu0 %v3808, 64
    %v3813 = vpop.permute.xlu0 %3812
    %3814 = vrot.lane.b32.xlu0 %v3809, 64
    %v3815 = vpop.permute.xlu0 %3814
    %v3818 = vmul.f32 %v3773, %v3813
    %v3819 = vmul.f32 %v3775, %v3815
    %v3822 = vrot.slane %v3819, 7
    %v3823 = vsel %vm2607, %v3822, %v3818
    %3824 = vrot.lane.b32.xlu0 %v3823, 32
    %v3825 = vpop.permute.xlu0 %3824
    %3828 = vrot.lane.b32.xlu0 %v3757, 64
    %v3829 = vpop.permute.xlu0 %3828
    %v3831 = vsel %vm1422, %v3825, %v3829
    %v3832 = vpack.c.bf16 %v3831, %v3831
    %v3834 = vsel %vm2504, %v3832, 0
    %3836 = vmatprep.subr.bf16.mxu0 0
    %3837 = vmatpush1.bf16.msra.mxu0 0
    %3838 = vmatprep.subr.bf16.mxu0 0
    %3839 = vmatpush1.bf16.msra.mxu0 0
    %3840 = vmatprep.subr.bf16.mxu0 0
    %3841 = vmatpush1.bf16.msra.mxu0 0
    %3842 = vmatprep.subr.bf16.mxu0 0
    %3843 = vmatpush1.bf16.msra.mxu0 0
    %3844 = vmatprep.subr.bf16.mxu0 %v2501
    %3845 = vmatpush1.bf16.msra.mxu0 %v2500
    %3846 = vmatprep.subr.bf16.mxu0 %v2499
    %3847 = vmatpush1.bf16.msra.mxu0 %v2498
    %3848 = vmatprep.subr.bf16.mxu0 %v2497
    %3849 = vmatpush1.bf16.msra.mxu0 %v2496
    %3850 = vmatprep.subr.bf16.mxu0 %v2495
    %3851 = vmatpush1.bf16.msra.mxu0 %v2494
    %3852 = vmatprep.subr.bf16.mxu0 0
    %3853 = vmatpush2.bf16.msra.mxu0 0
    %3854 = vmatprep.subr.bf16.mxu0 0
    %3855 = vmatpush2.bf16.msra.mxu0 0
    %3856 = vmatprep.subr.bf16.mxu0 0
    %3857 = vmatpush2.bf16.msra.mxu0 0
    %3858 = vmatprep.subr.bf16.mxu0 0
    %3859 = vmatpush2.bf16.msra.mxu0 0
    %3860 = vmatprep.subr.bf16.mxu0 0
    %3861 = vmatpush2.bf16.msra.mxu0 0
    %3862 = vmatprep.subr.bf16.mxu0 0
    %3863 = vmatpush2.bf16.msra.mxu0 0
    %3864 = vmatprep.subr.bf16.mxu0 0
    %3865 = vmatpush2.bf16.msra.mxu0 0
    %3866 = vmatprep.subr.bf16.mxu0 0
    %3867 = vmatpush2.bf16.msra.mxu0 0
    %3868 = vmatprep.mubr.bf16.mxu0 0
    %3869 = vmatmul.mubr.bf16.gmra.mxu0 %v3834
    %v3870 = vpop.f32.mrf.mxu0
    %v3871 = vadd.f32 0.0, %v3870
    %v3872 = vpop.f32.mrf.mxu0
    %v3873 = vadd.f32 0.0, %v3872
    %v3874 = vpop.f32.mrf.mxu0
    %v3875 = vpop.f32.mrf.mxu0
    %3876 = vdwg.mxu0
    %v3877 = vadd.f32 %v2502, %v3873
    %v3878 = vxor.u32 %v3877, 2147483648
    %v3879 = vmul.f32 %v3878, 1.442695
    %v3880 = vpow.pop %v3879
    %v3881 = vadd.f32 %v3880, 1.0
    %v3882 = vrcp.pop %v3881
    %v3883 = vmul.f32 1.0, %v3882
    %v3884 = vmul.f32 %v3883, 2.0
    %v3885 = vsub.f32 %v3884, 1.0
    %v3886 = vmul.f32 %v3883, %v3751
    %3888 = vrot.lane.b32.xlu0 %v3885, 64
    %v3889 = vpop.permute.xlu0 %3888
    %v3891 = vmul.f32 %v3883, %v3889
    %3893 = vrot.lane.b32.xlu0 %v3891, 32
    %v3894 = vpop.permute.xlu0 %3893
    %v3896 = vadd.f32 %v3886, %v3894
    %v3897 = vtanh.pop %v3896
    %3899 = vrot.lane.b32.xlu0 %v3897, 64
    %v3900 = vpop.permute.xlu0 %3899
    %v3902 = vmul.f32 %v3883, %v3900
    %v3904 = vrot.slane %v3871, 7
    %v3907 = vadd.f32 %v2467, %v3904
    %v3908 = vadd.f32 %v2475, %v3871
    %v3909 = vxor.u32 %v3907, 2147483648
    %v3910 = vxor.u32 %v3908, 2147483648
    %v3911 = vmul.f32 %v3909, 1.442695
    %v3912 = vpow.pop %v3911
    %v3913 = vmul.f32 %v3910, 1.442695
    %v3914 = vpow.pop %v3913
    %v3915 = vadd.f32 %v3912, 1.0
    %v3916 = vadd.f32 %v3914, 1.0
    %v3917 = vrcp.pop %v3915
    %v3918 = vmul.f32 1.0, %v3917
    %v3919 = vrcp.pop %v3916
    %v3920 = vmul.f32 1.0, %v3919
    %v3921 = vmul.f32 %v3918, 2.0
    %v3922 = vmul.f32 %v3920, 2.0
    %v3923 = vsub.f32 %v3921, 1.0
    %v3924 = vsub.f32 %v3922, 1.0
    %v3927 = vrot.slane %v3806, 7
    %v3928 = vrot.slane %v3807, 7
    %v3931 = vmul.f32 %v3918, %v3927
    %v3932 = vmul.f32 %v3920, %v3928
    %3935 = vrot.lane.b32.xlu0 %v3923, 64
    %v3936 = vpop.permute.xlu0 %3935
    %3937 = vrot.lane.b32.xlu0 %v3924, 64
    %v3938 = vpop.permute.xlu0 %3937
    %v3941 = vmul.f32 %v3918, %v3936
    %v3942 = vmul.f32 %v3920, %v3938
    %3945 = vrot.lane.b32.xlu0 %v3941, 32
    %v3946 = vpop.permute.xlu0 %3945
    %3947 = vrot.lane.b32.xlu0 %v3942, 32
    %v3948 = vpop.permute.xlu0 %3947
    %v3951 = vadd.f32 %v3931, %v3946
    %v3952 = vadd.f32 %v3932, %v3948
    %v3953 = vtanh.pop %v3951
    %v3954 = vtanh.pop %v3952
    %3957 = vrot.lane.b32.xlu0 %v3953, 64
    %v3958 = vpop.permute.xlu0 %3957
    %3959 = vrot.lane.b32.xlu0 %v3954, 64
    %v3960 = vpop.permute.xlu0 %3959
    %v3963 = vmul.f32 %v3918, %v3958
    %v3964 = vmul.f32 %v3920, %v3960
    %v3967 = vrot.slane %v3964, 7
    %v3968 = vsel %vm2749, %v3967, %v3963
    %3969 = vrot.lane.b32.xlu0 %v3968, 32
    %v3970 = vpop.permute.xlu0 %3969
    %v3973 = vrot.slane %v3902, 7
    %3974 = vrot.lane.b32.xlu0 %v3973, 64
    %v3975 = vpop.permute.xlu0 %3974
    %v3977 = vsel %vm1422, %v3970, %v3975
    %v3978 = vpack.c.bf16 %v3977, %v3977
    %v3980 = vshrl.u32 %v3978, 16
    %v3982 = vshll.u32 %v3978, 16
    %v3984 = vrot.slane %v3982, 1
    %v3985 = vor.u32 %v3980, %v3984
    %v3987 = vsel %vm2504, %v3985, 0
    %3989 = vmatprep.subr.bf16.mxu0 0
    %3990 = vmatpush1.bf16.msra.mxu0 0
    %3991 = vmatprep.subr.bf16.mxu0 0
    %3992 = vmatpush1.bf16.msra.mxu0 0
    %3993 = vmatprep.subr.bf16.mxu0 0
    %3994 = vmatpush1.bf16.msra.mxu0 0
    %3995 = vmatprep.subr.bf16.mxu0 0
    %3996 = vmatpush1.bf16.msra.mxu0 0
    %3997 = vmatprep.subr.bf16.mxu0 %v2501
    %3998 = vmatpush1.bf16.msra.mxu0 %v2500
    %3999 = vmatprep.subr.bf16.mxu0 %v2499
    %4000 = vmatpush1.bf16.msra.mxu0 %v2498
    %4001 = vmatprep.subr.bf16.mxu0 %v2497
    %4002 = vmatpush1.bf16.msra.mxu0 %v2496
    %4003 = vmatprep.subr.bf16.mxu0 %v2495
    %4004 = vmatpush1.bf16.msra.mxu0 %v2494
    %4005 = vmatprep.subr.bf16.mxu0 0
    %4006 = vmatpush2.bf16.msra.mxu0 0
    %4007 = vmatprep.subr.bf16.mxu0 0
    %4008 = vmatpush2.bf16.msra.mxu0 0
    %4009 = vmatprep.subr.bf16.mxu0 0
    %4010 = vmatpush2.bf16.msra.mxu0 0
    %4011 = vmatprep.subr.bf16.mxu0 0
    %4012 = vmatpush2.bf16.msra.mxu0 0
    %4013 = vmatprep.subr.bf16.mxu0 0
    %4014 = vmatpush2.bf16.msra.mxu0 0
    %4015 = vmatprep.subr.bf16.mxu0 0
    %4016 = vmatpush2.bf16.msra.mxu0 0
    %4017 = vmatprep.subr.bf16.mxu0 0
    %4018 = vmatpush2.bf16.msra.mxu0 0
    %4019 = vmatprep.subr.bf16.mxu0 0
    %4020 = vmatpush2.bf16.msra.mxu0 0
    %4021 = vmatprep.mubr.bf16.mxu0 0
    %4022 = vmatmul.mubr.bf16.gmra.mxu0 %v3987
    %v4023 = vpop.f32.mrf.mxu0
    %v4024 = vadd.f32 0.0, %v4023
    %v4025 = vpop.f32.mrf.mxu0
    %v4026 = vadd.f32 0.0, %v4025
    %v4027 = vpop.f32.mrf.mxu0
    %v4028 = vpop.f32.mrf.mxu0
    %4029 = vdwg.mxu0
    %v4030 = vadd.f32 %v2502, %v4026
    %v4031 = vxor.u32 %v4030, 2147483648
    %v4032 = vmul.f32 %v4031, 1.442695
    %v4033 = vpow.pop %v4032
    %v4034 = vadd.f32 %v4033, 1.0
    %v4035 = vrcp.pop %v4034
    %v4036 = vmul.f32 1.0, %v4035
    %v4037 = vmul.f32 %v4036, 2.0
    %v4038 = vsub.f32 %v4037, 1.0
    %v4039 = vmul.f32 %v4036, %v3896
    %4041 = vrot.lane.b32.xlu0 %v4038, 64
    %v4042 = vpop.permute.xlu0 %4041
    %v4044 = vmul.f32 %v4036, %v4042
    %4046 = vrot.lane.b32.xlu0 %v4044, 32
    %v4047 = vpop.permute.xlu0 %4046
    %v4049 = vadd.f32 %v4039, %v4047
    %v4050 = vtanh.pop %v4049
    %4052 = vrot.lane.b32.xlu0 %v4050, 64
    %v4053 = vpop.permute.xlu0 %4052
    %v4055 = vmul.f32 %v4036, %v4053
    %v4057 = vrot.slane %v4024, 6
    %v4058 = vrot.slane %v4024, 7
    %v4061 = vadd.f32 %v2467, %v4057
    %v4062 = vadd.f32 %v2475, %v4058
    %v4063 = vxor.u32 %v4061, 2147483648
    %v4064 = vxor.u32 %v4062, 2147483648
    %v4065 = vmul.f32 %v4063, 1.442695
    %v4066 = vpow.pop %v4065
    %v4067 = vmul.f32 %v4064, 1.442695
    %v4068 = vpow.pop %v4067
    %v4069 = vadd.f32 %v4066, 1.0
    %v4070 = vadd.f32 %v4068, 1.0
    %v4071 = vrcp.pop %v4069
    %v4072 = vmul.f32 1.0, %v4071
    %v4073 = vrcp.pop %v4070
    %v4074 = vmul.f32 1.0, %v4073
    %v4075 = vmul.f32 %v4072, 2.0
    %v4076 = vmul.f32 %v4074, 2.0
    %v4077 = vsub.f32 %v4075, 1.0
    %v4078 = vsub.f32 %v4076, 1.0
    %v4081 = vrot.slane %v3951, 7
    %v4082 = vrot.slane %v3952, 7
    %v4085 = vmul.f32 %v4072, %v4081
    %v4086 = vmul.f32 %v4074, %v4082
    %4089 = vrot.lane.b32.xlu0 %v4077, 64
    %v4090 = vpop.permute.xlu0 %4089
    %4091 = vrot.lane.b32.xlu0 %v4078, 64
    %v4092 = vpop.permute.xlu0 %4091
    %v4095 = vmul.f32 %v4072, %v4090
    %v4096 = vmul.f32 %v4074, %v4092
    %4099 = vrot.lane.b32.xlu0 %v4095, 32
    %v4100 = vpop.permute.xlu0 %4099
    %4101 = vrot.lane.b32.xlu0 %v4096, 32
    %v4102 = vpop.permute.xlu0 %4101
    %v4105 = vadd.f32 %v4085, %v4100
    %v4106 = vadd.f32 %v4086, %v4102
    %v4107 = vtanh.pop %v4105
    %v4108 = vtanh.pop %v4106
    %4111 = vrot.lane.b32.xlu0 %v4107, 64
    %v4112 = vpop.permute.xlu0 %4111
    %4113 = vrot.lane.b32.xlu0 %v4108, 64
    %v4114 = vpop.permute.xlu0 %4113
    %v4117 = vmul.f32 %v4072, %v4112
    %v4118 = vmul.f32 %v4074, %v4114
    %v4121 = vrot.slane %v4118, 7
    %v4122 = vsel %vm2904, %v4121, %v4117
    %4123 = vrot.lane.b32.xlu0 %v4122, 32
    %v4124 = vpop.permute.xlu0 %4123
    %v4127 = vrot.slane %v4055, 6
    %4128 = vrot.lane.b32.xlu0 %v4127, 64
    %v4129 = vpop.permute.xlu0 %4128
    %v4131 = vsel %vm1422, %v4124, %v4129
    %v4132 = vpack.c.bf16 %v4131, %v4131
    %v4134 = vrot.slane %v4132, 1
    %v4136 = vsel %vm2504, %v4134, 0
    %4138 = vmatprep.subr.bf16.mxu0 0
    %4139 = vmatpush1.bf16.msra.mxu0 0
    %4140 = vmatprep.subr.bf16.mxu0 0
    %4141 = vmatpush1.bf16.msra.mxu0 0
    %4142 = vmatprep.subr.bf16.mxu0 0
    %4143 = vmatpush1.bf16.msra.mxu0 0
    %4144 = vmatprep.subr.bf16.mxu0 0
    %4145 = vmatpush1.bf16.msra.mxu0 0
    %4146 = vmatprep.subr.bf16.mxu0 %v2501
    %4147 = vmatpush1.bf16.msra.mxu0 %v2500
    %4148 = vmatprep.subr.bf16.mxu0 %v2499
    %4149 = vmatpush1.bf16.msra.mxu0 %v2498
    %4150 = vmatprep.subr.bf16.mxu0 %v2497
    %4151 = vmatpush1.bf16.msra.mxu0 %v2496
    %4152 = vmatprep.subr.bf16.mxu0 %v2495
    %4153 = vmatpush1.bf16.msra.mxu0 %v2494
    %4154 = vmatprep.subr.bf16.mxu0 0
    %4155 = vmatpush2.bf16.msra.mxu0 0
    %4156 = vmatprep.subr.bf16.mxu0 0
    %4157 = vmatpush2.bf16.msra.mxu0 0
    %4158 = vmatprep.subr.bf16.mxu0 0
    %4159 = vmatpush2.bf16.msra.mxu0 0
    %4160 = vmatprep.subr.bf16.mxu0 0
    %4161 = vmatpush2.bf16.msra.mxu0 0
    %4162 = vmatprep.subr.bf16.mxu0 0
    %4163 = vmatpush2.bf16.msra.mxu0 0
    %4164 = vmatprep.subr.bf16.mxu0 0
    %4165 = vmatpush2.bf16.msra.mxu0 0
    %4166 = vmatprep.subr.bf16.mxu0 0
    %4167 = vmatpush2.bf16.msra.mxu0 0
    %4168 = vmatprep.subr.bf16.mxu0 0
    %4169 = vmatpush2.bf16.msra.mxu0 0
    %4170 = vmatprep.mubr.bf16.mxu0 0
    %4171 = vmatmul.mubr.bf16.gmra.mxu0 %v4136
    %v4172 = vpop.f32.mrf.mxu0
    %v4173 = vadd.f32 0.0, %v4172
    %v4174 = vpop.f32.mrf.mxu0
    %v4175 = vadd.f32 0.0, %v4174
    %v4176 = vpop.f32.mrf.mxu0
    %v4177 = vpop.f32.mrf.mxu0
    %4178 = vdwg.mxu0
    %v4179 = vadd.f32 %v2502, %v4175
    %v4180 = vxor.u32 %v4179, 2147483648
    %v4181 = vmul.f32 %v4180, 1.442695
    %v4182 = vpow.pop %v4181
    %v4183 = vadd.f32 %v4182, 1.0
    %v4184 = vrcp.pop %v4183
    %v4185 = vmul.f32 1.0, %v4184
    %v4186 = vmul.f32 %v4185, 2.0
    %v4187 = vsub.f32 %v4186, 1.0
    %v4188 = vmul.f32 %v4185, %v4049
    %4190 = vrot.lane.b32.xlu0 %v4187, 64
    %v4191 = vpop.permute.xlu0 %4190
    %v4193 = vmul.f32 %v4185, %v4191
    %4195 = vrot.lane.b32.xlu0 %v4193, 32
    %v4196 = vpop.permute.xlu0 %4195
    %v4198 = vadd.f32 %v4188, %v4196
    %v4199 = vtanh.pop %v4198
    %4201 = vrot.lane.b32.xlu0 %v4199, 64
    %v4202 = vpop.permute.xlu0 %4201
    %v4204 = vmul.f32 %v4185, %v4202
    %v4206 = vrot.slane %v4173, 5
    %v4207 = vrot.slane %v4173, 6
    %v4210 = vadd.f32 %v2467, %v4206
    %v4211 = vadd.f32 %v2475, %v4207
    %v4212 = vxor.u32 %v4210, 2147483648
    %v4213 = vxor.u32 %v4211, 2147483648
    %v4214 = vmul.f32 %v4212, 1.442695
    %v4215 = vpow.pop %v4214
    %v4216 = vmul.f32 %v4213, 1.442695
    %v4217 = vpow.pop %v4216
    %v4218 = vadd.f32 %v4215, 1.0
    %v4219 = vadd.f32 %v4217, 1.0
    %v4220 = vrcp.pop %v4218
    %v4221 = vmul.f32 1.0, %v4220
    %v4222 = vrcp.pop %v4219
    %v4223 = vmul.f32 1.0, %v4222
    %v4224 = vmul.f32 %v4221, 2.0
    %v4225 = vmul.f32 %v4223, 2.0
    %v4226 = vsub.f32 %v4224, 1.0
    %v4227 = vsub.f32 %v4225, 1.0
    %v4230 = vrot.slane %v4105, 7
    %v4231 = vrot.slane %v4106, 7
    %v4234 = vmul.f32 %v4221, %v4230
    %v4235 = vmul.f32 %v4223, %v4231
    %4238 = vrot.lane.b32.xlu0 %v4226, 64
    %v4239 = vpop.permute.xlu0 %4238
    %4240 = vrot.lane.b32.xlu0 %v4227, 64
    %v4241 = vpop.permute.xlu0 %4240
    %v4244 = vmul.f32 %v4221, %v4239
    %v4245 = vmul.f32 %v4223, %v4241
    %4248 = vrot.lane.b32.xlu0 %v4244, 32
    %v4249 = vpop.permute.xlu0 %4248
    %4250 = vrot.lane.b32.xlu0 %v4245, 32
    %v4251 = vpop.permute.xlu0 %4250
    %v4254 = vadd.f32 %v4234, %v4249
    %v4255 = vadd.f32 %v4235, %v4251
    %v4256 = vtanh.pop %v4254
    %v4257 = vtanh.pop %v4255
    %4260 = vrot.lane.b32.xlu0 %v4256, 64
    %v4261 = vpop.permute.xlu0 %4260
    %4262 = vrot.lane.b32.xlu0 %v4257, 64
    %v4263 = vpop.permute.xlu0 %4262
    %v4266 = vmul.f32 %v4221, %v4261
    %v4267 = vmul.f32 %v4223, %v4263
    %v4270 = vrot.slane %v4267, 7
    %v4271 = vsel %vm3054, %v4270, %v4266
    %4272 = vrot.lane.b32.xlu0 %v4271, 32
    %v4273 = vpop.permute.xlu0 %4272
    %v4276 = vrot.slane %v4204, 5
    %4277 = vrot.lane.b32.xlu0 %v4276, 64
    %v4278 = vpop.permute.xlu0 %4277
    %v4280 = vsel %vm1422, %v4273, %v4278
    %v4281 = vpack.c.bf16 %v4280, %v4280
    %v4283 = vshrl.u32 %v4281, 16
    %v4285 = vrot.slane %v4283, 1
    %v4286 = vshll.u32 %v4281, 16
    %v4288 = vrot.slane %v4286, 2
    %v4289 = vor.u32 %v4285, %v4288
    %v4291 = vsel %vm2504, %v4289, 0
    %4293 = vmatprep.subr.bf16.mxu0 0
    %4294 = vmatpush1.bf16.msra.mxu0 0
    %4295 = vmatprep.subr.bf16.mxu0 0
    %4296 = vmatpush1.bf16.msra.mxu0 0
    %4297 = vmatprep.subr.bf16.mxu0 0
    %4298 = vmatpush1.bf16.msra.mxu0 0
    %4299 = vmatprep.subr.bf16.mxu0 0
    %4300 = vmatpush1.bf16.msra.mxu0 0
    %4301 = vmatprep.subr.bf16.mxu0 %v2501
    %4302 = vmatpush1.bf16.msra.mxu0 %v2500
    %4303 = vmatprep.subr.bf16.mxu0 %v2499
    %4304 = vmatpush1.bf16.msra.mxu0 %v2498
    %4305 = vmatprep.subr.bf16.mxu0 %v2497
    %4306 = vmatpush1.bf16.msra.mxu0 %v2496
    %4307 = vmatprep.subr.bf16.mxu0 %v2495
    %4308 = vmatpush1.bf16.msra.mxu0 %v2494
    %4309 = vmatprep.subr.bf16.mxu0 0
    %4310 = vmatpush2.bf16.msra.mxu0 0
    %4311 = vmatprep.subr.bf16.mxu0 0
    %4312 = vmatpush2.bf16.msra.mxu0 0
    %4313 = vmatprep.subr.bf16.mxu0 0
    %4314 = vmatpush2.bf16.msra.mxu0 0
    %4315 = vmatprep.subr.bf16.mxu0 0
    %4316 = vmatpush2.bf16.msra.mxu0 0
    %4317 = vmatprep.subr.bf16.mxu0 0
    %4318 = vmatpush2.bf16.msra.mxu0 0
    %4319 = vmatprep.subr.bf16.mxu0 0
    %4320 = vmatpush2.bf16.msra.mxu0 0
    %4321 = vmatprep.subr.bf16.mxu0 0
    %4322 = vmatpush2.bf16.msra.mxu0 0
    %4323 = vmatprep.subr.bf16.mxu0 0
    %4324 = vmatpush2.bf16.msra.mxu0 0
    %4325 = vmatprep.mubr.bf16.mxu0 0
    %4326 = vmatmul.mubr.bf16.gmra.mxu0 %v4291
    %v4327 = vpop.f32.mrf.mxu0
    %v4328 = vadd.f32 0.0, %v4327
    %v4329 = vpop.f32.mrf.mxu0
    %v4330 = vadd.f32 0.0, %v4329
    %v4331 = vpop.f32.mrf.mxu0
    %v4332 = vpop.f32.mrf.mxu0
    %4333 = vdwg.mxu0
    %v4334 = vadd.f32 %v2502, %v4330
    %v4335 = vxor.u32 %v4334, 2147483648
    %v4336 = vmul.f32 %v4335, 1.442695
    %v4337 = vpow.pop %v4336
    %v4338 = vadd.f32 %v4337, 1.0
    %v4339 = vrcp.pop %v4338
    %v4340 = vmul.f32 1.0, %v4339
    %v4341 = vmul.f32 %v4340, 2.0
    %v4342 = vsub.f32 %v4341, 1.0
    %v4343 = vmul.f32 %v4340, %v4198
    %4345 = vrot.lane.b32.xlu0 %v4342, 64
    %v4346 = vpop.permute.xlu0 %4345
    %v4348 = vmul.f32 %v4340, %v4346
    %4350 = vrot.lane.b32.xlu0 %v4348, 32
    %v4351 = vpop.permute.xlu0 %4350
    %v4353 = vadd.f32 %v4343, %v4351
    %v4354 = vtanh.pop %v4353
    %4356 = vrot.lane.b32.xlu0 %v4354, 64
    %v4357 = vpop.permute.xlu0 %4356
    %v4359 = vmul.f32 %v4340, %v4357
    %v4361 = vrot.slane %v4328, 4
    %v4362 = vrot.slane %v4328, 5
    %v4365 = vadd.f32 %v2467, %v4361
    %v4366 = vadd.f32 %v2475, %v4362
    %v4367 = vxor.u32 %v4365, 2147483648
    %v4368 = vxor.u32 %v4366, 2147483648
    %v4369 = vmul.f32 %v4367, 1.442695
    %v4370 = vpow.pop %v4369
    %v4371 = vmul.f32 %v4368, 1.442695
    %v4372 = vpow.pop %v4371
    %v4373 = vadd.f32 %v4370, 1.0
    %v4374 = vadd.f32 %v4372, 1.0
    %v4375 = vrcp.pop %v4373
    %v4376 = vmul.f32 1.0, %v4375
    %v4377 = vrcp.pop %v4374
    %v4378 = vmul.f32 1.0, %v4377
    %v4379 = vmul.f32 %v4376, 2.0
    %v4380 = vmul.f32 %v4378, 2.0
    %v4381 = vsub.f32 %v4379, 1.0
    %v4382 = vsub.f32 %v4380, 1.0
    %v4385 = vrot.slane %v4254, 7
    %v4386 = vrot.slane %v4255, 7
    %v4389 = vmul.f32 %v4376, %v4385
    %v4390 = vmul.f32 %v4378, %v4386
    %4393 = vrot.lane.b32.xlu0 %v4381, 64
    %v4394 = vpop.permute.xlu0 %4393
    %4395 = vrot.lane.b32.xlu0 %v4382, 64
    %v4396 = vpop.permute.xlu0 %4395
    %v4399 = vmul.f32 %v4376, %v4394
    %v4400 = vmul.f32 %v4378, %v4396
    %4403 = vrot.lane.b32.xlu0 %v4399, 32
    %v4404 = vpop.permute.xlu0 %4403
    %4405 = vrot.lane.b32.xlu0 %v4400, 32
    %v4406 = vpop.permute.xlu0 %4405
    %v4409 = vadd.f32 %v4389, %v4404
    %v4410 = vadd.f32 %v4390, %v4406
    %v4411 = vtanh.pop %v4409
    %v4412 = vtanh.pop %v4410
    %4415 = vrot.lane.b32.xlu0 %v4411, 64
    %v4416 = vpop.permute.xlu0 %4415
    %4417 = vrot.lane.b32.xlu0 %v4412, 64
    %v4418 = vpop.permute.xlu0 %4417
    %v4421 = vmul.f32 %v4376, %v4416
    %v4422 = vmul.f32 %v4378, %v4418
    %v4425 = vrot.slane %v4422, 7
    %v4426 = vsel %vm3210, %v4425, %v4421
    %4427 = vrot.lane.b32.xlu0 %v4426, 32
    %v4428 = vpop.permute.xlu0 %4427
    %v4431 = vrot.slane %v4359, 4
    %4432 = vrot.lane.b32.xlu0 %v4431, 64
    %v4433 = vpop.permute.xlu0 %4432
    %v4435 = vsel %vm1422, %v4428, %v4433
    %v4436 = vpack.c.bf16 %v4435, %v4435
    %v4438 = vrot.slane %v4436, 2
    %v4440 = vsel %vm2504, %v4438, 0
    %4442 = vmatprep.subr.bf16.mxu0 0
    %4443 = vmatpush1.bf16.msra.mxu0 0
    %4444 = vmatprep.subr.bf16.mxu0 0
    %4445 = vmatpush1.bf16.msra.mxu0 0
    %4446 = vmatprep.subr.bf16.mxu0 0
    %4447 = vmatpush1.bf16.msra.mxu0 0
    %4448 = vmatprep.subr.bf16.mxu0 0
    %4449 = vmatpush1.bf16.msra.mxu0 0
    %4450 = vmatprep.subr.bf16.mxu0 %v2501
    %4451 = vmatpush1.bf16.msra.mxu0 %v2500
    %4452 = vmatprep.subr.bf16.mxu0 %v2499
    %4453 = vmatpush1.bf16.msra.mxu0 %v2498
    %4454 = vmatprep.subr.bf16.mxu0 %v2497
    %4455 = vmatpush1.bf16.msra.mxu0 %v2496
    %4456 = vmatprep.subr.bf16.mxu0 %v2495
    %4457 = vmatpush1.bf16.msra.mxu0 %v2494
    %4458 = vmatprep.subr.bf16.mxu0 0
    %4459 = vmatpush2.bf16.msra.mxu0 0
    %4460 = vmatprep.subr.bf16.mxu0 0
    %4461 = vmatpush2.bf16.msra.mxu0 0
    %4462 = vmatprep.subr.bf16.mxu0 0
    %4463 = vmatpush2.bf16.msra.mxu0 0
    %4464 = vmatprep.subr.bf16.mxu0 0
    %4465 = vmatpush2.bf16.msra.mxu0 0
    %4466 = vmatprep.subr.bf16.mxu0 0
    %4467 = vmatpush2.bf16.msra.mxu0 0
    %4468 = vmatprep.subr.bf16.mxu0 0
    %4469 = vmatpush2.bf16.msra.mxu0 0
    %4470 = vmatprep.subr.bf16.mxu0 0
    %4471 = vmatpush2.bf16.msra.mxu0 0
    %4472 = vmatprep.subr.bf16.mxu0 0
    %4473 = vmatpush2.bf16.msra.mxu0 0
    %4474 = vmatprep.mubr.bf16.mxu0 0
    %4475 = vmatmul.mubr.bf16.gmra.mxu0 %v4440
    %v4476 = vpop.f32.mrf.mxu0
    %v4477 = vadd.f32 0.0, %v4476
    %v4478 = vpop.f32.mrf.mxu0
    %v4479 = vadd.f32 0.0, %v4478
    %v4480 = vpop.f32.mrf.mxu0
    %v4481 = vpop.f32.mrf.mxu0
    %4482 = vdwg.mxu0
    %v4483 = vadd.f32 %v2502, %v4479
    %v4484 = vxor.u32 %v4483, 2147483648
    %v4485 = vmul.f32 %v4484, 1.442695
    %v4486 = vpow.pop %v4485
    %v4487 = vadd.f32 %v4486, 1.0
    %v4488 = vrcp.pop %v4487
    %v4489 = vmul.f32 1.0, %v4488
    %v4490 = vmul.f32 %v4489, 2.0
    %v4491 = vsub.f32 %v4490, 1.0
    %v4492 = vmul.f32 %v4489, %v4353
    %4494 = vrot.lane.b32.xlu0 %v4491, 64
    %v4495 = vpop.permute.xlu0 %4494
    %v4497 = vmul.f32 %v4489, %v4495
    %4499 = vrot.lane.b32.xlu0 %v4497, 32
    %v4500 = vpop.permute.xlu0 %4499
    %v4502 = vadd.f32 %v4492, %v4500
    %v4503 = vtanh.pop %v4502
    %4505 = vrot.lane.b32.xlu0 %v4503, 64
    %v4506 = vpop.permute.xlu0 %4505
    %v4508 = vmul.f32 %v4489, %v4506
    %v4510 = vrot.slane %v4477, 3
    %v4511 = vrot.slane %v4477, 4
    %v4514 = vadd.f32 %v2467, %v4510
    %v4515 = vadd.f32 %v2475, %v4511
    %v4516 = vxor.u32 %v4514, 2147483648
    %v4517 = vxor.u32 %v4515, 2147483648
    %v4518 = vmul.f32 %v4516, 1.442695
    %v4519 = vpow.pop %v4518
    %v4520 = vmul.f32 %v4517, 1.442695
    %v4521 = vpow.pop %v4520
    %v4522 = vadd.f32 %v4519, 1.0
    %v4523 = vadd.f32 %v4521, 1.0
    %v4524 = vrcp.pop %v4522
    %v4525 = vmul.f32 1.0, %v4524
    %v4526 = vrcp.pop %v4523
    %v4527 = vmul.f32 1.0, %v4526
    %v4528 = vmul.f32 %v4525, 2.0
    %v4529 = vmul.f32 %v4527, 2.0
    %v4530 = vsub.f32 %v4528, 1.0
    %v4531 = vsub.f32 %v4529, 1.0
    %v4534 = vrot.slane %v4409, 7
    %v4535 = vrot.slane %v4410, 7
    %v4538 = vmul.f32 %v4525, %v4534
    %v4539 = vmul.f32 %v4527, %v4535
    %4542 = vrot.lane.b32.xlu0 %v4530, 64
    %v4543 = vpop.permute.xlu0 %4542
    %4544 = vrot.lane.b32.xlu0 %v4531, 64
    %v4545 = vpop.permute.xlu0 %4544
    %v4548 = vmul.f32 %v4525, %v4543
    %v4549 = vmul.f32 %v4527, %v4545
    %4552 = vrot.lane.b32.xlu0 %v4548, 32
    %v4553 = vpop.permute.xlu0 %4552
    %4554 = vrot.lane.b32.xlu0 %v4549, 32
    %v4555 = vpop.permute.xlu0 %4554
    %v4558 = vadd.f32 %v4538, %v4553
    %v4559 = vadd.f32 %v4539, %v4555
    %v4560 = vtanh.pop %v4558
    %v4561 = vtanh.pop %v4559
    %4564 = vrot.lane.b32.xlu0 %v4560, 64
    %v4565 = vpop.permute.xlu0 %4564
    %4566 = vrot.lane.b32.xlu0 %v4561, 64
    %v4567 = vpop.permute.xlu0 %4566
    %v4570 = vmul.f32 %v4525, %v4565
    %v4571 = vmul.f32 %v4527, %v4567
    %v4574 = vrot.slane %v4571, 7
    %v4575 = vsel %vm3360, %v4574, %v4570
    %4576 = vrot.lane.b32.xlu0 %v4575, 32
    %v4577 = vpop.permute.xlu0 %4576
    %v4580 = vrot.slane %v4508, 3
    %4581 = vrot.lane.b32.xlu0 %v4580, 64
    %v4582 = vpop.permute.xlu0 %4581
    %v4584 = vsel %vm1422, %v4577, %v4582
    %v4585 = vpack.c.bf16 %v4584, %v4584
    %v4587 = vshrl.u32 %v4585, 16
    %v4589 = vrot.slane %v4587, 2
    %v4590 = vshll.u32 %v4585, 16
    %v4592 = vrot.slane %v4590, 3
    %v4593 = vor.u32 %v4589, %v4592
    %v4595 = vsel %vm2504, %v4593, 0
    %4597 = vmatprep.subr.bf16.mxu0 0
    %4598 = vmatpush1.bf16.msra.mxu0 0
    %4599 = vmatprep.subr.bf16.mxu0 0
    %4600 = vmatpush1.bf16.msra.mxu0 0
    %4601 = vmatprep.subr.bf16.mxu0 0
    %4602 = vmatpush1.bf16.msra.mxu0 0
    %4603 = vmatprep.subr.bf16.mxu0 0
    %4604 = vmatpush1.bf16.msra.mxu0 0
    %4605 = vmatprep.subr.bf16.mxu0 %v2501
    %4606 = vmatpush1.bf16.msra.mxu0 %v2500
    %4607 = vmatprep.subr.bf16.mxu0 %v2499
    %4608 = vmatpush1.bf16.msra.mxu0 %v2498
    %4609 = vmatprep.subr.bf16.mxu0 %v2497
    %4610 = vmatpush1.bf16.msra.mxu0 %v2496
    %4611 = vmatprep.subr.bf16.mxu0 %v2495
    %4612 = vmatpush1.bf16.msra.mxu0 %v2494
    %4613 = vmatprep.subr.bf16.mxu0 0
    %4614 = vmatpush2.bf16.msra.mxu0 0
    %4615 = vmatprep.subr.bf16.mxu0 0
    %4616 = vmatpush2.bf16.msra.mxu0 0
    %4617 = vmatprep.subr.bf16.mxu0 0
    %4618 = vmatpush2.bf16.msra.mxu0 0
    %4619 = vmatprep.subr.bf16.mxu0 0
    %4620 = vmatpush2.bf16.msra.mxu0 0
    %4621 = vmatprep.subr.bf16.mxu0 0
    %4622 = vmatpush2.bf16.msra.mxu0 0
    %4623 = vmatprep.subr.bf16.mxu0 0
    %4624 = vmatpush2.bf16.msra.mxu0 0
    %4625 = vmatprep.subr.bf16.mxu0 0
    %4626 = vmatpush2.bf16.msra.mxu0 0
    %4627 = vmatprep.subr.bf16.mxu0 0
    %4628 = vmatpush2.bf16.msra.mxu0 0
    %4629 = vmatprep.mubr.bf16.mxu0 0
    %4630 = vmatmul.mubr.bf16.gmra.mxu0 %v4595
    %v4631 = vpop.f32.mrf.mxu0
    %v4632 = vadd.f32 0.0, %v4631
    %v4633 = vpop.f32.mrf.mxu0
    %v4634 = vadd.f32 0.0, %v4633
    %v4635 = vpop.f32.mrf.mxu0
    %v4636 = vpop.f32.mrf.mxu0
    %4637 = vdwg.mxu0
    %v4638 = vadd.f32 %v2502, %v4634
    %v4639 = vxor.u32 %v4638, 2147483648
    %v4640 = vmul.f32 %v4639, 1.442695
    %v4641 = vpow.pop %v4640
    %v4642 = vadd.f32 %v4641, 1.0
    %v4643 = vrcp.pop %v4642
    %v4644 = vmul.f32 1.0, %v4643
    %v4645 = vmul.f32 %v4644, 2.0
    %v4646 = vsub.f32 %v4645, 1.0
    %v4647 = vmul.f32 %v4644, %v4502
    %4649 = vrot.lane.b32.xlu0 %v4646, 64
    %v4650 = vpop.permute.xlu0 %4649
    %v4652 = vmul.f32 %v4644, %v4650
    %4654 = vrot.lane.b32.xlu0 %v4652, 32
    %v4655 = vpop.permute.xlu0 %4654
    %v4657 = vadd.f32 %v4647, %v4655
    %v4658 = vtanh.pop %v4657
    %4660 = vrot.lane.b32.xlu0 %v4658, 64
    %v4661 = vpop.permute.xlu0 %4660
    %v4663 = vmul.f32 %v4644, %v4661
    %v4665 = vrot.slane %v4632, 2
    %v4666 = vrot.slane %v4632, 3
    %v4669 = vadd.f32 %v2467, %v4665
    %v4670 = vadd.f32 %v2475, %v4666
    %v4671 = vxor.u32 %v4669, 2147483648
    %v4672 = vxor.u32 %v4670, 2147483648
    %v4673 = vmul.f32 %v4671, 1.442695
    %v4674 = vpow.pop %v4673
    %v4675 = vmul.f32 %v4672, 1.442695
    %v4676 = vpow.pop %v4675
    %v4677 = vadd.f32 %v4674, 1.0
    %v4678 = vadd.f32 %v4676, 1.0
    %v4679 = vrcp.pop %v4677
    %v4680 = vmul.f32 1.0, %v4679
    %v4681 = vrcp.pop %v4678
    %v4682 = vmul.f32 1.0, %v4681
    %v4683 = vmul.f32 %v4680, 2.0
    %v4684 = vmul.f32 %v4682, 2.0
    %v4685 = vsub.f32 %v4683, 1.0
    %v4686 = vsub.f32 %v4684, 1.0
    %v4689 = vrot.slane %v4558, 7
    %v4690 = vrot.slane %v4559, 7
    %v4693 = vmul.f32 %v4680, %v4689
    %v4694 = vmul.f32 %v4682, %v4690
    %4697 = vrot.lane.b32.xlu0 %v4685, 64
    %v4698 = vpop.permute.xlu0 %4697
    %4699 = vrot.lane.b32.xlu0 %v4686, 64
    %v4700 = vpop.permute.xlu0 %4699
    %v4703 = vmul.f32 %v4680, %v4698
    %v4704 = vmul.f32 %v4682, %v4700
    %4707 = vrot.lane.b32.xlu0 %v4703, 32
    %v4708 = vpop.permute.xlu0 %4707
    %4709 = vrot.lane.b32.xlu0 %v4704, 32
    %v4710 = vpop.permute.xlu0 %4709
    %v4713 = vadd.f32 %v4693, %v4708
    %v4714 = vadd.f32 %v4694, %v4710
    %v4715 = vtanh.pop %v4713
    %v4716 = vtanh.pop %v4714
    %4719 = vrot.lane.b32.xlu0 %v4715, 64
    %v4720 = vpop.permute.xlu0 %4719
    %4721 = vrot.lane.b32.xlu0 %v4716, 64
    %v4722 = vpop.permute.xlu0 %4721
    %v4725 = vmul.f32 %v4680, %v4720
    %v4726 = vmul.f32 %v4682, %v4722
    %v4729 = vrot.slane %v4726, 7
    %v4730 = vsel %vm3516, %v4729, %v4725
    %4731 = vrot.lane.b32.xlu0 %v4730, 32
    %v4732 = vpop.permute.xlu0 %4731
    %v4735 = vrot.slane %v4663, 2
    %4736 = vrot.lane.b32.xlu0 %v4735, 64
    %v4737 = vpop.permute.xlu0 %4736
    %v4739 = vsel %vm1422, %v4732, %v4737
    %v4740 = vpack.c.bf16 %v4739, %v4739
    %v4742 = vrot.slane %v4740, 3
    %v4744 = vsel %vm2504, %v4742, 0
    %4746 = vmatprep.subr.bf16.mxu0 0
    %4747 = vmatpush1.bf16.msra.mxu0 0
    %4748 = vmatprep.subr.bf16.mxu0 0
    %4749 = vmatpush1.bf16.msra.mxu0 0
    %4750 = vmatprep.subr.bf16.mxu0 0
    %4751 = vmatpush1.bf16.msra.mxu0 0
    %4752 = vmatprep.subr.bf16.mxu0 0
    %4753 = vmatpush1.bf16.msra.mxu0 0
    %4754 = vmatprep.subr.bf16.mxu0 %v2501
    %4755 = vmatpush1.bf16.msra.mxu0 %v2500
    %4756 = vmatprep.subr.bf16.mxu0 %v2499
    %4757 = vmatpush1.bf16.msra.mxu0 %v2498
    %4758 = vmatprep.subr.bf16.mxu0 %v2497
    %4759 = vmatpush1.bf16.msra.mxu0 %v2496
    %4760 = vmatprep.subr.bf16.mxu0 %v2495
    %4761 = vmatpush1.bf16.msra.mxu0 %v2494
    %4762 = vmatprep.subr.bf16.mxu0 0
    %4763 = vmatpush2.bf16.msra.mxu0 0
    %4764 = vmatprep.subr.bf16.mxu0 0
    %4765 = vmatpush2.bf16.msra.mxu0 0
    %4766 = vmatprep.subr.bf16.mxu0 0
    %4767 = vmatpush2.bf16.msra.mxu0 0
    %4768 = vmatprep.subr.bf16.mxu0 0
    %4769 = vmatpush2.bf16.msra.mxu0 0
    %4770 = vmatprep.subr.bf16.mxu0 0
    %4771 = vmatpush2.bf16.msra.mxu0 0
    %4772 = vmatprep.subr.bf16.mxu0 0
    %4773 = vmatpush2.bf16.msra.mxu0 0
    %4774 = vmatprep.subr.bf16.mxu0 0
    %4775 = vmatpush2.bf16.msra.mxu0 0
    %4776 = vmatprep.subr.bf16.mxu0 0
    %4777 = vmatpush2.bf16.msra.mxu0 0
    %4778 = vmatprep.mubr.bf16.mxu0 0
    %4779 = vmatmul.mubr.bf16.gmra.mxu0 %v4744
    %v4780 = vpop.f32.mrf.mxu0
    %v4781 = vadd.f32 0.0, %v4780
    %v4782 = vpop.f32.mrf.mxu0
    %v4783 = vadd.f32 0.0, %v4782
    %v4784 = vpop.f32.mrf.mxu0
    %v4785 = vpop.f32.mrf.mxu0
    %4786 = vdwg.mxu0
    %v4787 = vadd.f32 %v2502, %v4783
    %v4788 = vxor.u32 %v4787, 2147483648
    %v4789 = vmul.f32 %v4788, 1.442695
    %v4790 = vpow.pop %v4789
    %v4791 = vadd.f32 %v4790, 1.0
    %v4792 = vrcp.pop %v4791
    %v4793 = vmul.f32 1.0, %v4792
    %v4794 = vmul.f32 %v4793, 2.0
    %v4795 = vsub.f32 %v4794, 1.0
    %v4796 = vmul.f32 %v4793, %v4657
    %4798 = vrot.lane.b32.xlu0 %v4795, 64
    %v4799 = vpop.permute.xlu0 %4798
    %v4801 = vmul.f32 %v4793, %v4799
    %4803 = vrot.lane.b32.xlu0 %v4801, 32
    %v4804 = vpop.permute.xlu0 %4803
    %v4806 = vadd.f32 %v4796, %v4804
    %v4807 = vtanh.pop %v4806
    %4809 = vrot.lane.b32.xlu0 %v4807, 64
    %v4810 = vpop.permute.xlu0 %4809
    %v4812 = vmul.f32 %v4793, %v4810
    %v4814 = vrot.slane %v4781, 1
    %v4815 = vrot.slane %v4781, 2
    %v4818 = vadd.f32 %v2467, %v4814
    %v4819 = vadd.f32 %v2475, %v4815
    %v4820 = vxor.u32 %v4818, 2147483648
    %v4821 = vxor.u32 %v4819, 2147483648
    %v4822 = vmul.f32 %v4820, 1.442695
    %v4823 = vpow.pop %v4822
    %v4824 = vmul.f32 %v4821, 1.442695
    %v4825 = vpow.pop %v4824
    %v4826 = vadd.f32 %v4823, 1.0
    %v4827 = vadd.f32 %v4825, 1.0
    %v4828 = vrcp.pop %v4826
    %v4829 = vmul.f32 1.0, %v4828
    %v4830 = vrcp.pop %v4827
    %v4831 = vmul.f32 1.0, %v4830
    %v4832 = vmul.f32 %v4829, 2.0
    %v4833 = vmul.f32 %v4831, 2.0
    %v4834 = vsub.f32 %v4832, 1.0
    %v4835 = vsub.f32 %v4833, 1.0
    %v4838 = vrot.slane %v4713, 7
    %v4839 = vrot.slane %v4714, 7
    %v4842 = vmul.f32 %v4829, %v4838
    %v4843 = vmul.f32 %v4831, %v4839
    %4846 = vrot.lane.b32.xlu0 %v4834, 64
    %v4847 = vpop.permute.xlu0 %4846
    %4848 = vrot.lane.b32.xlu0 %v4835, 64
    %v4849 = vpop.permute.xlu0 %4848
    %v4852 = vmul.f32 %v4829, %v4847
    %v4853 = vmul.f32 %v4831, %v4849
    %4856 = vrot.lane.b32.xlu0 %v4852, 32
    %v4857 = vpop.permute.xlu0 %4856
    %4858 = vrot.lane.b32.xlu0 %v4853, 32
    %v4859 = vpop.permute.xlu0 %4858
    %v4862 = vadd.f32 %v4842, %v4857
    %v4863 = vadd.f32 %v4843, %v4859
    %v4864 = vtanh.pop %v4862
    %v4865 = vtanh.pop %v4863
    %4868 = vrot.lane.b32.xlu0 %v4864, 64
    %v4869 = vpop.permute.xlu0 %4868
    %4870 = vrot.lane.b32.xlu0 %v4865, 64
    %v4871 = vpop.permute.xlu0 %4870
    %v4874 = vmul.f32 %v4829, %v4869
    %v4875 = vmul.f32 %v4831, %v4871
    %v4878 = vrot.slane %v4875, 7
    %4879 = vrot.lane.b32.xlu0 %v4874, 32
    %v4880 = vpop.permute.xlu0 %4879
    %4881 = vrot.lane.b32.xlu0 %v4878, 32
    %v4882 = vpop.permute.xlu0 %4881
    %v4886 = vrot.slane %v4812, 1
    %4887 = vrot.lane.b32.xlu0 %v4886, 64
    %v4888 = vpop.permute.xlu0 %4887
    %v4890 = vsel %vm1422, %v4880, %v4888
    %v4891 = vsel %vm1422, %v4882, %v4888
    %v4892 = vpack.c.bf16 %v4891, %v4890
    %v4894 = vshrl.u32 %v4892, 16
    %v4896 = vrot.slane %v4894, 3
    %v4897 = vshll.u32 %v4892, 16
    %v4899 = vrot.slane %v4897, 4
    %v4900 = vor.u32 %v4896, %v4899
    %v4902 = vsel %vm2504, %v4900, 0
    %4904 = vmatprep.subr.bf16.mxu0 0
    %4905 = vmatpush1.bf16.msra.mxu0 0
    %4906 = vmatprep.subr.bf16.mxu0 0
    %4907 = vmatpush1.bf16.msra.mxu0 0
    %4908 = vmatprep.subr.bf16.mxu0 0
    %4909 = vmatpush1.bf16.msra.mxu0 0
    %4910 = vmatprep.subr.bf16.mxu0 0
    %4911 = vmatpush1.bf16.msra.mxu0 0
    %4912 = vmatprep.subr.bf16.mxu0 %v2501
    %4913 = vmatpush1.bf16.msra.mxu0 %v2500
    %4914 = vmatprep.subr.bf16.mxu0 %v2499
    %4915 = vmatpush1.bf16.msra.mxu0 %v2498
    %4916 = vmatprep.subr.bf16.mxu0 %v2497
    %4917 = vmatpush1.bf16.msra.mxu0 %v2496
    %4918 = vmatprep.subr.bf16.mxu0 %v2495
    %4919 = vmatpush1.bf16.msra.mxu0 %v2494
    %4920 = vmatprep.subr.bf16.mxu0 0
    %4921 = vmatpush2.bf16.msra.mxu0 0
    %4922 = vmatprep.subr.bf16.mxu0 0
    %4923 = vmatpush2.bf16.msra.mxu0 0
    %4924 = vmatprep.subr.bf16.mxu0 0
    %4925 = vmatpush2.bf16.msra.mxu0 0
    %4926 = vmatprep.subr.bf16.mxu0 0
    %4927 = vmatpush2.bf16.msra.mxu0 0
    %4928 = vmatprep.subr.bf16.mxu0 0
    %4929 = vmatpush2.bf16.msra.mxu0 0
    %4930 = vmatprep.subr.bf16.mxu0 0
    %4931 = vmatpush2.bf16.msra.mxu0 0
    %4932 = vmatprep.subr.bf16.mxu0 0
    %4933 = vmatpush2.bf16.msra.mxu0 0
    %4934 = vmatprep.subr.bf16.mxu0 0
    %4935 = vmatpush2.bf16.msra.mxu0 0
    %4936 = vmatprep.mubr.bf16.mxu0 0
    %4937 = vmatmul.mubr.bf16.gmra.mxu0 %v4902
    %v4938 = vpop.f32.mrf.mxu0
    %v4939 = vpop.f32.mrf.mxu0
    %v4940 = vadd.f32 0.0, %v4939
    %v4941 = vpop.f32.mrf.mxu0
    %v4942 = vpop.f32.mrf.mxu0
    %4943 = vdwg.mxu0
    %v4944 = vadd.f32 %v2502, %v4940
    %v4945 = vxor.u32 %v4944, 2147483648
    %v4946 = vmul.f32 %v4945, 1.442695
    %v4947 = vpow.pop %v4946
    %v4948 = vadd.f32 %v4947, 1.0
    %v4949 = vrcp.pop %v4948
    %v4950 = vmul.f32 1.0, %v4949
    %v4951 = vmul.f32 %v4950, 2.0
    %v4952 = vsub.f32 %v4951, 1.0
    %v4953 = vmul.f32 %v4950, %v4806
    %4955 = vrot.lane.b32.xlu0 %v4952, 64
    %v4956 = vpop.permute.xlu0 %4955
    %v4958 = vmul.f32 %v4950, %v4956
    %4960 = vrot.lane.b32.xlu0 %v4958, 32
    %v4961 = vpop.permute.xlu0 %4960
    %v4963 = vadd.f32 %v4953, %v4961
    %v4964 = vtanh.pop %v4963
    %4966 = vrot.lane.b32.xlu0 %v4964, 64
    %v4967 = vpop.permute.xlu0 %4966
    %v4969 = vmul.f32 %v4950, %v4967
    %v4970 = vpack.c.bf16 %v4969, %v4969
    %v4971 = vld [vmem:[#allocation2 + $0x170] sm:$0xff]
    %v4972 = vld [vmem:[#allocation2 + $0x180] sm:$0xff]
    %v4973 = vld [vmem:[#allocation2 + $0x190] sm:$0xff]
    %v4974 = vld [vmem:[#allocation2 + $0x1a0] sm:$0xff]
    %v4975 = vpack.c.bf16 %v4972, %v4971
    %v4976 = vpack.c.bf16 %v4974, %v4973
    %v4977 = vld [vmem:[#allocation2 + $0x1b0] ss:$0 sm:$0xff]
    %4979 = vrot.lane.b32.xlu0 %v4970, 32
    %v4980 = vpop.permute.xlu0 %4979
    %v4982 = vsel %vm1422, %v4980, 0
    %4984 = vmatprep.subr.bf16.mxu0 0
    %4985 = vmatpush1.bf16.msra.mxu0 0
    %4986 = vmatprep.subr.bf16.mxu0 0
    %4987 = vmatpush1.bf16.msra.mxu0 0
    %4988 = vmatprep.subr.bf16.mxu0 0
    %4989 = vmatpush1.bf16.msra.mxu0 0
    %4990 = vmatprep.subr.bf16.mxu0 0
    %4991 = vmatpush1.bf16.msra.mxu0 0
    %4992 = vmatprep.subr.bf16.mxu0 0
    %4993 = vmatpush1.bf16.msra.mxu0 0
    %4994 = vmatprep.subr.bf16.mxu0 0
    %4995 = vmatpush1.bf16.msra.mxu0 0
    %4996 = vmatprep.subr.bf16.mxu0 0
    %4997 = vmatpush1.bf16.msra.mxu0 %v4976
    %4998 = vmatprep.subr.bf16.mxu0 0
    %4999 = vmatpush1.bf16.msra.mxu0 %v4975
    %5000 = vmatprep.subr.bf16.mxu0 0
    %5001 = vmatpush2.bf16.msra.mxu0 0
    %5002 = vmatprep.subr.bf16.mxu0 0
    %5003 = vmatpush2.bf16.msra.mxu0 0
    %5004 = vmatprep.subr.bf16.mxu0 0
    %5005 = vmatpush2.bf16.msra.mxu0 0
    %5006 = vmatprep.subr.bf16.mxu0 0
    %5007 = vmatpush2.bf16.msra.mxu0 0
    %5008 = vmatprep.subr.bf16.mxu0 0
    %5009 = vmatpush2.bf16.msra.mxu0 0
    %5010 = vmatprep.subr.bf16.mxu0 0
    %5011 = vmatpush2.bf16.msra.mxu0 0
    %5012 = vmatprep.subr.bf16.mxu0 0
    %5013 = vmatpush2.bf16.msra.mxu0 0
    %5014 = vmatprep.subr.bf16.mxu0 0
    %5015 = vmatpush2.bf16.msra.mxu0 0
    %5016 = vmatprep.mubr.bf16.mxu0 0
    %5017 = vmatmul.mubr.bf16.gmra.mxu0 %v4982
    %v5018 = vpop.f32.mrf.mxu0
    %v5019 = vadd.f32 %v4977, %v5018
    %v5020 = vpop.f32.mrf.mxu0
    %v5021 = vpop.f32.mrf.mxu0
    %v5022 = vpop.f32.mrf.mxu0
    %5023 = vdwg.mxu0
    %v5024 = vxor.u32 %v5019, 2147483648
    %v5025 = vmul.f32 %v5024, 1.442695
    %v5026 = vpow.pop %v5025
    %v5027 = vadd.f32 %v5026, 1.0
    %v5028 = vrcp.pop %v5027
    %v5029 = vmul.f32 1.0, %v5028
    %vm5030 = vcmask 123904
    %5031 = vst.msk [vmem:[#allocation5] sm:$0x3] %vm5030, %v5029
    // Predicated region
    $region14: #{fwd.1} parent=1 // pred_check
      _
    $region15: #{fwd.1} parent=1 // pred_check_branch
      %5033 = sbr.rel (0) target = $region17
    $region16: #{fwd.1} parent=1 // pred_region
      %s5035 = ssub.s32 32, 32
      %5036 = vsyncadd [#allocation4], %s5035
      %s5038 = sshll.u32 [#allocation5], 4
      %s5039 = int_to_ptr.vmem [resolvable:$true] %s5038
      %5041 = dma.vmem_to_hbm [thread:$0]  %s5039, 32, %s2, [#allocation4]
    $region17: #{fwd.1} parent=1 // pred_fallthru
      _
    // Predicated region
    $region18: #{fwd.1} parent=1 // pred_check
      _
    $region19: #{fwd.1} parent=1 // pred_check_branch
      %5043 = sbr.rel (0) target = $region21
    $region20: #{fwd.1} parent=1 // pred_region
      %5044 = dma.done [#allocation4], 32
    $region21: #{fwd.1} parent=1 // pred_fallthru
      _
    %5045 = vsyncpa [#allocation3], 1
    %5046 = vsyncpa [#allocation4], 1

</llo_original>
